<compile_context>
chip_gen: v7x
topology: tpu7x:2x2x1
jax: 0.10.0
libtpu: 0.0.40
codegen_flags: <defaults>
</compile_context>

<pallas_src>
import functools

import jax
import jax.numpy as jnp
import numpy as np
from jax.experimental import pallas as pl
from jax.experimental.pallas import tpu as pltpu


def _round_up(n, m):
    return ((n + m - 1) // m) * m


# ----------------------------------------------------------------------------
# Pallas kernel: the whole multi-stage model for one batch element.
# ----------------------------------------------------------------------------
def _mstcn_kernel(x_ref, mask_ref, w_in_ref, b_in_ref, wd_ref, bd_ref,
                  w11_ref, b11_ref, w_out_ref, b_out_ref, out_ref,
                  *, num_stages, num_layers, num_classes):
    x = x_ref[0]          # (T, P)   lane-padded stage-1 input
    m = mask_ref[0]       # (T, 1)
    T = x.shape[0]
    P = x.shape[1]

    t_idx = jax.lax.broadcasted_iota(jnp.int32, (T, 1), 0)                 # time index
    cls_mask = jax.lax.broadcasted_iota(jnp.int32, (1, P), 1) < num_classes

    # NOTE: num_stages * num_layers is small here, so Python unrolling is fine;
    # for large num_layers convert the inner loop to lax.fori_loop to bound
    # vreg live ranges.
    for s in range(num_stages):
        if s > 0:
            # F.softmax(out, dim=channel) * mask, restricted to real class lanes
            # (padded lanes hold 0, so the max is a safe upper bound).
            xmax = jnp.max(x, axis=-1, keepdims=True)
            e = jnp.where(cls_mask, jnp.exp(x - xmax), 0.0)
            x = e * pl.reciprocal(jnp.sum(e, axis=-1, keepdims=True), approx=True)
            x = x * m

        # stage conv_1x1 : P -> Fp
        feat = (jnp.dot(x, w_in_ref[s], preferred_element_type=jnp.float32)
                + b_in_ref[s])

        for l in range(num_layers):
            d = 2 ** l
            # Temporal shifts via XLU roll (circular) + zero boundary rows,
            # matching Conv1d zero padding:
            #   f_m[t] = feat[t - d]  (zero for t < d)
            #   f_p[t] = feat[t + d]  (zero for t >= T - d)
            f_m = pltpu.roll(feat, d, 0)
            f_m = jnp.where(t_idx >= d, f_m, 0.0)
            f_p = pltpu.roll(feat, T - d, 0)
            f_p = jnp.where(t_idx < T - d, f_p, 0.0)

            # Fused 3-tap dilated conv: one (T, 3*Fp) @ (3*Fp, Fp) matmul + ReLU
            taps = jnp.concatenate([f_m, feat, f_p], axis=-1)
            h = (jnp.dot(taps, wd_ref[s, l], preferred_element_type=jnp.float32)
                 + bd_ref[s, l])
            h = jnp.maximum(h, 0.0)

            # conv_1x1
            h = (jnp.dot(h, w11_ref[s, l], preferred_element_type=jnp.float32)
                 + b11_ref[s, l])
            # TODO(synk): nn.Dropout(p=0.5) treated as identity (eval-mode semantics).

            # residual + mask
            feat = (feat + h) * m

        # conv_out, masked; lane-dense (P-wide) output slab
        out = (jnp.dot(feat, w_out_ref[s], preferred_element_type=jnp.float32)
               + b_out_ref[s]) * m
        out_ref[0, s] = out.astype(out_ref.dtype)
        x = out     # next stage consumes this stage's (padded) logits


def _full_spec(shape):
    n = len(shape)
    return pl.BlockSpec(shape, lambda b, _n=n: (0,) * _n)


# ----------------------------------------------------------------------------
# Wrapper: pad/stack parameters, launch one fused pallas_call over the batch.
# ----------------------------------------------------------------------------
def _pack_params(stage_params, pad_io, pad_f):
    """Zero-pad each stage's weights to lane-aligned sizes and stack over stages."""
    S = len(stage_params)
    L = stage_params[0][2].shape[0]
    w_in = jnp.zeros((S, pad_io, pad_f), jnp.float32)
    b_in = jnp.zeros((S, 1, pad_f), jnp.float32)
    wd = jnp.zeros((S, L, 3 * pad_f, pad_f), jnp.float32)
    bd = jnp.zeros((S, L, 1, pad_f), jnp.float32)
    w11 = jnp.zeros((S, L, pad_f, pad_f), jnp.float32)
    b11 = jnp.zeros((S, L, 1, pad_f), jnp.float32)
    w_out = jnp.zeros((S, pad_f, pad_io), jnp.float32)
    b_out = jnp.zeros((S, 1, pad_io), jnp.float32)
    for s, (wi, bi, wdl, bdl, w1, b1, wo, bo) in enumerate(stage_params):
        din, f = wi.shape
        c = wo.shape[1]
        w_in = w_in.at[s, :din, :f].set(wi)
        b_in = b_in.at[s, :, :f].set(bi)
        wd_p = jnp.zeros((L, 3, pad_f, pad_f), jnp.float32).at[:, :, :f, :f].set(wdl)
        wd = wd.at[s].set(wd_p.reshape(L, 3 * pad_f, pad_f))   # tap-major flatten
        bd = bd.at[s, :, :, :f].set(bdl)
        w11 = w11.at[s, :, :f, :f].set(w1)
        b11 = b11.at[s, :, :, :f].set(b1)
        w_out = w_out.at[s, :f, :c].set(wo)
        b_out = b_out.at[s, :, :c].set(bo)
    return (w_in, b_in, wd, bd, w11, b11, w_out, b_out)


def multi_stage_forward(x_bct, mask_bct, stage_params):
    """x_bct: (B, dim, T); mask_bct: (B, num_classes, T).
    Returns (num_stages, B, num_classes, T), matching PyTorch."""
    B, dim, T = x_bct.shape
    S = len(stage_params)
    L = stage_params[0][2].shape[0]
    F = stage_params[0][0].shape[1]
    C = stage_params[0][6].shape[1]

    P = _round_up(max(dim, C), 128)     # padded stage-I/O channel width
    Fp = _round_up(F, 128)              # padded feature-map width
    params = _pack_params(stage_params, P, Fp)

    x = jnp.transpose(x_bct, (0, 2, 1))                        # (B, T, dim)
    x = jnp.pad(x, ((0, 0), (0, 0), (0, P - dim)))             # lane-pad input
    m = jnp.transpose(mask_bct[:, 0:1, :], (0, 2, 1))          # (B, T, 1)

    kernel = functools.partial(_mstcn_kernel, num_stages=S,
                               num_layers=L, num_classes=C)
    out = pl.pallas_call(
        kernel,
        out_shape=jax.ShapeDtypeStruct((B, S, T, P), jnp.float32),
        grid=(B,),
        in_specs=[
            pl.BlockSpec((1, T, P), lambda b: (b, 0, 0)),
            pl.BlockSpec((1, T, 1), lambda b: (b, 0, 0)),
        ] + [_full_spec(p.shape) for p in params],
        out_specs=pl.BlockSpec((1, S, T, P), lambda b: (b, 0, 0, 0)),
        compiler_params=pltpu.CompilerParams(
            dimension_semantics=("parallel",)),   # batch elems independent
    )(x, m, *params)                                           # (B, S, T, P)

    out = out[..., :C]                                         # drop lane padding
    return jnp.transpose(out, (1, 0, 3, 2))                    # (S, B, C, T)


# ----------------------------------------------------------------------------
# Deterministic parameter init (shapes follow the nn.Module __init__).
# ----------------------------------------------------------------------------
def init_stage_params(key, dim_in, num_f_maps, num_classes, num_layers):
    ks = jax.random.split(key, 8)
    s = 0.1
    w_in = s * jax.random.normal(ks[0], (dim_in, num_f_maps), jnp.float32)
    b_in = s * jax.random.normal(ks[1], (1, num_f_maps), jnp.float32)
    # conv_dilated weights, stored as (L, k=3, C_in, C_out)
    wd = s * jax.random.normal(ks[2], (num_layers, 3, num_f_maps, num_f_maps),
                               jnp.float32)
    bd = s * jax.random.normal(ks[3], (num_layers, 1, num_f_maps), jnp.float32)
    w11 = s * jax.random.normal(ks[4], (num_layers, num_f_maps, num_f_maps),
                                jnp.float32)
    b11 = s * jax.random.normal(ks[5], (num_layers, 1, num_f_maps), jnp.float32)
    w_out = s * jax.random.normal(ks[6], (num_f_maps, num_classes), jnp.float32)
    b_out = s * jax.random.normal(ks[7], (1, num_classes), jnp.float32)
    return (w_in, b_in, wd, bd, w11, b11, w_out, b_out)


# ----------------------------------------------------------------------------
# Pure-JAX reference (independent implementation, explicit padding) for check.
# ----------------------------------------------------------------------------
def _ref_dilated_conv(x, w, b, d):           # x: (B, T, Cin), w: (3, Cin, Cout)
    B, T, _ = x.shape
    xp = jnp.pad(x, ((0, 0), (d, d), (0, 0)))
    return (xp[:, 0:T] @ w[0] + xp[:, d:T + d] @ w[1]
            + xp[:, 2 * d:T + 2 * d] @ w[2]) + b


def _ref_stage(x, m, params, apply_softmax, num_layers):
    w_in, b_in, wd, bd, w11, b11, w_out, b_out = params
    if apply_softmax:
        x = jax.nn.softmax(x, axis=-1) * m
    feat = x @ w_in + b_in
    for l in range(num_layers):
        d = 2 ** l
        h = jax.nn.relu(_ref_dilated_conv(feat, wd[l], bd[l], d))
        h = h @ w11[l] + b11[l]
        feat = (feat + h) * m
    return (feat @ w_out + b_out) * m


def _ref_forward(x_bct, mask_bct, stage_params, num_layers):
    x = jnp.transpose(x_bct, (0, 2, 1))
    m = jnp.transpose(mask_bct[:, 0:1, :], (0, 2, 1))
    outs = []
    out = _ref_stage(x, m, stage_params[0], False, num_layers)
    outs.append(jnp.transpose(out, (0, 2, 1)))
    for p in stage_params[1:]:
        out = _ref_stage(out, m, p, True, num_layers)
        outs.append(jnp.transpose(out, (0, 2, 1)))
    return jnp.stack(outs, axis=0)


# ----------------------------------------------------------------------------
if __name__ == "__main__":
    num_stages, num_layers = 2, 3
    num_f_maps, dim, num_classes = 16, 8, 6
    B, T = 2, 16

    key = jax.random.PRNGKey(0)
    k_x, k_p = jax.random.split(key)

    x = jax.random.normal(k_x, (B, dim, T), jnp.float32)        # PyTorch NCT
    mask = jnp.ones((B, num_classes, T), jnp.float32)
    mask = mask.at[1, :, 12:].set(0.0)                          # ragged mask

    stage_keys = jax.random.split(k_p, num_stages)
    stage_params = [init_stage_params(stage_keys[0], dim, num_f_maps,
                                      num_classes, num_layers)]
    for s in range(1, num_stages):
        stage_params.append(init_stage_params(stage_keys[s], num_classes,
                                              num_f_maps, num_classes,
                                              num_layers))

    outputs = multi_stage_forward(x, mask, stage_params)
    outputs = jax.block_until_ready(outputs)

    assert outputs.shape == (num_stages, B, num_classes, T), outputs.shape

    ref = jax.block_until_ready(_ref_forward(x, mask, stage_params, num_layers))
    np.testing.assert_allclose(np.asarray(outputs), np.asarray(ref),
                               rtol=1e-2, atol=1e-2)

    print("KERNEL_OK")
</pallas_src>

<mosaic_0001>
module attributes {stable_mosaic.version = 11 : i64} {
  func.func @_mstcn_kernel(%arg0: i32, %arg1: memref<1x16x128xf32, #tpu.memory_space<vmem>>, %arg2: memref<1x16x1xf32, #tpu.memory_space<vmem>>, %arg3: memref<2x128x128xf32, #tpu.memory_space<vmem>>, %arg4: memref<2x1x128xf32, #tpu.memory_space<vmem>>, %arg5: memref<2x3x384x128xf32, #tpu.memory_space<vmem>>, %arg6: memref<2x3x1x128xf32, #tpu.memory_space<vmem>>, %arg7: memref<2x3x128x128xf32, #tpu.memory_space<vmem>>, %arg8: memref<2x3x1x128xf32, #tpu.memory_space<vmem>>, %arg9: memref<2x128x128xf32, #tpu.memory_space<vmem>>, %arg10: memref<2x1x128xf32, #tpu.memory_space<vmem>>, %arg11: memref<1x2x16x128xf32, #tpu.memory_space<vmem>>) attributes {dimension_semantics = [#tpu.dimension_semantics<parallel>], iteration_bounds = array<i64: 2>, scalar_prefetch = 0 : i64, scratch_operands = 0 : i64, tpu.core_type = #tpu.core_type<tc>, window_params = [{transform_indices = @transform_0, window_bounds = array<i64: 1, 16, 128>}, {transform_indices = @transform_1, window_bounds = array<i64: 1, 16, 1>}, {pipeline_mode = #tpu.pipeline_mode<synchronous>, transform_indices = @transform_2, window_bounds = array<i64: 2, 128, 128>}, {pipeline_mode = #tpu.pipeline_mode<synchronous>, transform_indices = @transform_3, window_bounds = array<i64: 2, 1, 128>}, {pipeline_mode = #tpu.pipeline_mode<synchronous>, transform_indices = @transform_4, window_bounds = array<i64: 2, 3, 384, 128>}, {pipeline_mode = #tpu.pipeline_mode<synchronous>, transform_indices = @transform_5, window_bounds = array<i64: 2, 3, 1, 128>}, {pipeline_mode = #tpu.pipeline_mode<synchronous>, transform_indices = @transform_6, window_bounds = array<i64: 2, 3, 128, 128>}, {pipeline_mode = #tpu.pipeline_mode<synchronous>, transform_indices = @transform_7, window_bounds = array<i64: 2, 3, 1, 128>}, {pipeline_mode = #tpu.pipeline_mode<synchronous>, transform_indices = @transform_8, window_bounds = array<i64: 2, 128, 128>}, {pipeline_mode = #tpu.pipeline_mode<synchronous>, transform_indices = @transform_9, window_bounds = array<i64: 2, 1, 128>}, {transform_indices = @transform_10, window_bounds = array<i64: 1, 2, 16, 128>}]} {
    %c0 = arith.constant 0 : index
    %c0_0 = arith.constant 0 : index
    %c0_1 = arith.constant 0 : index
    %0 = vector.load %arg1[%c0, %c0_0, %c0_1] : memref<1x16x128xf32, #tpu.memory_space<vmem>>, vector<1x16x128xf32>
    %1 = vector.shape_cast %0 : vector<1x16x128xf32> to vector<16x128xf32>
    %c0_2 = arith.constant 0 : index
    %c0_3 = arith.constant 0 : index
    %c0_4 = arith.constant 0 : index
    %2 = vector.load %arg2[%c0_2, %c0_3, %c0_4] : memref<1x16x1xf32, #tpu.memory_space<vmem>>, vector<1x16x1xf32>
    %3 = vector.shape_cast %2 : vector<1x16x1xf32> to vector<16x1xf32>
    %4 = tpu.iota {dimensions = array<i32: 0>} : vector<16x1xi32>
    %5 = tpu.iota {dimensions = array<i32: 1>} : vector<1x128xi32>
    %c6_i32 = arith.constant 6 : i32
    %6 = vector.broadcast %c6_i32 : i32 to vector<1x128xi32>
    %7 = arith.cmpi slt, %5, %6 : vector<1x128xi32>
    %c0_5 = arith.constant 0 : index
    %c0_6 = arith.constant 0 : index
    %c0_7 = arith.constant 0 : index
    %8 = vector.load %arg3[%c0_5, %c0_6, %c0_7] : memref<2x128x128xf32, #tpu.memory_space<vmem>>, vector<1x128x128xf32>
    %9 = vector.shape_cast %8 : vector<1x128x128xf32> to vector<128x128xf32>
    %cst = arith.constant dense<0.000000e+00> : vector<16x128xf32>
    %10 = tpu.matmul %1, %9, %cst {dimension_numbers = #tpu.dot_dimension_numbers<[1], [0], [0], [1], [0, 0, 1, 1], [], []>} : vector<16x128xf32>, vector<128x128xf32>, vector<16x128xf32> -> vector<16x128xf32>
    %c0_8 = arith.constant 0 : index
    %c0_9 = arith.constant 0 : index
    %c0_10 = arith.constant 0 : index
    %11 = vector.load %arg4[%c0_8, %c0_9, %c0_10] : memref<2x1x128xf32, #tpu.memory_space<vmem>>, vector<1x1x128xf32>
    %12 = vector.shape_cast %11 : vector<1x1x128xf32> to vector<1x128xf32>
    %13 = vector.broadcast %12 : vector<1x128xf32> to vector<16x128xf32>
    %14 = arith.addf %10, %13 : vector<16x128xf32>
    %c1_i32 = arith.constant 1 : i32
    %15 = tpu.dynamic_rotate %14 by %c1_i32 dim 0 : vector<16x128xf32>, i32 -> vector<16x128xf32>
    %c1_i32_11 = arith.constant 1 : i32
    %16 = vector.broadcast %c1_i32_11 : i32 to vector<16x1xi32>
    %17 = arith.cmpi sge, %4, %16 : vector<16x1xi32>
    %cst_12 = arith.constant 0.000000e+00 : f32
    %18 = vector.shape_cast %17 : vector<16x1xi1> to vector<16x1xi1>
    %19 = vector.broadcast %18 : vector<16x1xi1> to vector<16x128xi1>
    %20 = vector.broadcast %cst_12 : f32 to vector<16x128xf32>
    %21 = arith.select %19, %15, %20 : vector<16x128xi1>, vector<16x128xf32>
    %c15_i32 = arith.constant 15 : i32
    %22 = tpu.dynamic_rotate %14 by %c15_i32 dim 0 : vector<16x128xf32>, i32 -> vector<16x128xf32>
    %c15_i32_13 = arith.constant 15 : i32
    %23 = vector.broadcast %c15_i32_13 : i32 to vector<16x1xi32>
    %24 = arith.cmpi slt, %4, %23 : vector<16x1xi32>
    %cst_14 = arith.constant 0.000000e+00 : f32
    %25 = vector.shape_cast %24 : vector<16x1xi1> to vector<16x1xi1>
    %26 = vector.broadcast %25 : vector<16x1xi1> to vector<16x128xi1>
    %27 = vector.broadcast %cst_14 : f32 to vector<16x128xf32>
    %28 = arith.select %26, %22, %27 : vector<16x128xi1>, vector<16x128xf32>
    %29 = tpu.concatenate %21, %14, %28 in 1 : vector<16x128xf32>, vector<16x128xf32>, vector<16x128xf32> -> vector<16x384xf32>
    %c0_15 = arith.constant 0 : index
    %c0_16 = arith.constant 0 : index
    %c0_17 = arith.constant 0 : index
    %c0_18 = arith.constant 0 : index
    %30 = vector.load %arg5[%c0_15, %c0_16, %c0_17, %c0_18] : memref<2x3x384x128xf32, #tpu.memory_space<vmem>>, vector<1x1x384x128xf32>
    %31 = vector.shape_cast %30 : vector<1x1x384x128xf32> to vector<384x128xf32>
    %cst_19 = arith.constant dense<0.000000e+00> : vector<16x128xf32>
    %32 = tpu.matmul %29, %31, %cst_19 {dimension_numbers = #tpu.dot_dimension_numbers<[1], [0], [0], [1], [0, 0, 1, 1], [], []>} : vector<16x384xf32>, vector<384x128xf32>, vector<16x128xf32> -> vector<16x128xf32>
    %c0_20 = arith.constant 0 : index
    %c0_21 = arith.constant 0 : index
    %c0_22 = arith.constant 0 : index
    %c0_23 = arith.constant 0 : index
    %33 = vector.load %arg6[%c0_20, %c0_21, %c0_22, %c0_23] : memref<2x3x1x128xf32, #tpu.memory_space<vmem>>, vector<1x1x1x128xf32>
    %34 = vector.shape_cast %33 : vector<1x1x1x128xf32> to vector<1x128xf32>
    %35 = vector.broadcast %34 : vector<1x128xf32> to vector<16x128xf32>
    %36 = arith.addf %32, %35 : vector<16x128xf32>
    %cst_24 = arith.constant 0.000000e+00 : f32
    %37 = vector.broadcast %cst_24 : f32 to vector<16x128xf32>
    %38 = arith.maximumf %36, %37 : vector<16x128xf32>
    %c0_25 = arith.constant 0 : index
    %c0_26 = arith.constant 0 : index
    %c0_27 = arith.constant 0 : index
    %c0_28 = arith.constant 0 : index
    %39 = vector.load %arg7[%c0_25, %c0_26, %c0_27, %c0_28] : memref<2x3x128x128xf32, #tpu.memory_space<vmem>>, vector<1x1x128x128xf32>
    %40 = vector.shape_cast %39 : vector<1x1x128x128xf32> to vector<128x128xf32>
    %cst_29 = arith.constant dense<0.000000e+00> : vector<16x128xf32>
    %41 = tpu.matmul %38, %40, %cst_29 {dimension_numbers = #tpu.dot_dimension_numbers<[1], [0], [0], [1], [0, 0, 1, 1], [], []>} : vector<16x128xf32>, vector<128x128xf32>, vector<16x128xf32> -> vector<16x128xf32>
    %c0_30 = arith.constant 0 : index
    %c0_31 = arith.constant 0 : index
    %c0_32 = arith.constant 0 : index
    %c0_33 = arith.constant 0 : index
    %42 = vector.load %arg8[%c0_30, %c0_31, %c0_32, %c0_33] : memref<2x3x1x128xf32, #tpu.memory_space<vmem>>, vector<1x1x1x128xf32>
    %43 = vector.shape_cast %42 : vector<1x1x1x128xf32> to vector<1x128xf32>
    %44 = vector.broadcast %43 : vector<1x128xf32> to vector<16x128xf32>
    %45 = arith.addf %41, %44 : vector<16x128xf32>
    %46 = arith.addf %14, %45 : vector<16x128xf32>
    %47 = vector.broadcast %3 : vector<16x1xf32> to vector<16x128xf32>
    %48 = arith.mulf %46, %47 : vector<16x128xf32>
    %c2_i32 = arith.constant 2 : i32
    %49 = tpu.dynamic_rotate %48 by %c2_i32 dim 0 : vector<16x128xf32>, i32 -> vector<16x128xf32>
    %c2_i32_34 = arith.constant 2 : i32
    %50 = vector.broadcast %c2_i32_34 : i32 to vector<16x1xi32>
    %51 = arith.cmpi sge, %4, %50 : vector<16x1xi32>
    %cst_35 = arith.constant 0.000000e+00 : f32
    %52 = vector.shape_cast %51 : vector<16x1xi1> to vector<16x1xi1>
    %53 = vector.broadcast %52 : vector<16x1xi1> to vector<16x128xi1>
    %54 = vector.broadcast %cst_35 : f32 to vector<16x128xf32>
    %55 = arith.select %53, %49, %54 : vector<16x128xi1>, vector<16x128xf32>
    %c14_i32 = arith.constant 14 : i32
    %56 = tpu.dynamic_rotate %48 by %c14_i32 dim 0 : vector<16x128xf32>, i32 -> vector<16x128xf32>
    %c14_i32_36 = arith.constant 14 : i32
    %57 = vector.broadcast %c14_i32_36 : i32 to vector<16x1xi32>
    %58 = arith.cmpi slt, %4, %57 : vector<16x1xi32>
    %cst_37 = arith.constant 0.000000e+00 : f32
    %59 = vector.shape_cast %58 : vector<16x1xi1> to vector<16x1xi1>
    %60 = vector.broadcast %59 : vector<16x1xi1> to vector<16x128xi1>
    %61 = vector.broadcast %cst_37 : f32 to vector<16x128xf32>
    %62 = arith.select %60, %56, %61 : vector<16x128xi1>, vector<16x128xf32>
    %63 = tpu.concatenate %55, %48, %62 in 1 : vector<16x128xf32>, vector<16x128xf32>, vector<16x128xf32> -> vector<16x384xf32>
    %c0_38 = arith.constant 0 : index
    %c1 = arith.constant 1 : index
    %c0_39 = arith.constant 0 : index
    %c0_40 = arith.constant 0 : index
    %64 = vector.load %arg5[%c0_38, %c1, %c0_39, %c0_40] : memref<2x3x384x128xf32, #tpu.memory_space<vmem>>, vector<1x1x384x128xf32>
    %65 = vector.shape_cast %64 : vector<1x1x384x128xf32> to vector<384x128xf32>
    %cst_41 = arith.constant dense<0.000000e+00> : vector<16x128xf32>
    %66 = tpu.matmul %63, %65, %cst_41 {dimension_numbers = #tpu.dot_dimension_numbers<[1], [0], [0], [1], [0, 0, 1, 1], [], []>} : vector<16x384xf32>, vector<384x128xf32>, vector<16x128xf32> -> vector<16x128xf32>
    %c0_42 = arith.constant 0 : index
    %c1_43 = arith.constant 1 : index
    %c0_44 = arith.constant 0 : index
    %c0_45 = arith.constant 0 : index
    %67 = vector.load %arg6[%c0_42, %c1_43, %c0_44, %c0_45] : memref<2x3x1x128xf32, #tpu.memory_space<vmem>>, vector<1x1x1x128xf32>
    %68 = vector.shape_cast %67 : vector<1x1x1x128xf32> to vector<1x128xf32>
    %69 = vector.broadcast %68 : vector<1x128xf32> to vector<16x128xf32>
    %70 = arith.addf %66, %69 : vector<16x128xf32>
    %cst_46 = arith.constant 0.000000e+00 : f32
    %71 = vector.broadcast %cst_46 : f32 to vector<16x128xf32>
    %72 = arith.maximumf %70, %71 : vector<16x128xf32>
    %c0_47 = arith.constant 0 : index
    %c1_48 = arith.constant 1 : index
    %c0_49 = arith.constant 0 : index
    %c0_50 = arith.constant 0 : index
    %73 = vector.load %arg7[%c0_47, %c1_48, %c0_49, %c0_50] : memref<2x3x128x128xf32, #tpu.memory_space<vmem>>, vector<1x1x128x128xf32>
    %74 = vector.shape_cast %73 : vector<1x1x128x128xf32> to vector<128x128xf32>
    %cst_51 = arith.constant dense<0.000000e+00> : vector<16x128xf32>
    %75 = tpu.matmul %72, %74, %cst_51 {dimension_numbers = #tpu.dot_dimension_numbers<[1], [0], [0], [1], [0, 0, 1, 1], [], []>} : vector<16x128xf32>, vector<128x128xf32>, vector<16x128xf32> -> vector<16x128xf32>
    %c0_52 = arith.constant 0 : index
    %c1_53 = arith.constant 1 : index
    %c0_54 = arith.constant 0 : index
    %c0_55 = arith.constant 0 : index
    %76 = vector.load %arg8[%c0_52, %c1_53, %c0_54, %c0_55] : memref<2x3x1x128xf32, #tpu.memory_space<vmem>>, vector<1x1x1x128xf32>
    %77 = vector.shape_cast %76 : vector<1x1x1x128xf32> to vector<1x128xf32>
    %78 = vector.broadcast %77 : vector<1x128xf32> to vector<16x128xf32>
    %79 = arith.addf %75, %78 : vector<16x128xf32>
    %80 = arith.addf %48, %79 : vector<16x128xf32>
    %81 = vector.broadcast %3 : vector<16x1xf32> to vector<16x128xf32>
    %82 = arith.mulf %80, %81 : vector<16x128xf32>
    %c4_i32 = arith.constant 4 : i32
    %83 = tpu.dynamic_rotate %82 by %c4_i32 dim 0 : vector<16x128xf32>, i32 -> vector<16x128xf32>
    %c4_i32_56 = arith.constant 4 : i32
    %84 = vector.broadcast %c4_i32_56 : i32 to vector<16x1xi32>
    %85 = arith.cmpi sge, %4, %84 : vector<16x1xi32>
    %cst_57 = arith.constant 0.000000e+00 : f32
    %86 = vector.shape_cast %85 : vector<16x1xi1> to vector<16x1xi1>
    %87 = vector.broadcast %86 : vector<16x1xi1> to vector<16x128xi1>
    %88 = vector.broadcast %cst_57 : f32 to vector<16x128xf32>
    %89 = arith.select %87, %83, %88 : vector<16x128xi1>, vector<16x128xf32>
    %c12_i32 = arith.constant 12 : i32
    %90 = tpu.dynamic_rotate %82 by %c12_i32 dim 0 : vector<16x128xf32>, i32 -> vector<16x128xf32>
    %c12_i32_58 = arith.constant 12 : i32
    %91 = vector.broadcast %c12_i32_58 : i32 to vector<16x1xi32>
    %92 = arith.cmpi slt, %4, %91 : vector<16x1xi32>
    %cst_59 = arith.constant 0.000000e+00 : f32
    %93 = vector.shape_cast %92 : vector<16x1xi1> to vector<16x1xi1>
    %94 = vector.broadcast %93 : vector<16x1xi1> to vector<16x128xi1>
    %95 = vector.broadcast %cst_59 : f32 to vector<16x128xf32>
    %96 = arith.select %94, %90, %95 : vector<16x128xi1>, vector<16x128xf32>
    %97 = tpu.concatenate %89, %82, %96 in 1 : vector<16x128xf32>, vector<16x128xf32>, vector<16x128xf32> -> vector<16x384xf32>
    %c0_60 = arith.constant 0 : index
    %c2 = arith.constant 2 : index
    %c0_61 = arith.constant 0 : index
    %c0_62 = arith.constant 0 : index
    %98 = vector.load %arg5[%c0_60, %c2, %c0_61, %c0_62] : memref<2x3x384x128xf32, #tpu.memory_space<vmem>>, vector<1x1x384x128xf32>
    %99 = vector.shape_cast %98 : vector<1x1x384x128xf32> to vector<384x128xf32>
    %cst_63 = arith.constant dense<0.000000e+00> : vector<16x128xf32>
    %100 = tpu.matmul %97, %99, %cst_63 {dimension_numbers = #tpu.dot_dimension_numbers<[1], [0], [0], [1], [0, 0, 1, 1], [], []>} : vector<16x384xf32>, vector<384x128xf32>, vector<16x128xf32> -> vector<16x128xf32>
    %c0_64 = arith.constant 0 : index
    %c2_65 = arith.constant 2 : index
    %c0_66 = arith.constant 0 : index
    %c0_67 = arith.constant 0 : index
    %101 = vector.load %arg6[%c0_64, %c2_65, %c0_66, %c0_67] : memref<2x3x1x128xf32, #tpu.memory_space<vmem>>, vector<1x1x1x128xf32>
    %102 = vector.shape_cast %101 : vector<1x1x1x128xf32> to vector<1x128xf32>
    %103 = vector.broadcast %102 : vector<1x128xf32> to vector<16x128xf32>
    %104 = arith.addf %100, %103 : vector<16x128xf32>
    %cst_68 = arith.constant 0.000000e+00 : f32
    %105 = vector.broadcast %cst_68 : f32 to vector<16x128xf32>
    %106 = arith.maximumf %104, %105 : vector<16x128xf32>
    %c0_69 = arith.constant 0 : index
    %c2_70 = arith.constant 2 : index
    %c0_71 = arith.constant 0 : index
    %c0_72 = arith.constant 0 : index
    %107 = vector.load %arg7[%c0_69, %c2_70, %c0_71, %c0_72] : memref<2x3x128x128xf32, #tpu.memory_space<vmem>>, vector<1x1x128x128xf32>
    %108 = vector.shape_cast %107 : vector<1x1x128x128xf32> to vector<128x128xf32>
    %cst_73 = arith.constant dense<0.000000e+00> : vector<16x128xf32>
    %109 = tpu.matmul %106, %108, %cst_73 {dimension_numbers = #tpu.dot_dimension_numbers<[1], [0], [0], [1], [0, 0, 1, 1], [], []>} : vector<16x128xf32>, vector<128x128xf32>, vector<16x128xf32> -> vector<16x128xf32>
    %c0_74 = arith.constant 0 : index
    %c2_75 = arith.constant 2 : index
    %c0_76 = arith.constant 0 : index
    %c0_77 = arith.constant 0 : index
    %110 = vector.load %arg8[%c0_74, %c2_75, %c0_76, %c0_77] : memref<2x3x1x128xf32, #tpu.memory_space<vmem>>, vector<1x1x1x128xf32>
    %111 = vector.shape_cast %110 : vector<1x1x1x128xf32> to vector<1x128xf32>
    %112 = vector.broadcast %111 : vector<1x128xf32> to vector<16x128xf32>
    %113 = arith.addf %109, %112 : vector<16x128xf32>
    %114 = arith.addf %82, %113 : vector<16x128xf32>
    %115 = vector.broadcast %3 : vector<16x1xf32> to vector<16x128xf32>
    %116 = arith.mulf %114, %115 : vector<16x128xf32>
    %c0_78 = arith.constant 0 : index
    %c0_79 = arith.constant 0 : index
    %c0_80 = arith.constant 0 : index
    %117 = vector.load %arg9[%c0_78, %c0_79, %c0_80] : memref<2x128x128xf32, #tpu.memory_space<vmem>>, vector<1x128x128xf32>
    %118 = vector.shape_cast %117 : vector<1x128x128xf32> to vector<128x128xf32>
    %cst_81 = arith.constant dense<0.000000e+00> : vector<16x128xf32>
    %119 = tpu.matmul %116, %118, %cst_81 {dimension_numbers = #tpu.dot_dimension_numbers<[1], [0], [0], [1], [0, 0, 1, 1], [], []>} : vector<16x128xf32>, vector<128x128xf32>, vector<16x128xf32> -> vector<16x128xf32>
    %c0_82 = arith.constant 0 : index
    %c0_83 = arith.constant 0 : index
    %c0_84 = arith.constant 0 : index
    %120 = vector.load %arg10[%c0_82, %c0_83, %c0_84] : memref<2x1x128xf32, #tpu.memory_space<vmem>>, vector<1x1x128xf32>
    %121 = vector.shape_cast %120 : vector<1x1x128xf32> to vector<1x128xf32>
    %122 = vector.broadcast %121 : vector<1x128xf32> to vector<16x128xf32>
    %123 = arith.addf %119, %122 : vector<16x128xf32>
    %124 = vector.broadcast %3 : vector<16x1xf32> to vector<16x128xf32>
    %125 = arith.mulf %123, %124 : vector<16x128xf32>
    %c0_85 = arith.constant 0 : index
    %c0_86 = arith.constant 0 : index
    %c0_87 = arith.constant 0 : index
    %c0_88 = arith.constant 0 : index
    %126 = vector.load %arg11[%c0_85, %c0_86, %c0_87, %c0_88] : memref<1x2x16x128xf32, #tpu.memory_space<vmem>>, vector<1x1x16x128xf32>
    %127 = vector.shape_cast %126 : vector<1x1x16x128xf32> to vector<16x128xf32>
    %128 = vector.shape_cast %125 : vector<16x128xf32> to vector<1x1x16x128xf32>
    tpu.vector_store %arg11[%c0_85, %c0_86, %c0_87, %c0_88], %128 {strides = array<i32>} : memref<1x2x16x128xf32, #tpu.memory_space<vmem>>, vector<1x1x16x128xf32>,
    %cst_89 = arith.constant dense<0xFF800000> : vector<16xf32>
    %129 = vector.multi_reduction <maximumf>, %125, %cst_89 [1] : vector<16x128xf32> to vector<16xf32>
    %130 = vector.shape_cast %129 : vector<16xf32> to vector<16x1xf32>
    %131 = vector.broadcast %130 : vector<16x1xf32> to vector<16x128xf32>
    %132 = arith.subf %125, %131 : vector<16x128xf32>
    %133 = math.exp %132 : vector<16x128xf32>
    %cst_90 = arith.constant 0.000000e+00 : f32
    %134 = vector.shape_cast %7 : vector<1x128xi1> to vector<1x128xi1>
    %135 = vector.broadcast %134 : vector<1x128xi1> to vector<16x128xi1>
    %136 = vector.broadcast %cst_90 : f32 to vector<16x128xf32>
    %137 = arith.select %135, %133, %136 : vector<16x128xi1>, vector<16x128xf32>
    %cst_91 = arith.constant dense<0.000000e+00> : vector<16xf32>
    %138 = vector.multi_reduction <add>, %137, %cst_91 [1] : vector<16x128xf32> to vector<16xf32>
    %139 = vector.shape_cast %138 : vector<16xf32> to vector<16x1xf32>
    %140 = tpu.reciprocal %139 {approx = true} : vector<16x1xf32> -> vector<16x1xf32>
    %141 = vector.broadcast %140 : vector<16x1xf32> to vector<16x128xf32>
    %142 = arith.mulf %137, %141 : vector<16x128xf32>
    %143 = vector.broadcast %3 : vector<16x1xf32> to vector<16x128xf32>
    %144 = arith.mulf %142, %143 : vector<16x128xf32>
    %c1_92 = arith.constant 1 : index
    %c0_93 = arith.constant 0 : index
    %c0_94 = arith.constant 0 : index
    %145 = vector.load %arg3[%c1_92, %c0_93, %c0_94] : memref<2x128x128xf32, #tpu.memory_space<vmem>>, vector<1x128x128xf32>
    %146 = vector.shape_cast %145 : vector<1x128x128xf32> to vector<128x128xf32>
    %cst_95 = arith.constant dense<0.000000e+00> : vector<16x128xf32>
    %147 = tpu.matmul %144, %146, %cst_95 {dimension_numbers = #tpu.dot_dimension_numbers<[1], [0], [0], [1], [0, 0, 1, 1], [], []>} : vector<16x128xf32>, vector<128x128xf32>, vector<16x128xf32> -> vector<16x128xf32>
    %c1_96 = arith.constant 1 : index
    %c0_97 = arith.constant 0 : index
    %c0_98 = arith.constant 0 : index
    %148 = vector.load %arg4[%c1_96, %c0_97, %c0_98] : memref<2x1x128xf32, #tpu.memory_space<vmem>>, vector<1x1x128xf32>
    %149 = vector.shape_cast %148 : vector<1x1x128xf32> to vector<1x128xf32>
    %150 = vector.broadcast %149 : vector<1x128xf32> to vector<16x128xf32>
    %151 = arith.addf %147, %150 : vector<16x128xf32>
    %c1_i32_99 = arith.constant 1 : i32
    %152 = tpu.dynamic_rotate %151 by %c1_i32_99 dim 0 : vector<16x128xf32>, i32 -> vector<16x128xf32>
    %c1_i32_100 = arith.constant 1 : i32
    %153 = vector.broadcast %c1_i32_100 : i32 to vector<16x1xi32>
    %154 = arith.cmpi sge, %4, %153 : vector<16x1xi32>
    %cst_101 = arith.constant 0.000000e+00 : f32
    %155 = vector.shape_cast %154 : vector<16x1xi1> to vector<16x1xi1>
    %156 = vector.broadcast %155 : vector<16x1xi1> to vector<16x128xi1>
    %157 = vector.broadcast %cst_101 : f32 to vector<16x128xf32>
    %158 = arith.select %156, %152, %157 : vector<16x128xi1>, vector<16x128xf32>
    %c15_i32_102 = arith.constant 15 : i32
    %159 = tpu.dynamic_rotate %151 by %c15_i32_102 dim 0 : vector<16x128xf32>, i32 -> vector<16x128xf32>
    %c15_i32_103 = arith.constant 15 : i32
    %160 = vector.broadcast %c15_i32_103 : i32 to vector<16x1xi32>
    %161 = arith.cmpi slt, %4, %160 : vector<16x1xi32>
    %cst_104 = arith.constant 0.000000e+00 : f32
    %162 = vector.shape_cast %161 : vector<16x1xi1> to vector<16x1xi1>
    %163 = vector.broadcast %162 : vector<16x1xi1> to vector<16x128xi1>
    %164 = vector.broadcast %cst_104 : f32 to vector<16x128xf32>
    %165 = arith.select %163, %159, %164 : vector<16x128xi1>, vector<16x128xf32>
    %166 = tpu.concatenate %158, %151, %165 in 1 : vector<16x128xf32>, vector<16x128xf32>, vector<16x128xf32> -> vector<16x384xf32>
    %c1_105 = arith.constant 1 : index
    %c0_106 = arith.constant 0 : index
    %c0_107 = arith.constant 0 : index
    %c0_108 = arith.constant 0 : index
    %167 = vector.load %arg5[%c1_105, %c0_106, %c0_107, %c0_108] : memref<2x3x384x128xf32, #tpu.memory_space<vmem>>, vector<1x1x384x128xf32>
    %168 = vector.shape_cast %167 : vector<1x1x384x128xf32> to vector<384x128xf32>
    %cst_109 = arith.constant dense<0.000000e+00> : vector<16x128xf32>
    %169 = tpu.matmul %166, %168, %cst_109 {dimension_numbers = #tpu.dot_dimension_numbers<[1], [0], [0], [1], [0, 0, 1, 1], [], []>} : vector<16x384xf32>, vector<384x128xf32>, vector<16x128xf32> -> vector<16x128xf32>
    %c1_110 = arith.constant 1 : index
    %c0_111 = arith.constant 0 : index
    %c0_112 = arith.constant 0 : index
    %c0_113 = arith.constant 0 : index
    %170 = vector.load %arg6[%c1_110, %c0_111, %c0_112, %c0_113] : memref<2x3x1x128xf32, #tpu.memory_space<vmem>>, vector<1x1x1x128xf32>
    %171 = vector.shape_cast %170 : vector<1x1x1x128xf32> to vector<1x128xf32>
    %172 = vector.broadcast %171 : vector<1x128xf32> to vector<16x128xf32>
    %173 = arith.addf %169, %172 : vector<16x128xf32>
    %cst_114 = arith.constant 0.000000e+00 : f32
    %174 = vector.broadcast %cst_114 : f32 to vector<16x128xf32>
    %175 = arith.maximumf %173, %174 : vector<16x128xf32>
    %c1_115 = arith.constant 1 : index
    %c0_116 = arith.constant 0 : index
    %c0_117 = arith.constant 0 : index
    %c0_118 = arith.constant 0 : index
    %176 = vector.load %arg7[%c1_115, %c0_116, %c0_117, %c0_118] : memref<2x3x128x128xf32, #tpu.memory_space<vmem>>, vector<1x1x128x128xf32>
    %177 = vector.shape_cast %176 : vector<1x1x128x128xf32> to vector<128x128xf32>
    %cst_119 = arith.constant dense<0.000000e+00> : vector<16x128xf32>
    %178 = tpu.matmul %175, %177, %cst_119 {dimension_numbers = #tpu.dot_dimension_numbers<[1], [0], [0], [1], [0, 0, 1, 1], [], []>} : vector<16x128xf32>, vector<128x128xf32>, vector<16x128xf32> -> vector<16x128xf32>
    %c1_120 = arith.constant 1 : index
    %c0_121 = arith.constant 0 : index
    %c0_122 = arith.constant 0 : index
    %c0_123 = arith.constant 0 : index
    %179 = vector.load %arg8[%c1_120, %c0_121, %c0_122, %c0_123] : memref<2x3x1x128xf32, #tpu.memory_space<vmem>>, vector<1x1x1x128xf32>
    %180 = vector.shape_cast %179 : vector<1x1x1x128xf32> to vector<1x128xf32>
    %181 = vector.broadcast %180 : vector<1x128xf32> to vector<16x128xf32>
    %182 = arith.addf %178, %181 : vector<16x128xf32>
    %183 = arith.addf %151, %182 : vector<16x128xf32>
    %184 = vector.broadcast %3 : vector<16x1xf32> to vector<16x128xf32>
    %185 = arith.mulf %183, %184 : vector<16x128xf32>
    %c2_i32_124 = arith.constant 2 : i32
    %186 = tpu.dynamic_rotate %185 by %c2_i32_124 dim 0 : vector<16x128xf32>, i32 -> vector<16x128xf32>
    %c2_i32_125 = arith.constant 2 : i32
    %187 = vector.broadcast %c2_i32_125 : i32 to vector<16x1xi32>
    %188 = arith.cmpi sge, %4, %187 : vector<16x1xi32>
    %cst_126 = arith.constant 0.000000e+00 : f32
    %189 = vector.shape_cast %188 : vector<16x1xi1> to vector<16x1xi1>
    %190 = vector.broadcast %189 : vector<16x1xi1> to vector<16x128xi1>
    %191 = vector.broadcast %cst_126 : f32 to vector<16x128xf32>
    %192 = arith.select %190, %186, %191 : vector<16x128xi1>, vector<16x128xf32>
    %c14_i32_127 = arith.constant 14 : i32
    %193 = tpu.dynamic_rotate %185 by %c14_i32_127 dim 0 : vector<16x128xf32>, i32 -> vector<16x128xf32>
    %c14_i32_128 = arith.constant 14 : i32
    %194 = vector.broadcast %c14_i32_128 : i32 to vector<16x1xi32>
    %195 = arith.cmpi slt, %4, %194 : vector<16x1xi32>
    %cst_129 = arith.constant 0.000000e+00 : f32
    %196 = vector.shape_cast %195 : vector<16x1xi1> to vector<16x1xi1>
    %197 = vector.broadcast %196 : vector<16x1xi1> to vector<16x128xi1>
    %198 = vector.broadcast %cst_129 : f32 to vector<16x128xf32>
    %199 = arith.select %197, %193, %198 : vector<16x128xi1>, vector<16x128xf32>
    %200 = tpu.concatenate %192, %185, %199 in 1 : vector<16x128xf32>, vector<16x128xf32>, vector<16x128xf32> -> vector<16x384xf32>
    %c1_130 = arith.constant 1 : index
    %c1_131 = arith.constant 1 : index
    %c0_132 = arith.constant 0 : index
    %c0_133 = arith.constant 0 : index
    %201 = vector.load %arg5[%c1_130, %c1_131, %c0_132, %c0_133] : memref<2x3x384x128xf32, #tpu.memory_space<vmem>>, vector<1x1x384x128xf32>
    %202 = vector.shape_cast %201 : vector<1x1x384x128xf32> to vector<384x128xf32>
    %cst_134 = arith.constant dense<0.000000e+00> : vector<16x128xf32>
    %203 = tpu.matmul %200, %202, %cst_134 {dimension_numbers = #tpu.dot_dimension_numbers<[1], [0], [0], [1], [0, 0, 1, 1], [], []>} : vector<16x384xf32>, vector<384x128xf32>, vector<16x128xf32> -> vector<16x128xf32>
    %c1_135 = arith.constant 1 : index
    %c1_136 = arith.constant 1 : index
    %c0_137 = arith.constant 0 : index
    %c0_138 = arith.constant 0 : index
    %204 = vector.load %arg6[%c1_135, %c1_136, %c0_137, %c0_138] : memref<2x3x1x128xf32, #tpu.memory_space<vmem>>, vector<1x1x1x128xf32>
    %205 = vector.shape_cast %204 : vector<1x1x1x128xf32> to vector<1x128xf32>
    %206 = vector.broadcast %205 : vector<1x128xf32> to vector<16x128xf32>
    %207 = arith.addf %203, %206 : vector<16x128xf32>
    %cst_139 = arith.constant 0.000000e+00 : f32
    %208 = vector.broadcast %cst_139 : f32 to vector<16x128xf32>
    %209 = arith.maximumf %207, %208 : vector<16x128xf32>
    %c1_140 = arith.constant 1 : index
    %c1_141 = arith.constant 1 : index
    %c0_142 = arith.constant 0 : index
    %c0_143 = arith.constant 0 : index
    %210 = vector.load %arg7[%c1_140, %c1_141, %c0_142, %c0_143] : memref<2x3x128x128xf32, #tpu.memory_space<vmem>>, vector<1x1x128x128xf32>
    %211 = vector.shape_cast %210 : vector<1x1x128x128xf32> to vector<128x128xf32>
    %cst_144 = arith.constant dense<0.000000e+00> : vector<16x128xf32>
    %212 = tpu.matmul %209, %211, %cst_144 {dimension_numbers = #tpu.dot_dimension_numbers<[1], [0], [0], [1], [0, 0, 1, 1], [], []>} : vector<16x128xf32>, vector<128x128xf32>, vector<16x128xf32> -> vector<16x128xf32>
    %c1_145 = arith.constant 1 : index
    %c1_146 = arith.constant 1 : index
    %c0_147 = arith.constant 0 : index
    %c0_148 = arith.constant 0 : index
    %213 = vector.load %arg8[%c1_145, %c1_146, %c0_147, %c0_148] : memref<2x3x1x128xf32, #tpu.memory_space<vmem>>, vector<1x1x1x128xf32>
    %214 = vector.shape_cast %213 : vector<1x1x1x128xf32> to vector<1x128xf32>
    %215 = vector.broadcast %214 : vector<1x128xf32> to vector<16x128xf32>
    %216 = arith.addf %212, %215 : vector<16x128xf32>
    %217 = arith.addf %185, %216 : vector<16x128xf32>
    %218 = vector.broadcast %3 : vector<16x1xf32> to vector<16x128xf32>
    %219 = arith.mulf %217, %218 : vector<16x128xf32>
    %c4_i32_149 = arith.constant 4 : i32
    %220 = tpu.dynamic_rotate %219 by %c4_i32_149 dim 0 : vector<16x128xf32>, i32 -> vector<16x128xf32>
    %c4_i32_150 = arith.constant 4 : i32
    %221 = vector.broadcast %c4_i32_150 : i32 to vector<16x1xi32>
    %222 = arith.cmpi sge, %4, %221 : vector<16x1xi32>
    %cst_151 = arith.constant 0.000000e+00 : f32
    %223 = vector.shape_cast %222 : vector<16x1xi1> to vector<16x1xi1>
    %224 = vector.broadcast %223 : vector<16x1xi1> to vector<16x128xi1>
    %225 = vector.broadcast %cst_151 : f32 to vector<16x128xf32>
    %226 = arith.select %224, %220, %225 : vector<16x128xi1>, vector<16x128xf32>
    %c12_i32_152 = arith.constant 12 : i32
    %227 = tpu.dynamic_rotate %219 by %c12_i32_152 dim 0 : vector<16x128xf32>, i32 -> vector<16x128xf32>
    %c12_i32_153 = arith.constant 12 : i32
    %228 = vector.broadcast %c12_i32_153 : i32 to vector<16x1xi32>
    %229 = arith.cmpi slt, %4, %228 : vector<16x1xi32>
    %cst_154 = arith.constant 0.000000e+00 : f32
    %230 = vector.shape_cast %229 : vector<16x1xi1> to vector<16x1xi1>
    %231 = vector.broadcast %230 : vector<16x1xi1> to vector<16x128xi1>
    %232 = vector.broadcast %cst_154 : f32 to vector<16x128xf32>
    %233 = arith.select %231, %227, %232 : vector<16x128xi1>, vector<16x128xf32>
    %234 = tpu.concatenate %226, %219, %233 in 1 : vector<16x128xf32>, vector<16x128xf32>, vector<16x128xf32> -> vector<16x384xf32>
    %c1_155 = arith.constant 1 : index
    %c2_156 = arith.constant 2 : index
    %c0_157 = arith.constant 0 : index
    %c0_158 = arith.constant 0 : index
    %235 = vector.load %arg5[%c1_155, %c2_156, %c0_157, %c0_158] : memref<2x3x384x128xf32, #tpu.memory_space<vmem>>, vector<1x1x384x128xf32>
    %236 = vector.shape_cast %235 : vector<1x1x384x128xf32> to vector<384x128xf32>
    %cst_159 = arith.constant dense<0.000000e+00> : vector<16x128xf32>
    %237 = tpu.matmul %234, %236, %cst_159 {dimension_numbers = #tpu.dot_dimension_numbers<[1], [0], [0], [1], [0, 0, 1, 1], [], []>} : vector<16x384xf32>, vector<384x128xf32>, vector<16x128xf32> -> vector<16x128xf32>
    %c1_160 = arith.constant 1 : index
    %c2_161 = arith.constant 2 : index
    %c0_162 = arith.constant 0 : index
    %c0_163 = arith.constant 0 : index
    %238 = vector.load %arg6[%c1_160, %c2_161, %c0_162, %c0_163] : memref<2x3x1x128xf32, #tpu.memory_space<vmem>>, vector<1x1x1x128xf32>
    %239 = vector.shape_cast %238 : vector<1x1x1x128xf32> to vector<1x128xf32>
    %240 = vector.broadcast %239 : vector<1x128xf32> to vector<16x128xf32>
    %241 = arith.addf %237, %240 : vector<16x128xf32>
    %cst_164 = arith.constant 0.000000e+00 : f32
    %242 = vector.broadcast %cst_164 : f32 to vector<16x128xf32>
    %243 = arith.maximumf %241, %242 : vector<16x128xf32>
    %c1_165 = arith.constant 1 : index
    %c2_166 = arith.constant 2 : index
    %c0_167 = arith.constant 0 : index
    %c0_168 = arith.constant 0 : index
    %244 = vector.load %arg7[%c1_165, %c2_166, %c0_167, %c0_168] : memref<2x3x128x128xf32, #tpu.memory_space<vmem>>, vector<1x1x128x128xf32>
    %245 = vector.shape_cast %244 : vector<1x1x128x128xf32> to vector<128x128xf32>
    %cst_169 = arith.constant dense<0.000000e+00> : vector<16x128xf32>
    %246 = tpu.matmul %243, %245, %cst_169 {dimension_numbers = #tpu.dot_dimension_numbers<[1], [0], [0], [1], [0, 0, 1, 1], [], []>} : vector<16x128xf32>, vector<128x128xf32>, vector<16x128xf32> -> vector<16x128xf32>
    %c1_170 = arith.constant 1 : index
    %c2_171 = arith.constant 2 : index
    %c0_172 = arith.constant 0 : index
    %c0_173 = arith.constant 0 : index
    %247 = vector.load %arg8[%c1_170, %c2_171, %c0_172, %c0_173] : memref<2x3x1x128xf32, #tpu.memory_space<vmem>>, vector<1x1x1x128xf32>
    %248 = vector.shape_cast %247 : vector<1x1x1x128xf32> to vector<1x128xf32>
    %249 = vector.broadcast %248 : vector<1x128xf32> to vector<16x128xf32>
    %250 = arith.addf %246, %249 : vector<16x128xf32>
    %251 = arith.addf %219, %250 : vector<16x128xf32>
    %252 = vector.broadcast %3 : vector<16x1xf32> to vector<16x128xf32>
    %253 = arith.mulf %251, %252 : vector<16x128xf32>
    %c1_174 = arith.constant 1 : index
    %c0_175 = arith.constant 0 : index
    %c0_176 = arith.constant 0 : index
    %254 = vector.load %arg9[%c1_174, %c0_175, %c0_176] : memref<2x128x128xf32, #tpu.memory_space<vmem>>, vector<1x128x128xf32>
    %255 = vector.shape_cast %254 : vector<1x128x128xf32> to vector<128x128xf32>
    %cst_177 = arith.constant dense<0.000000e+00> : vector<16x128xf32>
    %256 = tpu.matmul %253, %255, %cst_177 {dimension_numbers = #tpu.dot_dimension_numbers<[1], [0], [0], [1], [0, 0, 1, 1], [], []>} : vector<16x128xf32>, vector<128x128xf32>, vector<16x128xf32> -> vector<16x128xf32>
    %c1_178 = arith.constant 1 : index
    %c0_179 = arith.constant 0 : index
    %c0_180 = arith.constant 0 : index
    %257 = vector.load %arg10[%c1_178, %c0_179, %c0_180] : memref<2x1x128xf32, #tpu.memory_space<vmem>>, vector<1x1x128xf32>
    %258 = vector.shape_cast %257 : vector<1x1x128xf32> to vector<1x128xf32>
    %259 = vector.broadcast %258 : vector<1x128xf32> to vector<16x128xf32>
    %260 = arith.addf %256, %259 : vector<16x128xf32>
    %261 = vector.broadcast %3 : vector<16x1xf32> to vector<16x128xf32>
    %262 = arith.mulf %260, %261 : vector<16x128xf32>
    %c0_181 = arith.constant 0 : index
    %c1_182 = arith.constant 1 : index
    %c0_183 = arith.constant 0 : index
    %c0_184 = arith.constant 0 : index
    %263 = vector.load %arg11[%c0_181, %c1_182, %c0_183, %c0_184] : memref<1x2x16x128xf32, #tpu.memory_space<vmem>>, vector<1x1x16x128xf32>
    %264 = vector.shape_cast %263 : vector<1x1x16x128xf32> to vector<16x128xf32>
    %265 = vector.shape_cast %262 : vector<16x128xf32> to vector<1x1x16x128xf32>
    tpu.vector_store %arg11[%c0_181, %c1_182, %c0_183, %c0_184], %265 {strides = array<i32>} : memref<1x2x16x128xf32, #tpu.memory_space<vmem>>, vector<1x1x16x128xf32>,
    return
  }
  func.func @transform_0(%arg0: i32) -> (i32, i32, i32) {
    %c0_i32 = arith.constant 0 : i32
    %c0_i32_0 = arith.constant 0 : i32
    %c0_i32_1 = arith.constant 0 : i32
    return %arg0, %c0_i32, %c0_i32_0 : i32, i32, i32
  }
  func.func @transform_1(%arg0: i32) -> (i32, i32, i32) {
    %c0_i32 = arith.constant 0 : i32
    %c0_i32_0 = arith.constant 0 : i32
    %c0_i32_1 = arith.constant 0 : i32
    return %arg0, %c0_i32, %c0_i32_0 : i32, i32, i32
  }
  func.func @transform_2(%arg0: i32) -> (i32, i32, i32) {
    %c0_i32 = arith.constant 0 : i32
    %c0_i32_0 = arith.constant 0 : i32
    %c0_i32_1 = arith.constant 0 : i32
    %c0_i32_2 = arith.constant 0 : i32
    return %c0_i32, %c0_i32_0, %c0_i32_1 : i32, i32, i32
  }
  func.func @transform_3(%arg0: i32) -> (i32, i32, i32) {
    %c0_i32 = arith.constant 0 : i32
    %c0_i32_0 = arith.constant 0 : i32
    %c0_i32_1 = arith.constant 0 : i32
    %c0_i32_2 = arith.constant 0 : i32
    return %c0_i32, %c0_i32_0, %c0_i32_1 : i32, i32, i32
  }
  func.func @transform_4(%arg0: i32) -> (i32, i32, i32, i32) {
    %c0_i32 = arith.constant 0 : i32
    %c0_i32_0 = arith.constant 0 : i32
    %c0_i32_1 = arith.constant 0 : i32
    %c0_i32_2 = arith.constant 0 : i32
    %c0_i32_3 = arith.constant 0 : i32
    return %c0_i32, %c0_i32_0, %c0_i32_1, %c0_i32_2 : i32, i32, i32, i32
  }
  func.func @transform_5(%arg0: i32) -> (i32, i32, i32, i32) {
    %c0_i32 = arith.constant 0 : i32
    %c0_i32_0 = arith.constant 0 : i32
    %c0_i32_1 = arith.constant 0 : i32
    %c0_i32_2 = arith.constant 0 : i32
    %c0_i32_3 = arith.constant 0 : i32
    return %c0_i32, %c0_i32_0, %c0_i32_1, %c0_i32_2 : i32, i32, i32, i32
  }
  func.func @transform_6(%arg0: i32) -> (i32, i32, i32, i32) {
    %c0_i32 = arith.constant 0 : i32
    %c0_i32_0 = arith.constant 0 : i32
    %c0_i32_1 = arith.constant 0 : i32
    %c0_i32_2 = arith.constant 0 : i32
    %c0_i32_3 = arith.constant 0 : i32
    return %c0_i32, %c0_i32_0, %c0_i32_1, %c0_i32_2 : i32, i32, i32, i32
  }
  func.func @transform_7(%arg0: i32) -> (i32, i32, i32, i32) {
    %c0_i32 = arith.constant 0 : i32
    %c0_i32_0 = arith.constant 0 : i32
    %c0_i32_1 = arith.constant 0 : i32
    %c0_i32_2 = arith.constant 0 : i32
    %c0_i32_3 = arith.constant 0 : i32
    return %c0_i32, %c0_i32_0, %c0_i32_1, %c0_i32_2 : i32, i32, i32, i32
  }
  func.func @transform_8(%arg0: i32) -> (i32, i32, i32) {
    %c0_i32 = arith.constant 0 : i32
    %c0_i32_0 = arith.constant 0 : i32
    %c0_i32_1 = arith.constant 0 : i32
    %c0_i32_2 = arith.constant 0 : i32
    return %c0_i32, %c0_i32_0, %c0_i32_1 : i32, i32, i32
  }
  func.func @transform_9(%arg0: i32) -> (i32, i32, i32) {
    %c0_i32 = arith.constant 0 : i32
    %c0_i32_0 = arith.constant 0 : i32
    %c0_i32_1 = arith.constant 0 : i32
    %c0_i32_2 = arith.constant 0 : i32
    return %c0_i32, %c0_i32_0, %c0_i32_1 : i32, i32, i32
  }
  func.func @transform_10(%arg0: i32) -> (i32, i32, i32, i32) {
    %c0_i32 = arith.constant 0 : i32
    %c0_i32_0 = arith.constant 0 : i32
    %c0_i32_1 = arith.constant 0 : i32
    %c0_i32_2 = arith.constant 0 : i32
    return %arg0, %c0_i32, %c0_i32_0, %c0_i32_1 : i32, i32, i32, i32
  }
}

</mosaic_0001>

<llo_original>
// kernel: tpu_custom_call.1
$region0: #{tpu_custom_call.1}
  #allocation0 [shape = 'u32[]', space=smem, size = 0x4, offset = 0x4, fixed_abs, tag = 'smem constant byte address 0x4 - core index']
  #allocation1 [shape = 'u32[144,128]{1,0:T(1,128)}', space=vmem, size = 0x12000, scoped, tag = 'internal scratch']
  %s0 = inlined_call_operand.hbm [shape: f32[2,16,128], index: 0, kind: input, shape index: {}]
  %s1 = inlined_call_operand.vmem [shape: f32[2,16,1], index: 1, kind: input, shape index: {}]
  %s2 = inlined_call_operand.hbm [shape: f32[2,128,128], index: 2, kind: input, shape index: {}]
  %s3 = inlined_call_operand.hbm [shape: f32[2,1,128], index: 3, kind: input, shape index: {}]
  %s4 = inlined_call_operand.hbm [shape: f32[2,3,384,128], index: 4, kind: input, shape index: {}]
  %s5 = inlined_call_operand.hbm [shape: f32[2,3,1,128], index: 5, kind: input, shape index: {}]
  %s6 = inlined_call_operand.hbm [shape: f32[2,3,128,128], index: 6, kind: input, shape index: {}]
  %s7 = inlined_call_operand.hbm [shape: f32[2,3,1,128], index: 7, kind: input, shape index: {}]
  %s8 = inlined_call_operand.hbm [shape: f32[2,128,128], index: 8, kind: input, shape index: {}]
  %s9 = inlined_call_operand.hbm [shape: f32[2,1,128], index: 9, kind: input, shape index: {}]
  %s10 = inlined_call_operand.hbm [shape: f32[2,2,16,128], index: 10, kind: output, shape index: {}]
  %s11 = sld [smem:[#allocation0]]
  $region109: #{tpu_custom_call.1} parent=0
    _
  %s13 = ssub.s32 1, %s11
  %s14 = scalar_select 0, %s13, %s11
  $region1: #{tpu_custom_call.1} parent=0
    #allocation2 [shape = 'u8[16384]{0}', space=vmem, size = 0x4000, scoped, tag = 'input window, operand 0']
    #allocation3 [shape = 's32[2]{0}', space=sflag, size = 0x8, scoped, tag = 'scoped memory for tpu_custom_call.1']
    #allocation4 [shape = 's32[2]{0}', space=sflag, size = 0x8, scoped, tag = 'scoped memory for tpu_custom_call.1']
    #allocation5 [shape = 'u8[131072]{0}', space=vmem, size = 0x20000, scoped, tag = 'input window, operand 2, single buffered']
    #allocation6 [shape = 's32[1]{0}', space=sflag, size = 0x4, scoped, tag = 'scoped memory for tpu_custom_call.1']
    #allocation7 [shape = 'u8[1024]{0}', space=vmem, size = 0x400, scoped, tag = 'input window, operand 3, single buffered']
    #allocation8 [shape = 'u8[1179648]{0}', space=vmem, size = 0x120000, scoped, tag = 'input window, operand 4, single buffered']
    #allocation9 [shape = 's32[1]{0}', space=sflag, size = 0x4, scoped, tag = 'scoped memory for tpu_custom_call.1']
    #allocation10 [shape = 'u8[3072]{0}', space=vmem, size = 0xc00, scoped, tag = 'input window, operand 5, single buffered']
    #allocation11 [shape = 'u8[393216]{0}', space=vmem, size = 0x60000, scoped, tag = 'input window, operand 6, single buffered']
    #allocation12 [shape = 's32[1]{0}', space=sflag, size = 0x4, scoped, tag = 'scoped memory for tpu_custom_call.1']
    #allocation13 [shape = 'u8[3072]{0}', space=vmem, size = 0xc00, scoped, tag = 'input window, operand 7, single buffered']
    #allocation14 [shape = 'u8[131072]{0}', space=vmem, size = 0x20000, scoped, tag = 'input window, operand 8, single buffered']
    #allocation15 [shape = 's32[1]{0}', space=sflag, size = 0x4, scoped, tag = 'scoped memory for tpu_custom_call.1']
    #allocation16 [shape = 'u8[1024]{0}', space=vmem, size = 0x400, scoped, tag = 'input window, operand 9, single buffered']
    #allocation17 [shape = 'u8[32768]{0}', space=vmem, size = 0x8000, scoped, tag = 'output window, operand 0']
    %15 = vsyncpa [#allocation3], 0
    %s16 = scalar_lea.sflag [#allocation3], 1
    %17 = vsyncpa %s16, 0
    %18 = vsyncpa [#allocation6], 0
    %19 = vsyncpa [#allocation9], 0
    %20 = vsyncpa [#allocation12], 0
    %21 = vsyncpa [#allocation15], 0
    %22 = vsyncpa [#allocation4], 0
    %s23 = scalar_lea.sflag [#allocation4], 1
    %24 = vsyncpa %s23, 0
    loop: start=0, step=1, limit=4
    $region2: #{tpu_custom_call.1} parent=1 // loop_pre_header
      _
    $region3: #{tpu_custom_call.1} parent=1 // loop_header
      %s26 = sphi 0, %s30
      %p27 = scmp.ge.s32.totalorder %s26, 4
      %s36 = sphi 0, %s38
      %s39 = sphi 0, %s36
      %s40 = sphi 0, %s39
      %s56 = sphi 0, %s40
      %s62 = sphi 0, %s64
      %s65 = sphi 0, %s62
      %s66 = sphi 0, %s65
      %s82 = sphi 0, %s66
      %s86 = sphi 0, %s86
      %s88 = sphi 0, %s86
      %s89 = sphi 0, %s88
      %s103 = sphi 0, %s89
      %s107 = sphi 0, %s107
      %s109 = sphi 0, %s107
      %s110 = sphi 0, %s109
      %s124 = sphi 0, %s110
      %s128 = sphi 0, %s128
      %s130 = sphi 0, %s128
      %s131 = sphi 0, %s130
      %s145 = sphi 0, %s131
      %s149 = sphi 0, %s149
      %s151 = sphi 0, %s149
      %s152 = sphi 0, %s151
      %s166 = sphi 0, %s152
      %s170 = sphi 0, %s170
      %s172 = sphi 0, %s170
      %s173 = sphi 0, %s172
      %s187 = sphi 0, %s173
      %s191 = sphi 0, %s191
      %s193 = sphi 0, %s191
      %s194 = sphi 0, %s193
      %s208 = sphi 0, %s194
      %s212 = sphi 0, %s212
      %s214 = sphi 0, %s212
      %s215 = sphi 0, %s214
      %s229 = sphi 0, %s215
      %s233 = sphi 0, %s233
      %s235 = sphi 0, %s233
      %s236 = sphi 0, %s235
      %s250 = sphi 0, %s236
      %s256 = sphi 0, %s258
      %s259 = sphi 0, %s256
      %s260 = sphi 0, %s259
      %s276 = sphi 0, %s260
    $region4: #{tpu_custom_call.1} parent=1 // loop_header_branch
      %29 = sbr.rel (%p27) target = $region8
    $region5: #{tpu_custom_call.1} parent=1 // loop_body
      %s31 = ssub.s32 %s26, 1
      %s32 = ssub.s32 %s26, 2
      %s33 = sadd.s32 %s26, 1
      %s34 = ssub.s32 %s26, %s33
      %p35 = scmp.eq.s32.totalorder %s34, 0
      %s37 = sadd.s32 %s36, 1
      %s38 = scalar_select %p35, %s36, %s37
      %p41 = pneg %p35
      %p42 = scmp.eq.s32.totalorder %s26, 1
      %p43 = por %p41, %p42
      %p44 = scmp.ne.s32.totalorder %s36, %s39
      %p45 = scmp.eq.s32.totalorder %s26, 0
      %p46 = por %p44, %p45
      %p47 = scmp.ne.s32.totalorder %s36, %s39
      %p48 = scmp.eq.s32.totalorder %s31, 1
      %p49 = por %p47, %p48
      %p50 = scmp.ne.s32.totalorder %s39, %s40
      %p51 = scmp.eq.s32.totalorder %s31, 0
      %p52 = por %p50, %p51
      %p53 = scmp.ne.s32.totalorder %s39, %s40
      %p54 = scmp.eq.s32.totalorder %s32, 1
      %p55 = por %p53, %p54
      %p57 = scmp.ne.s32.totalorder %s40, %s56
      %p58 = scmp.eq.s32.totalorder %s32, 0
      %p59 = por %p57, %p58
      %s60 = ssub.s32 %s26, %s33
      %p61 = scmp.eq.s32.totalorder %s60, 0
      %s63 = sadd.s32 %s62, 1
      %s64 = scalar_select %p61, %s62, %s63
      %p67 = pneg %p61
      %p68 = scmp.eq.s32.totalorder %s26, 1
      %p69 = por %p67, %p68
      %p70 = scmp.ne.s32.totalorder %s62, %s65
      %p71 = scmp.eq.s32.totalorder %s26, 0
      %p72 = por %p70, %p71
      %p73 = scmp.ne.s32.totalorder %s62, %s65
      %p74 = scmp.eq.s32.totalorder %s31, 1
      %p75 = por %p73, %p74
      %p76 = scmp.ne.s32.totalorder %s65, %s66
      %p77 = scmp.eq.s32.totalorder %s31, 0
      %p78 = por %p76, %p77
      %p79 = scmp.ne.s32.totalorder %s65, %s66
      %p80 = scmp.eq.s32.totalorder %s32, 1
      %p81 = por %p79, %p80
      %p83 = scmp.ne.s32.totalorder %s66, %s82
      %p84 = scmp.eq.s32.totalorder %s32, 0
      %p85 = por %p83, %p84
      %s87 = sadd.s32 %s86, 1
      %p90 = scmp.eq.s32.totalorder %s26, 1
      %p91 = scmp.ne.s32.totalorder %s86, %s88
      %p92 = scmp.eq.s32.totalorder %s26, 0
      %p93 = por %p91, %p92
      %p94 = scmp.ne.s32.totalorder %s86, %s88
      %p95 = scmp.eq.s32.totalorder %s31, 1
      %p96 = por %p94, %p95
      %p97 = scmp.ne.s32.totalorder %s88, %s89
      %p98 = scmp.eq.s32.totalorder %s31, 0
      %p99 = por %p97, %p98
      %p100 = scmp.ne.s32.totalorder %s88, %s89
      %p101 = scmp.eq.s32.totalorder %s32, 1
      %p102 = por %p100, %p101
      %p104 = scmp.ne.s32.totalorder %s89, %s103
      %p105 = scmp.eq.s32.totalorder %s32, 0
      %p106 = por %p104, %p105
      %s108 = sadd.s32 %s107, 1
      %p111 = scmp.eq.s32.totalorder %s26, 1
      %p112 = scmp.ne.s32.totalorder %s107, %s109
      %p113 = scmp.eq.s32.totalorder %s26, 0
      %p114 = por %p112, %p113
      %p115 = scmp.ne.s32.totalorder %s107, %s109
      %p116 = scmp.eq.s32.totalorder %s31, 1
      %p117 = por %p115, %p116
      %p118 = scmp.ne.s32.totalorder %s109, %s110
      %p119 = scmp.eq.s32.totalorder %s31, 0
      %p120 = por %p118, %p119
      %p121 = scmp.ne.s32.totalorder %s109, %s110
      %p122 = scmp.eq.s32.totalorder %s32, 1
      %p123 = por %p121, %p122
      %p125 = scmp.ne.s32.totalorder %s110, %s124
      %p126 = scmp.eq.s32.totalorder %s32, 0
      %p127 = por %p125, %p126
      %s129 = sadd.s32 %s128, 1
      %p132 = scmp.eq.s32.totalorder %s26, 1
      %p133 = scmp.ne.s32.totalorder %s128, %s130
      %p134 = scmp.eq.s32.totalorder %s26, 0
      %p135 = por %p133, %p134
      %p136 = scmp.ne.s32.totalorder %s128, %s130
      %p137 = scmp.eq.s32.totalorder %s31, 1
      %p138 = por %p136, %p137
      %p139 = scmp.ne.s32.totalorder %s130, %s131
      %p140 = scmp.eq.s32.totalorder %s31, 0
      %p141 = por %p139, %p140
      %p142 = scmp.ne.s32.totalorder %s130, %s131
      %p143 = scmp.eq.s32.totalorder %s32, 1
      %p144 = por %p142, %p143
      %p146 = scmp.ne.s32.totalorder %s131, %s145
      %p147 = scmp.eq.s32.totalorder %s32, 0
      %p148 = por %p146, %p147
      %s150 = sadd.s32 %s149, 1
      %p153 = scmp.eq.s32.totalorder %s26, 1
      %p154 = scmp.ne.s32.totalorder %s149, %s151
      %p155 = scmp.eq.s32.totalorder %s26, 0
      %p156 = por %p154, %p155
      %p157 = scmp.ne.s32.totalorder %s149, %s151
      %p158 = scmp.eq.s32.totalorder %s31, 1
      %p159 = por %p157, %p158
      %p160 = scmp.ne.s32.totalorder %s151, %s152
      %p161 = scmp.eq.s32.totalorder %s31, 0
      %p162 = por %p160, %p161
      %p163 = scmp.ne.s32.totalorder %s151, %s152
      %p164 = scmp.eq.s32.totalorder %s32, 1
      %p165 = por %p163, %p164
      %p167 = scmp.ne.s32.totalorder %s152, %s166
      %p168 = scmp.eq.s32.totalorder %s32, 0
      %p169 = por %p167, %p168
      %s171 = sadd.s32 %s170, 1
      %p174 = scmp.eq.s32.totalorder %s26, 1
      %p175 = scmp.ne.s32.totalorder %s170, %s172
      %p176 = scmp.eq.s32.totalorder %s26, 0
      %p177 = por %p175, %p176
      %p178 = scmp.ne.s32.totalorder %s170, %s172
      %p179 = scmp.eq.s32.totalorder %s31, 1
      %p180 = por %p178, %p179
      %p181 = scmp.ne.s32.totalorder %s172, %s173
      %p182 = scmp.eq.s32.totalorder %s31, 0
      %p183 = por %p181, %p182
      %p184 = scmp.ne.s32.totalorder %s172, %s173
      %p185 = scmp.eq.s32.totalorder %s32, 1
      %p186 = por %p184, %p185
      %p188 = scmp.ne.s32.totalorder %s173, %s187
      %p189 = scmp.eq.s32.totalorder %s32, 0
      %p190 = por %p188, %p189
      %s192 = sadd.s32 %s191, 1
      %p195 = scmp.eq.s32.totalorder %s26, 1
      %p196 = scmp.ne.s32.totalorder %s191, %s193
      %p197 = scmp.eq.s32.totalorder %s26, 0
      %p198 = por %p196, %p197
      %p199 = scmp.ne.s32.totalorder %s191, %s193
      %p200 = scmp.eq.s32.totalorder %s31, 1
      %p201 = por %p199, %p200
      %p202 = scmp.ne.s32.totalorder %s193, %s194
      %p203 = scmp.eq.s32.totalorder %s31, 0
      %p204 = por %p202, %p203
      %p205 = scmp.ne.s32.totalorder %s193, %s194
      %p206 = scmp.eq.s32.totalorder %s32, 1
      %p207 = por %p205, %p206
      %p209 = scmp.ne.s32.totalorder %s194, %s208
      %p210 = scmp.eq.s32.totalorder %s32, 0
      %p211 = por %p209, %p210
      %s213 = sadd.s32 %s212, 1
      %p216 = scmp.eq.s32.totalorder %s26, 1
      %p217 = scmp.ne.s32.totalorder %s212, %s214
      %p218 = scmp.eq.s32.totalorder %s26, 0
      %p219 = por %p217, %p218
      %p220 = scmp.ne.s32.totalorder %s212, %s214
      %p221 = scmp.eq.s32.totalorder %s31, 1
      %p222 = por %p220, %p221
      %p223 = scmp.ne.s32.totalorder %s214, %s215
      %p224 = scmp.eq.s32.totalorder %s31, 0
      %p225 = por %p223, %p224
      %p226 = scmp.ne.s32.totalorder %s214, %s215
      %p227 = scmp.eq.s32.totalorder %s32, 1
      %p228 = por %p226, %p227
      %p230 = scmp.ne.s32.totalorder %s215, %s229
      %p231 = scmp.eq.s32.totalorder %s32, 0
      %p232 = por %p230, %p231
      %s234 = sadd.s32 %s233, 1
      %p237 = scmp.eq.s32.totalorder %s26, 1
      %p238 = scmp.ne.s32.totalorder %s233, %s235
      %p239 = scmp.eq.s32.totalorder %s26, 0
      %p240 = por %p238, %p239
      %p241 = scmp.ne.s32.totalorder %s233, %s235
      %p242 = scmp.eq.s32.totalorder %s31, 1
      %p243 = por %p241, %p242
      %p244 = scmp.ne.s32.totalorder %s235, %s236
      %p245 = scmp.eq.s32.totalorder %s31, 0
      %p246 = por %p244, %p245
      %p247 = scmp.ne.s32.totalorder %s235, %s236
      %p248 = scmp.eq.s32.totalorder %s32, 1
      %p249 = por %p247, %p248
      %p251 = scmp.ne.s32.totalorder %s236, %s250
      %p252 = scmp.eq.s32.totalorder %s32, 0
      %p253 = por %p251, %p252
      %s254 = ssub.s32 %s26, %s33
      %p255 = scmp.eq.s32.totalorder %s254, 0
      %s257 = sadd.s32 %s256, 1
      %s258 = scalar_select %p255, %s256, %s257
      %p261 = pneg %p255
      %p262 = scmp.eq.s32.totalorder %s26, 1
      %p263 = por %p261, %p262
      %p264 = scmp.ne.s32.totalorder %s256, %s259
      %p265 = scmp.eq.s32.totalorder %s26, 0
      %p266 = por %p264, %p265
      %p267 = scmp.ne.s32.totalorder %s256, %s259
      %p268 = scmp.eq.s32.totalorder %s31, 1
      %p269 = por %p267, %p268
      %p270 = scmp.ne.s32.totalorder %s259, %s260
      %p271 = scmp.eq.s32.totalorder %s31, 0
      %p272 = por %p270, %p271
      %p273 = scmp.ne.s32.totalorder %s259, %s260
      %p274 = scmp.eq.s32.totalorder %s32, 1
      %p275 = por %p273, %p274
      %p277 = scmp.ne.s32.totalorder %s260, %s276
      %p278 = scmp.eq.s32.totalorder %s32, 0
      %p279 = por %p277, %p278
      %p280 = scmp.le.s32.totalorder 1, %s26
      %p281 = scmp.lt.s32.totalorder %s26, 3
      %p282 = pnand %p280, %p281
      %p283 = pneg %p282
      // Predicated region
      $region9: #{tpu_custom_call.1} parent=5 // pred_check
        _
      $region10: #{tpu_custom_call.1} parent=5 // pred_check_branch
        %285 = sbr.rel (%p282) target = $region12
      $region11: #{tpu_custom_call.1} parent=5 // pred_region
        %s286 = ssub.s32 %s26, 1
        // Predicated region
        $region13: #{tpu_custom_call.1} parent=11 // pred_check
          %p287 = pneg %p99
        $region14: #{tpu_custom_call.1} parent=11 // pred_check_branch
          %289 = sbr.rel (%p287) target = $region16
        $region15: #{tpu_custom_call.1} parent=11 // pred_region
          %s291 = ssub.s32 4096, 4096
          %292 = vsyncadd [#allocation6], %s291
          %s293 = sshll.u32 [#allocation5], 4
          %s294 = int_to_ptr.vmem [resolvable:$true] %s293
          %299 = dma.hbm_to_vmem [thread:$0]  %s2, 4096, %s294, [#allocation6], 128, 128, 8
        $region16: #{tpu_custom_call.1} parent=11 // pred_fallthru
          _
        // Predicated region
        $region17: #{tpu_custom_call.1} parent=11 // pred_check
          %p300 = pneg %p120
        $region18: #{tpu_custom_call.1} parent=11 // pred_check_branch
          %302 = sbr.rel (%p300) target = $region20
        $region19: #{tpu_custom_call.1} parent=11 // pred_region
          %s304 = ssub.s32 32, 32
          %305 = vsyncadd [#allocation6], %s304
          %s306 = sshll.u32 [#allocation7], 4
          %s307 = int_to_ptr.vmem [resolvable:$true] %s306
          %312 = dma.hbm_to_vmem [thread:$0]  %s3, 32, %s307, [#allocation6], 16, 16, 1
        $region20: #{tpu_custom_call.1} parent=11 // pred_fallthru
          _
        // Predicated region
        $region21: #{tpu_custom_call.1} parent=11 // pred_check
          %p313 = pneg %p141
        $region22: #{tpu_custom_call.1} parent=11 // pred_check_branch
          %315 = sbr.rel (%p313) target = $region24
        $region23: #{tpu_custom_call.1} parent=11 // pred_region
          %s317 = ssub.s32 36864, 36864
          %318 = vsyncadd [#allocation9], %s317
          %s319 = sshll.u32 [#allocation8], 4
          %s320 = int_to_ptr.vmem [resolvable:$true] %s319
          %325 = dma.hbm_to_vmem [thread:$0]  %s4, 36864, %s320, [#allocation9], 128, 128, 8
        $region24: #{tpu_custom_call.1} parent=11 // pred_fallthru
          _
        // Predicated region
        $region25: #{tpu_custom_call.1} parent=11 // pred_check
          %p326 = pneg %p162
        $region26: #{tpu_custom_call.1} parent=11 // pred_check_branch
          %328 = sbr.rel (%p326) target = $region28
        $region27: #{tpu_custom_call.1} parent=11 // pred_region
          %s330 = ssub.s32 96, 96
          %331 = vsyncadd [#allocation9], %s330
          %s332 = sshll.u32 [#allocation10], 4
          %s333 = int_to_ptr.vmem [resolvable:$true] %s332
          %338 = dma.hbm_to_vmem [thread:$0]  %s5, 96, %s333, [#allocation9], 16, 16, 1
        $region28: #{tpu_custom_call.1} parent=11 // pred_fallthru
          _
        // Predicated region
        $region29: #{tpu_custom_call.1} parent=11 // pred_check
          %p339 = pneg %p183
        $region30: #{tpu_custom_call.1} parent=11 // pred_check_branch
          %341 = sbr.rel (%p339) target = $region32
        $region31: #{tpu_custom_call.1} parent=11 // pred_region
          %s343 = ssub.s32 12288, 12288
          %344 = vsyncadd [#allocation12], %s343
          %s345 = sshll.u32 [#allocation11], 4
          %s346 = int_to_ptr.vmem [resolvable:$true] %s345
          %351 = dma.hbm_to_vmem [thread:$0]  %s6, 12288, %s346, [#allocation12], 128, 128, 8
        $region32: #{tpu_custom_call.1} parent=11 // pred_fallthru
          _
        // Predicated region
        $region33: #{tpu_custom_call.1} parent=11 // pred_check
          %p352 = pneg %p204
        $region34: #{tpu_custom_call.1} parent=11 // pred_check_branch
          %354 = sbr.rel (%p352) target = $region36
        $region35: #{tpu_custom_call.1} parent=11 // pred_region
          %s356 = ssub.s32 96, 96
          %357 = vsyncadd [#allocation12], %s356
          %s358 = sshll.u32 [#allocation13], 4
          %s359 = int_to_ptr.vmem [resolvable:$true] %s358
          %364 = dma.hbm_to_vmem [thread:$0]  %s7, 96, %s359, [#allocation12], 16, 16, 1
        $region36: #{tpu_custom_call.1} parent=11 // pred_fallthru
          _
        // Predicated region
        $region37: #{tpu_custom_call.1} parent=11 // pred_check
          %p365 = pneg %p225
        $region38: #{tpu_custom_call.1} parent=11 // pred_check_branch
          %367 = sbr.rel (%p365) target = $region40
        $region39: #{tpu_custom_call.1} parent=11 // pred_region
          %s369 = ssub.s32 4096, 4096
          %370 = vsyncadd [#allocation15], %s369
          %s371 = sshll.u32 [#allocation14], 4
          %s372 = int_to_ptr.vmem [resolvable:$true] %s371
          %377 = dma.hbm_to_vmem [thread:$0]  %s8, 4096, %s372, [#allocation15], 128, 128, 8
        $region40: #{tpu_custom_call.1} parent=11 // pred_fallthru
          _
        // Predicated region
        $region41: #{tpu_custom_call.1} parent=11 // pred_check
          %p378 = pneg %p246
        $region42: #{tpu_custom_call.1} parent=11 // pred_check_branch
          %380 = sbr.rel (%p378) target = $region44
        $region43: #{tpu_custom_call.1} parent=11 // pred_region
          %s382 = ssub.s32 32, 32
          %383 = vsyncadd [#allocation15], %s382
          %s384 = sshll.u32 [#allocation16], 4
          %s385 = int_to_ptr.vmem [resolvable:$true] %s384
          %390 = dma.hbm_to_vmem [thread:$0]  %s9, 32, %s385, [#allocation15], 16, 16, 1
        $region44: #{tpu_custom_call.1} parent=11 // pred_fallthru
          _
      $region12: #{tpu_custom_call.1} parent=5 // pred_fallthru
        _
      %p391 = scmp.lt.s32.totalorder %s26, 2
      // Predicated region
      $region45: #{tpu_custom_call.1} parent=5 // pred_check
        %p392 = pneg %p391
      $region46: #{tpu_custom_call.1} parent=5 // pred_check_branch
        %394 = sbr.rel (%p392) target = $region48
      $region47: #{tpu_custom_call.1} parent=5 // pred_region
        // Predicated region
        $region49: #{tpu_custom_call.1} parent=47 // pred_check
          %p395 = pneg %p46
        $region50: #{tpu_custom_call.1} parent=47 // pred_check_branch
          %397 = sbr.rel (%p395) target = $region52
        $region51: #{tpu_custom_call.1} parent=47 // pred_region
          %s398 = sand.u32 %s36, 1
          %s399 = scalar_lea.sflag [#allocation3], %s398
          %s400 = sand.u32 %s36, 1
          %s401 = smul.addr %s400, 16
          %s402 = scalar_lea.vmem [#allocation2], %s401
          %s404 = ssub.s32 256, 256
          %405 = vsyncadd %s399, %s404
          %s406 = smul.addr %s26, 2
          %s407 = smul.addr %s406, 128
          %s408 = scalar_lea.hbm %s0, %s407
          %s409 = sshll.u32 %s402, 4
          %s410 = int_to_ptr.vmem [resolvable:$true] %s409
          %415 = dma.hbm_to_vmem [thread:$0]  %s408, 256, %s410, %s399, 128, 128, 8
        $region52: #{tpu_custom_call.1} parent=47 // pred_fallthru
          _
        // Predicated region
        $region53: #{tpu_custom_call.1} parent=47 // pred_check
          %p416 = pneg %p72
        $region54: #{tpu_custom_call.1} parent=47 // pred_check_branch
          %418 = sbr.rel (%p416) target = $region56
        $region55: #{tpu_custom_call.1} parent=47 // pred_region
          %p419 = scmp.lt.s32.totalorder %s26, 1
          %s420 = scalar_select %p419, %s26, 1
          %s421 = smul.addr %s420, 2
          %s422 = smul.addr %s421, 8
          %s423 = scalar_lea.vmem %s1, %s422
        $region56: #{tpu_custom_call.1} parent=47 // pred_fallthru
          _
      $region48: #{tpu_custom_call.1} parent=5 // pred_fallthru
        _
      %p424 = scmp.le.s32.totalorder 1, %s26
      %p425 = scmp.lt.s32.totalorder %s26, 3
      %p426 = pnand %p424, %p425
      %p427 = pneg %p426
      // Predicated region
      $region57: #{tpu_custom_call.1} parent=5 // pred_check
        _
      $region58: #{tpu_custom_call.1} parent=5 // pred_check_branch
        %429 = sbr.rel (%p426) target = $region60
      $region59: #{tpu_custom_call.1} parent=5 // pred_region
        %s430 = ssub.s32 %s26, 1
        %s431 = sand.u32 %s39, 1
        %s432 = scalar_lea.sflag [#allocation3], %s431
        %s433 = sand.u32 %s39, 1
        %s434 = smul.addr %s433, 16
        %s435 = scalar_lea.vmem [#allocation2], %s434
        // Predicated region
        $region61: #{tpu_custom_call.1} parent=59 // pred_check
          %p436 = pneg %p52
        $region62: #{tpu_custom_call.1} parent=59 // pred_check_branch
          %438 = sbr.rel (%p436) target = $region64
        $region63: #{tpu_custom_call.1} parent=59 // pred_region
          %439 = dma.done %s432, 256
        $region64: #{tpu_custom_call.1} parent=59 // pred_fallthru
          _
        // Predicated region
        $region65: #{tpu_custom_call.1} parent=59 // pred_check
          %p440 = pneg %p99
        $region66: #{tpu_custom_call.1} parent=59 // pred_check_branch
          %442 = sbr.rel (%p440) target = $region68
        $region67: #{tpu_custom_call.1} parent=59 // pred_region
          %443 = dma.done [#allocation6], 4096
        $region68: #{tpu_custom_call.1} parent=59 // pred_fallthru
          _
        // Predicated region
        $region69: #{tpu_custom_call.1} parent=59 // pred_check
          %p444 = pneg %p120
        $region70: #{tpu_custom_call.1} parent=59 // pred_check_branch
          %446 = sbr.rel (%p444) target = $region72
        $region71: #{tpu_custom_call.1} parent=59 // pred_region
          %447 = dma.done [#allocation6], 32
        $region72: #{tpu_custom_call.1} parent=59 // pred_fallthru
          _
        // Predicated region
        $region73: #{tpu_custom_call.1} parent=59 // pred_check
          %p448 = pneg %p141
        $region74: #{tpu_custom_call.1} parent=59 // pred_check_branch
          %450 = sbr.rel (%p448) target = $region76
        $region75: #{tpu_custom_call.1} parent=59 // pred_region
          %451 = dma.done [#allocation9], 36864
        $region76: #{tpu_custom_call.1} parent=59 // pred_fallthru
          _
        // Predicated region
        $region77: #{tpu_custom_call.1} parent=59 // pred_check
          %p452 = pneg %p162
        $region78: #{tpu_custom_call.1} parent=59 // pred_check_branch
          %454 = sbr.rel (%p452) target = $region80
        $region79: #{tpu_custom_call.1} parent=59 // pred_region
          %455 = dma.done [#allocation9], 96
        $region80: #{tpu_custom_call.1} parent=59 // pred_fallthru
          _
        // Predicated region
        $region81: #{tpu_custom_call.1} parent=59 // pred_check
          %p456 = pneg %p183
        $region82: #{tpu_custom_call.1} parent=59 // pred_check_branch
          %458 = sbr.rel (%p456) target = $region84
        $region83: #{tpu_custom_call.1} parent=59 // pred_region
          %459 = dma.done [#allocation12], 12288
        $region84: #{tpu_custom_call.1} parent=59 // pred_fallthru
          _
        // Predicated region
        $region85: #{tpu_custom_call.1} parent=59 // pred_check
          %p460 = pneg %p204
        $region86: #{tpu_custom_call.1} parent=59 // pred_check_branch
          %462 = sbr.rel (%p460) target = $region88
        $region87: #{tpu_custom_call.1} parent=59 // pred_region
          %463 = dma.done [#allocation12], 96
        $region88: #{tpu_custom_call.1} parent=59 // pred_fallthru
          _
        // Predicated region
        $region89: #{tpu_custom_call.1} parent=59 // pred_check
          %p464 = pneg %p225
        $region90: #{tpu_custom_call.1} parent=59 // pred_check_branch
          %466 = sbr.rel (%p464) target = $region92
        $region91: #{tpu_custom_call.1} parent=59 // pred_region
          %467 = dma.done [#allocation15], 4096
        $region92: #{tpu_custom_call.1} parent=59 // pred_fallthru
          _
        // Predicated region
        $region93: #{tpu_custom_call.1} parent=59 // pred_check
          %p468 = pneg %p246
        $region94: #{tpu_custom_call.1} parent=59 // pred_check_branch
          %470 = sbr.rel (%p468) target = $region96
        $region95: #{tpu_custom_call.1} parent=59 // pred_region
          %471 = dma.done [#allocation15], 32
        $region96: #{tpu_custom_call.1} parent=59 // pred_fallthru
          _
        %s472 = sand.u32 %s39, 1
        %s473 = scalar_lea.sflag [#allocation3], %s472
        %s474 = sand.u32 %s39, 1
        %s475 = smul.addr %s474, 16
        %s476 = scalar_lea.vmem [#allocation2], %s475
        %p477 = pneg %p52
        %p478 = pneg %p49
        %p479 = scmp.lt.s32.totalorder %s31, 1
        %s480 = scalar_select %p479, %s31, 1
        %s481 = smul.addr %s480, 2
        %s482 = smul.addr %s481, 8
        %s483 = scalar_lea.vmem %s1, %s482
        %p484 = pneg %p78
        %p485 = pneg %p75
        %p486 = pneg %p99
        %p487 = pneg %p96
        %p488 = pneg %p120
        %p489 = pneg %p117
        %p490 = pneg %p141
        %p491 = pneg %p138
        %p492 = pneg %p162
        %p493 = pneg %p159
        %p494 = pneg %p183
        %p495 = pneg %p180
        %p496 = pneg %p204
        %p497 = pneg %p201
        %p498 = pneg %p225
        %p499 = pneg %p222
        %p500 = pneg %p246
        %p501 = pneg %p243
        %p502 = pneg %p272
        %p503 = pneg %p269
        %s504 = sand.u32 %s259, 1
        %s505 = scalar_lea.sflag [#allocation4], %s504
        %s506 = sand.u32 %s259, 1
        %s507 = smul.addr %s506, 32
        %s508 = scalar_lea.vmem [#allocation17], %s507
        %p509 = scmp.lt.s32.totalorder %s31, 1
        %s510 = scalar_select %p509, %s31, 1
        %s511 = smul.addr %s510, 2
        %s512 = smul.addr %s511, 8
        %s513 = scalar_lea.vmem %s1, %s512
        %v514 = vld [vmem:[%s435] sm:$0xff]
        %v515 = vld [vmem:[%s435 + $0x8] sm:$0xff]
        %v516 = vld [vmem:[%s513] sm:$0xff]
        %v517 = vld [vmem:[%s513 + $0x8] sm:$0xff]
        %v518 = vlaneseq
        %v519 = vshrl.u32 %v518, 7
        %v520 = vadd.s32 %v519, 8
        %v521 = vlaneseq
        %v522 = vand.u32 %v521, 127
        %vm523 = vcmp.lt.s32.totalorder %v522, 6
        %v524 = vld [vmem:[#allocation5] sm:$0xff]
        %v525 = vld [vmem:[#allocation5 + $0x8] sm:$0xff]
        %v526 = vld [vmem:[#allocation5 + $0x10] sm:$0xff]
        %v527 = vld [vmem:[#allocation5 + $0x18] sm:$0xff]
        %v528 = vld [vmem:[#allocation5 + $0x20] sm:$0xff]
        %v529 = vld [vmem:[#allocation5 + $0x28] sm:$0xff]
        %v530 = vld [vmem:[#allocation5 + $0x30] sm:$0xff]
        %v531 = vld [vmem:[#allocation5 + $0x38] sm:$0xff]
        %v532 = vld [vmem:[#allocation5 + $0x40] sm:$0xff]
        %v533 = vld [vmem:[#allocation5 + $0x48] sm:$0xff]
        %v534 = vld [vmem:[#allocation5 + $0x50] sm:$0xff]
        %v535 = vld [vmem:[#allocation5 + $0x58] sm:$0xff]
        %v536 = vld [vmem:[#allocation5 + $0x60] sm:$0xff]
        %v537 = vld [vmem:[#allocation5 + $0x68] sm:$0xff]
        %v538 = vld [vmem:[#allocation5 + $0x70] sm:$0xff]
        %v539 = vld [vmem:[#allocation5 + $0x78] sm:$0xff]
        %v540 = vld [vmem:[#allocation7] sm:$0x1]
        %v542 = vlaneseq
        %v543 = vshrl.u32 %v542, 7
        %v544 = vsub.s32 0, %v543
        %v545 = vrot.slane %v540, %v544
        %547 = vmatprep.subr.mxu0 0.0
        %548 = vmatpush1.msra.mxu0 %v524
        %549 = vmatprep.subr.mxu0 0.0
        %550 = vmatpush1.msra.mxu0 %v525
        %551 = vmatprep.subr.mxu0 0.0
        %552 = vmatpush1.msra.mxu0 %v526
        %553 = vmatprep.subr.mxu0 0.0
        %554 = vmatpush1.msra.mxu0 %v527
        %555 = vmatprep.subr.mxu0 0.0
        %556 = vmatpush1.msra.mxu0 %v528
        %557 = vmatprep.subr.mxu0 0.0
        %558 = vmatpush1.msra.mxu0 %v529
        %559 = vmatprep.subr.mxu0 0.0
        %560 = vmatpush1.msra.mxu0 %v530
        %561 = vmatprep.subr.mxu0 0.0
        %562 = vmatpush1.msra.mxu0 %v531
        %563 = vmatprep.subr.mxu0 0.0
        %564 = vmatpush1.msra.mxu0 %v532
        %565 = vmatprep.subr.mxu0 0.0
        %566 = vmatpush1.msra.mxu0 %v533
        %567 = vmatprep.subr.mxu0 0.0
        %568 = vmatpush1.msra.mxu0 %v534
        %569 = vmatprep.subr.mxu0 0.0
        %570 = vmatpush1.msra.mxu0 %v535
        %571 = vmatprep.subr.mxu0 0.0
        %572 = vmatpush1.msra.mxu0 %v536
        %573 = vmatprep.subr.mxu0 0.0
        %574 = vmatpush1.msra.mxu0 %v537
        %575 = vmatprep.subr.mxu0 0.0
        %576 = vmatpush1.msra.mxu0 %v538
        %577 = vmatprep.subr.mxu0 0.0
        %578 = vmatpush1.msra.mxu0 %v539
        %579 = vmatprep.subr.mxu0 0.0
        %580 = vmatpush1.msra.mxu0 0.0
        %581 = vmatprep.subr.mxu0 0.0
        %582 = vmatpush1.msra.mxu0 0.0
        %583 = vmatprep.subr.mxu0 0.0
        %584 = vmatpush1.msra.mxu0 0.0
        %585 = vmatprep.subr.mxu0 0.0
        %586 = vmatpush1.msra.mxu0 0.0
        %587 = vmatprep.subr.mxu0 0.0
        %588 = vmatpush1.msra.mxu0 0.0
        %589 = vmatprep.subr.mxu0 0.0
        %590 = vmatpush1.msra.mxu0 0.0
        %591 = vmatprep.subr.mxu0 0.0
        %592 = vmatpush1.msra.mxu0 0.0
        %593 = vmatprep.subr.mxu0 0.0
        %594 = vmatpush1.msra.mxu0 0.0
        %595 = vmatprep.subr.mxu0 0.0
        %596 = vmatpush1.msra.mxu0 0.0
        %597 = vmatprep.subr.mxu0 0.0
        %598 = vmatpush1.msra.mxu0 0.0
        %599 = vmatprep.subr.mxu0 0.0
        %600 = vmatpush1.msra.mxu0 0.0
        %601 = vmatprep.subr.mxu0 0.0
        %602 = vmatpush1.msra.mxu0 0.0
        %603 = vmatprep.subr.mxu0 0.0
        %604 = vmatpush1.msra.mxu0 0.0
        %605 = vmatprep.subr.mxu0 0.0
        %606 = vmatpush1.msra.mxu0 0.0
        %607 = vmatprep.subr.mxu0 0.0
        %608 = vmatpush1.msra.mxu0 0.0
        %609 = vmatprep.subr.mxu0 0.0
        %610 = vmatpush1.msra.mxu0 0.0
        %611 = vmatprep.mubr.f32.mxu0 0.0
        %612 = vmatmul.mubr.f32.gmra.mrb[0].mxu0 %v514
        %v613 = vpop.f32.mrb[0].mxu0
        %v614 = vadd.f32 %v545, %v613
        %v615 = vpop.f32.mrb[0].mxu0
        %616 = vmatprep.mubr.f32.mxu0 0.0
        %617 = vmatmul.mubr.f32.gmra.mrb[0].mxu0 %v515
        %v618 = vpop.f32.mrb[0].mxu0
        %v619 = vadd.f32 %v545, %v618
        %v620 = vpop.f32.mrb[0].mxu0
        %621 = vdwg.mxu0
        %v622 = vrot.slane %v614, 7
        %v623 = vrot.slane %v619, 7
        %vm624 = vcmp.lt.s32.totalorder %v519, 1
        %v625 = vsel %vm624, %v622, %v623
        %v626 = vsel %vm624, %v623, %v622
        %vm627 = vcmp.ge.s32.totalorder %v519, 1
        %vm628 = vcmp.ge.s32.totalorder %v520, 1
        %v629 = vsel %vm627, 1, 0
        %v630 = vsel %vm628, 1, 0
        %vm631 = vcmp.eq.s32.totalorder %v629, 1
        %vm632 = vcmp.eq.s32.totalorder %v630, 1
        %v633 = vsel %vm631, %v626, 0.0
        %v634 = vsel %vm632, %v625, 0.0
        %v635 = vrot.slane %v614, 1
        %v636 = vrot.slane %v619, 1
        %vm637 = vcmp.lt.s32.totalorder %v519, 7
        %v638 = vsel %vm637, %v635, %v636
        %v639 = vsel %vm637, %v636, %v635
        %vm640 = vcmp.lt.s32.totalorder %v519, 15
        %vm641 = vcmp.lt.s32.totalorder %v520, 15
        %v642 = vsel %vm640, 1, 0
        %v643 = vsel %vm641, 1, 0
        %vm644 = vcmp.eq.s32.totalorder %v642, 1
        %vm645 = vcmp.eq.s32.totalorder %v643, 1
        %v646 = vsel %vm644, %v638, 0.0
        %v647 = vsel %vm645, %v639, 0.0
        %v648 = vld [vmem:[#allocation8] sm:$0xff]
        %v649 = vld [vmem:[#allocation8 + $0x8] sm:$0xff]
        %v650 = vld [vmem:[#allocation8 + $0x10] sm:$0xff]
        %v651 = vld [vmem:[#allocation8 + $0x18] sm:$0xff]
        %v652 = vld [vmem:[#allocation8 + $0x20] sm:$0xff]
        %v653 = vld [vmem:[#allocation8 + $0x28] sm:$0xff]
        %v654 = vld [vmem:[#allocation8 + $0x30] sm:$0xff]
        %v655 = vld [vmem:[#allocation8 + $0x38] sm:$0xff]
        %v656 = vld [vmem:[#allocation8 + $0x40] sm:$0xff]
        %v657 = vld [vmem:[#allocation8 + $0x48] sm:$0xff]
        %v658 = vld [vmem:[#allocation8 + $0x50] sm:$0xff]
        %v659 = vld [vmem:[#allocation8 + $0x58] sm:$0xff]
        %v660 = vld [vmem:[#allocation8 + $0x60] sm:$0xff]
        %v661 = vld [vmem:[#allocation8 + $0x68] sm:$0xff]
        %v662 = vld [vmem:[#allocation8 + $0x70] sm:$0xff]
        %v663 = vld [vmem:[#allocation8 + $0x78] sm:$0xff]
        %v664 = vld [vmem:[#allocation8 + $0x80] sm:$0xff]
        %v665 = vld [vmem:[#allocation8 + $0x88] sm:$0xff]
        %v666 = vld [vmem:[#allocation8 + $0x90] sm:$0xff]
        %v667 = vld [vmem:[#allocation8 + $0x98] sm:$0xff]
        %v668 = vld [vmem:[#allocation8 + $0xa0] sm:$0xff]
        %v669 = vld [vmem:[#allocation8 + $0xa8] sm:$0xff]
        %v670 = vld [vmem:[#allocation8 + $0xb0] sm:$0xff]
        %v671 = vld [vmem:[#allocation8 + $0xb8] sm:$0xff]
        %v672 = vld [vmem:[#allocation8 + $0xc0] sm:$0xff]
        %v673 = vld [vmem:[#allocation8 + $0xc8] sm:$0xff]
        %v674 = vld [vmem:[#allocation8 + $0xd0] sm:$0xff]
        %v675 = vld [vmem:[#allocation8 + $0xd8] sm:$0xff]
        %v676 = vld [vmem:[#allocation8 + $0xe0] sm:$0xff]
        %v677 = vld [vmem:[#allocation8 + $0xe8] sm:$0xff]
        %v678 = vld [vmem:[#allocation8 + $0xf0] sm:$0xff]
        %v679 = vld [vmem:[#allocation8 + $0xf8] sm:$0xff]
        %v680 = vld [vmem:[#allocation8 + $0x100] sm:$0xff]
        %v681 = vld [vmem:[#allocation8 + $0x108] sm:$0xff]
        %v682 = vld [vmem:[#allocation8 + $0x110] sm:$0xff]
        %v683 = vld [vmem:[#allocation8 + $0x118] sm:$0xff]
        %v684 = vld [vmem:[#allocation8 + $0x120] sm:$0xff]
        %v685 = vld [vmem:[#allocation8 + $0x128] sm:$0xff]
        %v686 = vld [vmem:[#allocation8 + $0x130] sm:$0xff]
        %v687 = vld [vmem:[#allocation8 + $0x138] sm:$0xff]
        %v688 = vld [vmem:[#allocation8 + $0x140] sm:$0xff]
        %v689 = vld [vmem:[#allocation8 + $0x148] sm:$0xff]
        %v690 = vld [vmem:[#allocation8 + $0x150] sm:$0xff]
        %v691 = vld [vmem:[#allocation8 + $0x158] sm:$0xff]
        %v692 = vld [vmem:[#allocation8 + $0x160] sm:$0xff]
        %v693 = vld [vmem:[#allocation8 + $0x168] sm:$0xff]
        %v694 = vld [vmem:[#allocation8 + $0x170] sm:$0xff]
        %v695 = vld [vmem:[#allocation8 + $0x178] sm:$0xff]
        %v696 = vld [vmem:[#allocation10] sm:$0x1]
        %v698 = vlaneseq
        %v699 = vshrl.u32 %v698, 7
        %v700 = vsub.s32 0, %v699
        %v701 = vrot.slane %v696, %v700
        %703 = vmatprep.subr.mxu0 0.0
        %704 = vmatpush1.msra.mxu0 %v648
        %705 = vmatprep.subr.mxu0 0.0
        %706 = vmatpush1.msra.mxu0 %v649
        %707 = vmatprep.subr.mxu0 0.0
        %708 = vmatpush1.msra.mxu0 %v650
        %709 = vmatprep.subr.mxu0 0.0
        %710 = vmatpush1.msra.mxu0 %v651
        %711 = vmatprep.subr.mxu0 0.0
        %712 = vmatpush1.msra.mxu0 %v652
        %713 = vmatprep.subr.mxu0 0.0
        %714 = vmatpush1.msra.mxu0 %v653
        %715 = vmatprep.subr.mxu0 0.0
        %716 = vmatpush1.msra.mxu0 %v654
        %717 = vmatprep.subr.mxu0 0.0
        %718 = vmatpush1.msra.mxu0 %v655
        %719 = vmatprep.subr.mxu0 0.0
        %720 = vmatpush1.msra.mxu0 %v656
        %721 = vmatprep.subr.mxu0 0.0
        %722 = vmatpush1.msra.mxu0 %v657
        %723 = vmatprep.subr.mxu0 0.0
        %724 = vmatpush1.msra.mxu0 %v658
        %725 = vmatprep.subr.mxu0 0.0
        %726 = vmatpush1.msra.mxu0 %v659
        %727 = vmatprep.subr.mxu0 0.0
        %728 = vmatpush1.msra.mxu0 %v660
        %729 = vmatprep.subr.mxu0 0.0
        %730 = vmatpush1.msra.mxu0 %v661
        %731 = vmatprep.subr.mxu0 0.0
        %732 = vmatpush1.msra.mxu0 %v662
        %733 = vmatprep.subr.mxu0 0.0
        %734 = vmatpush1.msra.mxu0 %v663
        %735 = vmatprep.subr.mxu0 0.0
        %736 = vmatpush1.msra.mxu0 %v664
        %737 = vmatprep.subr.mxu0 0.0
        %738 = vmatpush1.msra.mxu0 %v665
        %739 = vmatprep.subr.mxu0 0.0
        %740 = vmatpush1.msra.mxu0 %v666
        %741 = vmatprep.subr.mxu0 0.0
        %742 = vmatpush1.msra.mxu0 %v667
        %743 = vmatprep.subr.mxu0 0.0
        %744 = vmatpush1.msra.mxu0 %v668
        %745 = vmatprep.subr.mxu0 0.0
        %746 = vmatpush1.msra.mxu0 %v669
        %747 = vmatprep.subr.mxu0 0.0
        %748 = vmatpush1.msra.mxu0 %v670
        %749 = vmatprep.subr.mxu0 0.0
        %750 = vmatpush1.msra.mxu0 %v671
        %751 = vmatprep.subr.mxu0 0.0
        %752 = vmatpush1.msra.mxu0 %v672
        %753 = vmatprep.subr.mxu0 0.0
        %754 = vmatpush1.msra.mxu0 %v673
        %755 = vmatprep.subr.mxu0 0.0
        %756 = vmatpush1.msra.mxu0 %v674
        %757 = vmatprep.subr.mxu0 0.0
        %758 = vmatpush1.msra.mxu0 %v675
        %759 = vmatprep.subr.mxu0 0.0
        %760 = vmatpush1.msra.mxu0 %v676
        %761 = vmatprep.subr.mxu0 0.0
        %762 = vmatpush1.msra.mxu0 %v677
        %763 = vmatprep.subr.mxu0 0.0
        %764 = vmatpush1.msra.mxu0 %v678
        %765 = vmatprep.subr.mxu0 0.0
        %766 = vmatpush1.msra.mxu0 %v679
        %767 = vmatprep.mubr.f32.mxu0 %v614
        %768 = vmatmul.mubr.f32.gmra.mrb[0].mxu0 %v633
        %v769 = vpop.f32.mrb[0].mxu0
        %v770 = vadd.f32 %v701, %v769
        %v771 = vpop.f32.mrb[0].mxu0
        %772 = vmatprep.mubr.f32.mxu0 %v619
        %773 = vmatmul.mubr.f32.gmra.mrb[0].mxu0 %v634
        %v774 = vpop.f32.mrb[0].mxu0
        %v775 = vadd.f32 %v701, %v774
        %v776 = vpop.f32.mrb[0].mxu0
        %777 = vdwg.mxu0
        %778 = vmatprep.subr.mxu0 0.0
        %779 = vmatpush1.msra.mxu0 %v680
        %780 = vmatprep.subr.mxu0 0.0
        %781 = vmatpush1.msra.mxu0 %v681
        %782 = vmatprep.subr.mxu0 0.0
        %783 = vmatpush1.msra.mxu0 %v682
        %784 = vmatprep.subr.mxu0 0.0
        %785 = vmatpush1.msra.mxu0 %v683
        %786 = vmatprep.subr.mxu0 0.0
        %787 = vmatpush1.msra.mxu0 %v684
        %788 = vmatprep.subr.mxu0 0.0
        %789 = vmatpush1.msra.mxu0 %v685
        %790 = vmatprep.subr.mxu0 0.0
        %791 = vmatpush1.msra.mxu0 %v686
        %792 = vmatprep.subr.mxu0 0.0
        %793 = vmatpush1.msra.mxu0 %v687
        %794 = vmatprep.subr.mxu0 0.0
        %795 = vmatpush1.msra.mxu0 %v688
        %796 = vmatprep.subr.mxu0 0.0
        %797 = vmatpush1.msra.mxu0 %v689
        %798 = vmatprep.subr.mxu0 0.0
        %799 = vmatpush1.msra.mxu0 %v690
        %800 = vmatprep.subr.mxu0 0.0
        %801 = vmatpush1.msra.mxu0 %v691
        %802 = vmatprep.subr.mxu0 0.0
        %803 = vmatpush1.msra.mxu0 %v692
        %804 = vmatprep.subr.mxu0 0.0
        %805 = vmatpush1.msra.mxu0 %v693
        %806 = vmatprep.subr.mxu0 0.0
        %807 = vmatpush1.msra.mxu0 %v694
        %808 = vmatprep.subr.mxu0 0.0
        %809 = vmatpush1.msra.mxu0 %v695
        %810 = vmatprep.subr.mxu0 0.0
        %811 = vmatpush1.msra.mxu0 0.0
        %812 = vmatprep.subr.mxu0 0.0
        %813 = vmatpush1.msra.mxu0 0.0
        %814 = vmatprep.subr.mxu0 0.0
        %815 = vmatpush1.msra.mxu0 0.0
        %816 = vmatprep.subr.mxu0 0.0
        %817 = vmatpush1.msra.mxu0 0.0
        %818 = vmatprep.subr.mxu0 0.0
        %819 = vmatpush1.msra.mxu0 0.0
        %820 = vmatprep.subr.mxu0 0.0
        %821 = vmatpush1.msra.mxu0 0.0
        %822 = vmatprep.subr.mxu0 0.0
        %823 = vmatpush1.msra.mxu0 0.0
        %824 = vmatprep.subr.mxu0 0.0
        %825 = vmatpush1.msra.mxu0 0.0
        %826 = vmatprep.subr.mxu0 0.0
        %827 = vmatpush1.msra.mxu0 0.0
        %828 = vmatprep.subr.mxu0 0.0
        %829 = vmatpush1.msra.mxu0 0.0
        %830 = vmatprep.subr.mxu0 0.0
        %831 = vmatpush1.msra.mxu0 0.0
        %832 = vmatprep.subr.mxu0 0.0
        %833 = vmatpush1.msra.mxu0 0.0
        %834 = vmatprep.subr.mxu0 0.0
        %835 = vmatpush1.msra.mxu0 0.0
        %836 = vmatprep.subr.mxu0 0.0
        %837 = vmatpush1.msra.mxu0 0.0
        %838 = vmatprep.subr.mxu0 0.0
        %839 = vmatpush1.msra.mxu0 0.0
        %840 = vmatprep.subr.mxu0 0.0
        %841 = vmatpush1.msra.mxu0 0.0
        %842 = vmatprep.mubr.f32.mxu0 0.0
        %843 = vmatmul.mubr.f32.gmra.mrb[0].mxu0 %v646
        %v844 = vpop.f32.mrb[0].mxu0
        %v845 = vadd.f32 %v770, %v844
        %v846 = vpop.f32.mrb[0].mxu0
        %847 = vmatprep.mubr.f32.mxu0 0.0
        %848 = vmatmul.mubr.f32.gmra.mrb[0].mxu0 %v647
        %v849 = vpop.f32.mrb[0].mxu0
        %v850 = vadd.f32 %v775, %v849
        %v851 = vpop.f32.mrb[0].mxu0
        %852 = vdwg.mxu0
        %v853 = vmax.f32 %v845, 0.0
        %v854 = vmax.f32 %v850, 0.0
        %v855 = vld [vmem:[#allocation11] sm:$0xff]
        %v856 = vld [vmem:[#allocation11 + $0x8] sm:$0xff]
        %v857 = vld [vmem:[#allocation11 + $0x10] sm:$0xff]
        %v858 = vld [vmem:[#allocation11 + $0x18] sm:$0xff]
        %v859 = vld [vmem:[#allocation11 + $0x20] sm:$0xff]
        %v860 = vld [vmem:[#allocation11 + $0x28] sm:$0xff]
        %v861 = vld [vmem:[#allocation11 + $0x30] sm:$0xff]
        %v862 = vld [vmem:[#allocation11 + $0x38] sm:$0xff]
        %v863 = vld [vmem:[#allocation11 + $0x40] sm:$0xff]
        %v864 = vld [vmem:[#allocation11 + $0x48] sm:$0xff]
        %v865 = vld [vmem:[#allocation11 + $0x50] sm:$0xff]
        %v866 = vld [vmem:[#allocation11 + $0x58] sm:$0xff]
        %v867 = vld [vmem:[#allocation11 + $0x60] sm:$0xff]
        %v868 = vld [vmem:[#allocation11 + $0x68] sm:$0xff]
        %v869 = vld [vmem:[#allocation11 + $0x70] sm:$0xff]
        %v870 = vld [vmem:[#allocation11 + $0x78] sm:$0xff]
        %v871 = vld [vmem:[#allocation13] sm:$0x1]
        %v873 = vlaneseq
        %v874 = vshrl.u32 %v873, 7
        %v875 = vsub.s32 0, %v874
        %v876 = vrot.slane %v871, %v875
        %878 = vmatprep.subr.mxu0 0.0
        %879 = vmatpush1.msra.mxu0 %v855
        %880 = vmatprep.subr.mxu0 0.0
        %881 = vmatpush1.msra.mxu0 %v856
        %882 = vmatprep.subr.mxu0 0.0
        %883 = vmatpush1.msra.mxu0 %v857
        %884 = vmatprep.subr.mxu0 0.0
        %885 = vmatpush1.msra.mxu0 %v858
        %886 = vmatprep.subr.mxu0 0.0
        %887 = vmatpush1.msra.mxu0 %v859
        %888 = vmatprep.subr.mxu0 0.0
        %889 = vmatpush1.msra.mxu0 %v860
        %890 = vmatprep.subr.mxu0 0.0
        %891 = vmatpush1.msra.mxu0 %v861
        %892 = vmatprep.subr.mxu0 0.0
        %893 = vmatpush1.msra.mxu0 %v862
        %894 = vmatprep.subr.mxu0 0.0
        %895 = vmatpush1.msra.mxu0 %v863
        %896 = vmatprep.subr.mxu0 0.0
        %897 = vmatpush1.msra.mxu0 %v864
        %898 = vmatprep.subr.mxu0 0.0
        %899 = vmatpush1.msra.mxu0 %v865
        %900 = vmatprep.subr.mxu0 0.0
        %901 = vmatpush1.msra.mxu0 %v866
        %902 = vmatprep.subr.mxu0 0.0
        %903 = vmatpush1.msra.mxu0 %v867
        %904 = vmatprep.subr.mxu0 0.0
        %905 = vmatpush1.msra.mxu0 %v868
        %906 = vmatprep.subr.mxu0 0.0
        %907 = vmatpush1.msra.mxu0 %v869
        %908 = vmatprep.subr.mxu0 0.0
        %909 = vmatpush1.msra.mxu0 %v870
        %910 = vmatprep.subr.mxu0 0.0
        %911 = vmatpush1.msra.mxu0 0.0
        %912 = vmatprep.subr.mxu0 0.0
        %913 = vmatpush1.msra.mxu0 0.0
        %914 = vmatprep.subr.mxu0 0.0
        %915 = vmatpush1.msra.mxu0 0.0
        %916 = vmatprep.subr.mxu0 0.0
        %917 = vmatpush1.msra.mxu0 0.0
        %918 = vmatprep.subr.mxu0 0.0
        %919 = vmatpush1.msra.mxu0 0.0
        %920 = vmatprep.subr.mxu0 0.0
        %921 = vmatpush1.msra.mxu0 0.0
        %922 = vmatprep.subr.mxu0 0.0
        %923 = vmatpush1.msra.mxu0 0.0
        %924 = vmatprep.subr.mxu0 0.0
        %925 = vmatpush1.msra.mxu0 0.0
        %926 = vmatprep.subr.mxu0 0.0
        %927 = vmatpush1.msra.mxu0 0.0
        %928 = vmatprep.subr.mxu0 0.0
        %929 = vmatpush1.msra.mxu0 0.0
        %930 = vmatprep.subr.mxu0 0.0
        %931 = vmatpush1.msra.mxu0 0.0
        %932 = vmatprep.subr.mxu0 0.0
        %933 = vmatpush1.msra.mxu0 0.0
        %934 = vmatprep.subr.mxu0 0.0
        %935 = vmatpush1.msra.mxu0 0.0
        %936 = vmatprep.subr.mxu0 0.0
        %937 = vmatpush1.msra.mxu0 0.0
        %938 = vmatprep.subr.mxu0 0.0
        %939 = vmatpush1.msra.mxu0 0.0
        %940 = vmatprep.subr.mxu0 0.0
        %941 = vmatpush1.msra.mxu0 0.0
        %942 = vmatprep.mubr.f32.mxu0 0.0
        %943 = vmatmul.mubr.f32.gmra.mrb[0].mxu0 %v853
        %v944 = vpop.f32.mrb[0].mxu0
        %v945 = vadd.f32 %v876, %v944
        %v946 = vpop.f32.mrb[0].mxu0
        %947 = vmatprep.mubr.f32.mxu0 0.0
        %948 = vmatmul.mubr.f32.gmra.mrb[0].mxu0 %v854
        %v949 = vpop.f32.mrb[0].mxu0
        %v950 = vadd.f32 %v876, %v949
        %v951 = vpop.f32.mrb[0].mxu0
        %952 = vdwg.mxu0
        %v953 = vadd.f32 %v614, %v945
        %v954 = vadd.f32 %v619, %v950
        %956 = vset.pattern.permute.xlu0 0
        %957 = vperm.xlu0 %956, %v516
        %v958 = vpop.permute.xlu0 %957
        %961 = vset.pattern.permute.xlu0 0
        %962 = vperm.xlu0 %961, %v517
        %v963 = vpop.permute.xlu0 %962
        %v965 = vmul.f32 %v953, %v958
        %v966 = vmul.f32 %v954, %v963
        %v967 = vrot.slane %v965, 6
        %v968 = vrot.slane %v966, 6
        %vm969 = vcmp.lt.s32.totalorder %v519, 2
        %v970 = vsel %vm969, %v967, %v968
        %v971 = vsel %vm969, %v968, %v967
        %vm972 = vcmp.ge.s32.totalorder %v519, 2
        %vm973 = vcmp.ge.s32.totalorder %v520, 2
        %v974 = vsel %vm972, 1, 0
        %v975 = vsel %vm973, 1, 0
        %vm976 = vcmp.eq.s32.totalorder %v974, 1
        %vm977 = vcmp.eq.s32.totalorder %v975, 1
        %v978 = vsel %vm976, %v971, 0.0
        %v979 = vsel %vm977, %v970, 0.0
        %v980 = vrot.slane %v965, 2
        %v981 = vrot.slane %v966, 2
        %vm982 = vcmp.lt.s32.totalorder %v519, 6
        %v983 = vsel %vm982, %v980, %v981
        %v984 = vsel %vm982, %v981, %v980
        %vm985 = vcmp.lt.s32.totalorder %v519, 14
        %vm986 = vcmp.lt.s32.totalorder %v520, 14
        %v987 = vsel %vm985, 1, 0
        %v988 = vsel %vm986, 1, 0
        %vm989 = vcmp.eq.s32.totalorder %v987, 1
        %vm990 = vcmp.eq.s32.totalorder %v988, 1
        %v991 = vsel %vm989, %v983, 0.0
        %v992 = vsel %vm990, %v984, 0.0
        %s993 = scalar_lea.vmem [#allocation8], 384
        %v994 = vld [vmem:[%s993] sm:$0xff]
        %v995 = vld [vmem:[%s993 + $0x8] sm:$0xff]
        %v996 = vld [vmem:[%s993 + $0x10] sm:$0xff]
        %v997 = vld [vmem:[%s993 + $0x18] sm:$0xff]
        %v998 = vld [vmem:[%s993 + $0x20] sm:$0xff]
        %v999 = vld [vmem:[%s993 + $0x28] sm:$0xff]
        %v1000 = vld [vmem:[%s993 + $0x30] sm:$0xff]
        %v1001 = vld [vmem:[%s993 + $0x38] sm:$0xff]
        %v1002 = vld [vmem:[%s993 + $0x40] sm:$0xff]
        %v1003 = vld [vmem:[%s993 + $0x48] sm:$0xff]
        %v1004 = vld [vmem:[%s993 + $0x50] sm:$0xff]
        %v1005 = vld [vmem:[%s993 + $0x58] sm:$0xff]
        %v1006 = vld [vmem:[%s993 + $0x60] sm:$0xff]
        %v1007 = vld [vmem:[%s993 + $0x68] sm:$0xff]
        %v1008 = vld [vmem:[%s993 + $0x70] sm:$0xff]
        %v1009 = vld [vmem:[%s993 + $0x78] sm:$0xff]
        %v1010 = vld [vmem:[%s993 + $0x80] sm:$0xff]
        %v1011 = vld [vmem:[%s993 + $0x88] sm:$0xff]
        %v1012 = vld [vmem:[%s993 + $0x90] sm:$0xff]
        %v1013 = vld [vmem:[%s993 + $0x98] sm:$0xff]
        %v1014 = vld [vmem:[%s993 + $0xa0] sm:$0xff]
        %v1015 = vld [vmem:[%s993 + $0xa8] sm:$0xff]
        %v1016 = vld [vmem:[%s993 + $0xb0] sm:$0xff]
        %v1017 = vld [vmem:[%s993 + $0xb8] sm:$0xff]
        %v1018 = vld [vmem:[%s993 + $0xc0] sm:$0xff]
        %v1019 = vld [vmem:[%s993 + $0xc8] sm:$0xff]
        %v1020 = vld [vmem:[%s993 + $0xd0] sm:$0xff]
        %v1021 = vld [vmem:[%s993 + $0xd8] sm:$0xff]
        %v1022 = vld [vmem:[%s993 + $0xe0] sm:$0xff]
        %v1023 = vld [vmem:[%s993 + $0xe8] sm:$0xff]
        %v1024 = vld [vmem:[%s993 + $0xf0] sm:$0xff]
        %v1025 = vld [vmem:[%s993 + $0xf8] sm:$0xff]
        %v1026 = vld [vmem:[%s993 + $0x100] sm:$0xff]
        %v1027 = vld [vmem:[%s993 + $0x108] sm:$0xff]
        %v1028 = vld [vmem:[%s993 + $0x110] sm:$0xff]
        %v1029 = vld [vmem:[%s993 + $0x118] sm:$0xff]
        %v1030 = vld [vmem:[%s993 + $0x120] sm:$0xff]
        %v1031 = vld [vmem:[%s993 + $0x128] sm:$0xff]
        %v1032 = vld [vmem:[%s993 + $0x130] sm:$0xff]
        %v1033 = vld [vmem:[%s993 + $0x138] sm:$0xff]
        %v1034 = vld [vmem:[%s993 + $0x140] sm:$0xff]
        %v1035 = vld [vmem:[%s993 + $0x148] sm:$0xff]
        %v1036 = vld [vmem:[%s993 + $0x150] sm:$0xff]
        %v1037 = vld [vmem:[%s993 + $0x158] sm:$0xff]
        %v1038 = vld [vmem:[%s993 + $0x160] sm:$0xff]
        %v1039 = vld [vmem:[%s993 + $0x168] sm:$0xff]
        %v1040 = vld [vmem:[%s993 + $0x170] sm:$0xff]
        %v1041 = vld [vmem:[%s993 + $0x178] sm:$0xff]
        %s1042 = scalar_lea.vmem [#allocation10], 1
        %v1043 = vld [vmem:[%s1042] sm:$0x1]
        %v1045 = vlaneseq
        %v1046 = vshrl.u32 %v1045, 7
        %v1047 = vsub.s32 0, %v1046
        %v1048 = vrot.slane %v1043, %v1047
        %1050 = vmatprep.subr.mxu0 0.0
        %1051 = vmatpush1.msra.mxu0 %v994
        %1052 = vmatprep.subr.mxu0 0.0
        %1053 = vmatpush1.msra.mxu0 %v995
        %1054 = vmatprep.subr.mxu0 0.0
        %1055 = vmatpush1.msra.mxu0 %v996
        %1056 = vmatprep.subr.mxu0 0.0
        %1057 = vmatpush1.msra.mxu0 %v997
        %1058 = vmatprep.subr.mxu0 0.0
        %1059 = vmatpush1.msra.mxu0 %v998
        %1060 = vmatprep.subr.mxu0 0.0
        %1061 = vmatpush1.msra.mxu0 %v999
        %1062 = vmatprep.subr.mxu0 0.0
        %1063 = vmatpush1.msra.mxu0 %v1000
        %1064 = vmatprep.subr.mxu0 0.0
        %1065 = vmatpush1.msra.mxu0 %v1001
        %1066 = vmatprep.subr.mxu0 0.0
        %1067 = vmatpush1.msra.mxu0 %v1002
        %1068 = vmatprep.subr.mxu0 0.0
        %1069 = vmatpush1.msra.mxu0 %v1003
        %1070 = vmatprep.subr.mxu0 0.0
        %1071 = vmatpush1.msra.mxu0 %v1004
        %1072 = vmatprep.subr.mxu0 0.0
        %1073 = vmatpush1.msra.mxu0 %v1005
        %1074 = vmatprep.subr.mxu0 0.0
        %1075 = vmatpush1.msra.mxu0 %v1006
        %1076 = vmatprep.subr.mxu0 0.0
        %1077 = vmatpush1.msra.mxu0 %v1007
        %1078 = vmatprep.subr.mxu0 0.0
        %1079 = vmatpush1.msra.mxu0 %v1008
        %1080 = vmatprep.subr.mxu0 0.0
        %1081 = vmatpush1.msra.mxu0 %v1009
        %1082 = vmatprep.subr.mxu0 0.0
        %1083 = vmatpush1.msra.mxu0 %v1010
        %1084 = vmatprep.subr.mxu0 0.0
        %1085 = vmatpush1.msra.mxu0 %v1011
        %1086 = vmatprep.subr.mxu0 0.0
        %1087 = vmatpush1.msra.mxu0 %v1012
        %1088 = vmatprep.subr.mxu0 0.0
        %1089 = vmatpush1.msra.mxu0 %v1013
        %1090 = vmatprep.subr.mxu0 0.0
        %1091 = vmatpush1.msra.mxu0 %v1014
        %1092 = vmatprep.subr.mxu0 0.0
        %1093 = vmatpush1.msra.mxu0 %v1015
        %1094 = vmatprep.subr.mxu0 0.0
        %1095 = vmatpush1.msra.mxu0 %v1016
        %1096 = vmatprep.subr.mxu0 0.0
        %1097 = vmatpush1.msra.mxu0 %v1017
        %1098 = vmatprep.subr.mxu0 0.0
        %1099 = vmatpush1.msra.mxu0 %v1018
        %1100 = vmatprep.subr.mxu0 0.0
        %1101 = vmatpush1.msra.mxu0 %v1019
        %1102 = vmatprep.subr.mxu0 0.0
        %1103 = vmatpush1.msra.mxu0 %v1020
        %1104 = vmatprep.subr.mxu0 0.0
        %1105 = vmatpush1.msra.mxu0 %v1021
        %1106 = vmatprep.subr.mxu0 0.0
        %1107 = vmatpush1.msra.mxu0 %v1022
        %1108 = vmatprep.subr.mxu0 0.0
        %1109 = vmatpush1.msra.mxu0 %v1023
        %1110 = vmatprep.subr.mxu0 0.0
        %1111 = vmatpush1.msra.mxu0 %v1024
        %1112 = vmatprep.subr.mxu0 0.0
        %1113 = vmatpush1.msra.mxu0 %v1025
        %1114 = vmatprep.mubr.f32.mxu0 %v965
        %1115 = vmatmul.mubr.f32.gmra.mrb[0].mxu0 %v978
        %v1116 = vpop.f32.mrb[0].mxu0
        %v1117 = vadd.f32 %v1048, %v1116
        %v1118 = vpop.f32.mrb[0].mxu0
        %1119 = vmatprep.mubr.f32.mxu0 %v966
        %1120 = vmatmul.mubr.f32.gmra.mrb[0].mxu0 %v979
        %v1121 = vpop.f32.mrb[0].mxu0
        %v1122 = vadd.f32 %v1048, %v1121
        %v1123 = vpop.f32.mrb[0].mxu0
        %1124 = vdwg.mxu0
        %1125 = vmatprep.subr.mxu0 0.0
        %1126 = vmatpush1.msra.mxu0 %v1026
        %1127 = vmatprep.subr.mxu0 0.0
        %1128 = vmatpush1.msra.mxu0 %v1027
        %1129 = vmatprep.subr.mxu0 0.0
        %1130 = vmatpush1.msra.mxu0 %v1028
        %1131 = vmatprep.subr.mxu0 0.0
        %1132 = vmatpush1.msra.mxu0 %v1029
        %1133 = vmatprep.subr.mxu0 0.0
        %1134 = vmatpush1.msra.mxu0 %v1030
        %1135 = vmatprep.subr.mxu0 0.0
        %1136 = vmatpush1.msra.mxu0 %v1031
        %1137 = vmatprep.subr.mxu0 0.0
        %1138 = vmatpush1.msra.mxu0 %v1032
        %1139 = vmatprep.subr.mxu0 0.0
        %1140 = vmatpush1.msra.mxu0 %v1033
        %1141 = vmatprep.subr.mxu0 0.0
        %1142 = vmatpush1.msra.mxu0 %v1034
        %1143 = vmatprep.subr.mxu0 0.0
        %1144 = vmatpush1.msra.mxu0 %v1035
        %1145 = vmatprep.subr.mxu0 0.0
        %1146 = vmatpush1.msra.mxu0 %v1036
        %1147 = vmatprep.subr.mxu0 0.0
        %1148 = vmatpush1.msra.mxu0 %v1037
        %1149 = vmatprep.subr.mxu0 0.0
        %1150 = vmatpush1.msra.mxu0 %v1038
        %1151 = vmatprep.subr.mxu0 0.0
        %1152 = vmatpush1.msra.mxu0 %v1039
        %1153 = vmatprep.subr.mxu0 0.0
        %1154 = vmatpush1.msra.mxu0 %v1040
        %1155 = vmatprep.subr.mxu0 0.0
        %1156 = vmatpush1.msra.mxu0 %v1041
        %1157 = vmatprep.subr.mxu0 0.0
        %1158 = vmatpush1.msra.mxu0 0.0
        %1159 = vmatprep.subr.mxu0 0.0
        %1160 = vmatpush1.msra.mxu0 0.0
        %1161 = vmatprep.subr.mxu0 0.0
        %1162 = vmatpush1.msra.mxu0 0.0
        %1163 = vmatprep.subr.mxu0 0.0
        %1164 = vmatpush1.msra.mxu0 0.0
        %1165 = vmatprep.subr.mxu0 0.0
        %1166 = vmatpush1.msra.mxu0 0.0
        %1167 = vmatprep.subr.mxu0 0.0
        %1168 = vmatpush1.msra.mxu0 0.0
        %1169 = vmatprep.subr.mxu0 0.0
        %1170 = vmatpush1.msra.mxu0 0.0
        %1171 = vmatprep.subr.mxu0 0.0
        %1172 = vmatpush1.msra.mxu0 0.0
        %1173 = vmatprep.subr.mxu0 0.0
        %1174 = vmatpush1.msra.mxu0 0.0
        %1175 = vmatprep.subr.mxu0 0.0
        %1176 = vmatpush1.msra.mxu0 0.0
        %1177 = vmatprep.subr.mxu0 0.0
        %1178 = vmatpush1.msra.mxu0 0.0
        %1179 = vmatprep.subr.mxu0 0.0
        %1180 = vmatpush1.msra.mxu0 0.0
        %1181 = vmatprep.subr.mxu0 0.0
        %1182 = vmatpush1.msra.mxu0 0.0
        %1183 = vmatprep.subr.mxu0 0.0
        %1184 = vmatpush1.msra.mxu0 0.0
        %1185 = vmatprep.subr.mxu0 0.0
        %1186 = vmatpush1.msra.mxu0 0.0
        %1187 = vmatprep.subr.mxu0 0.0
        %1188 = vmatpush1.msra.mxu0 0.0
        %1189 = vmatprep.mubr.f32.mxu0 0.0
        %1190 = vmatmul.mubr.f32.gmra.mrb[0].mxu0 %v991
        %v1191 = vpop.f32.mrb[0].mxu0
        %v1192 = vadd.f32 %v1117, %v1191
        %v1193 = vpop.f32.mrb[0].mxu0
        %1194 = vmatprep.mubr.f32.mxu0 0.0
        %1195 = vmatmul.mubr.f32.gmra.mrb[0].mxu0 %v992
        %v1196 = vpop.f32.mrb[0].mxu0
        %v1197 = vadd.f32 %v1122, %v1196
        %v1198 = vpop.f32.mrb[0].mxu0
        %1199 = vdwg.mxu0
        %v1200 = vmax.f32 %v1192, 0.0
        %v1201 = vmax.f32 %v1197, 0.0
        %s1202 = scalar_lea.vmem [#allocation11], 128
        %v1203 = vld [vmem:[%s1202] sm:$0xff]
        %v1204 = vld [vmem:[%s1202 + $0x8] sm:$0xff]
        %v1205 = vld [vmem:[%s1202 + $0x10] sm:$0xff]
        %v1206 = vld [vmem:[%s1202 + $0x18] sm:$0xff]
        %v1207 = vld [vmem:[%s1202 + $0x20] sm:$0xff]
        %v1208 = vld [vmem:[%s1202 + $0x28] sm:$0xff]
        %v1209 = vld [vmem:[%s1202 + $0x30] sm:$0xff]
        %v1210 = vld [vmem:[%s1202 + $0x38] sm:$0xff]
        %v1211 = vld [vmem:[%s1202 + $0x40] sm:$0xff]
        %v1212 = vld [vmem:[%s1202 + $0x48] sm:$0xff]
        %v1213 = vld [vmem:[%s1202 + $0x50] sm:$0xff]
        %v1214 = vld [vmem:[%s1202 + $0x58] sm:$0xff]
        %v1215 = vld [vmem:[%s1202 + $0x60] sm:$0xff]
        %v1216 = vld [vmem:[%s1202 + $0x68] sm:$0xff]
        %v1217 = vld [vmem:[%s1202 + $0x70] sm:$0xff]
        %v1218 = vld [vmem:[%s1202 + $0x78] sm:$0xff]
        %s1219 = scalar_lea.vmem [#allocation13], 1
        %v1220 = vld [vmem:[%s1219] sm:$0x1]
        %v1222 = vlaneseq
        %v1223 = vshrl.u32 %v1222, 7
        %v1224 = vsub.s32 0, %v1223
        %v1225 = vrot.slane %v1220, %v1224
        %1227 = vmatprep.subr.mxu0 0.0
        %1228 = vmatpush1.msra.mxu0 %v1203
        %1229 = vmatprep.subr.mxu0 0.0
        %1230 = vmatpush1.msra.mxu0 %v1204
        %1231 = vmatprep.subr.mxu0 0.0
        %1232 = vmatpush1.msra.mxu0 %v1205
        %1233 = vmatprep.subr.mxu0 0.0
        %1234 = vmatpush1.msra.mxu0 %v1206
        %1235 = vmatprep.subr.mxu0 0.0
        %1236 = vmatpush1.msra.mxu0 %v1207
        %1237 = vmatprep.subr.mxu0 0.0
        %1238 = vmatpush1.msra.mxu0 %v1208
        %1239 = vmatprep.subr.mxu0 0.0
        %1240 = vmatpush1.msra.mxu0 %v1209
        %1241 = vmatprep.subr.mxu0 0.0
        %1242 = vmatpush1.msra.mxu0 %v1210
        %1243 = vmatprep.subr.mxu0 0.0
        %1244 = vmatpush1.msra.mxu0 %v1211
        %1245 = vmatprep.subr.mxu0 0.0
        %1246 = vmatpush1.msra.mxu0 %v1212
        %1247 = vmatprep.subr.mxu0 0.0
        %1248 = vmatpush1.msra.mxu0 %v1213
        %1249 = vmatprep.subr.mxu0 0.0
        %1250 = vmatpush1.msra.mxu0 %v1214
        %1251 = vmatprep.subr.mxu0 0.0
        %1252 = vmatpush1.msra.mxu0 %v1215
        %1253 = vmatprep.subr.mxu0 0.0
        %1254 = vmatpush1.msra.mxu0 %v1216
        %1255 = vmatprep.subr.mxu0 0.0
        %1256 = vmatpush1.msra.mxu0 %v1217
        %1257 = vmatprep.subr.mxu0 0.0
        %1258 = vmatpush1.msra.mxu0 %v1218
        %1259 = vmatprep.subr.mxu0 0.0
        %1260 = vmatpush1.msra.mxu0 0.0
        %1261 = vmatprep.subr.mxu0 0.0
        %1262 = vmatpush1.msra.mxu0 0.0
        %1263 = vmatprep.subr.mxu0 0.0
        %1264 = vmatpush1.msra.mxu0 0.0
        %1265 = vmatprep.subr.mxu0 0.0
        %1266 = vmatpush1.msra.mxu0 0.0
        %1267 = vmatprep.subr.mxu0 0.0
        %1268 = vmatpush1.msra.mxu0 0.0
        %1269 = vmatprep.subr.mxu0 0.0
        %1270 = vmatpush1.msra.mxu0 0.0
        %1271 = vmatprep.subr.mxu0 0.0
        %1272 = vmatpush1.msra.mxu0 0.0
        %1273 = vmatprep.subr.mxu0 0.0
        %1274 = vmatpush1.msra.mxu0 0.0
        %1275 = vmatprep.subr.mxu0 0.0
        %1276 = vmatpush1.msra.mxu0 0.0
        %1277 = vmatprep.subr.mxu0 0.0
        %1278 = vmatpush1.msra.mxu0 0.0
        %1279 = vmatprep.subr.mxu0 0.0
        %1280 = vmatpush1.msra.mxu0 0.0
        %1281 = vmatprep.subr.mxu0 0.0
        %1282 = vmatpush1.msra.mxu0 0.0
        %1283 = vmatprep.subr.mxu0 0.0
        %1284 = vmatpush1.msra.mxu0 0.0
        %1285 = vmatprep.subr.mxu0 0.0
        %1286 = vmatpush1.msra.mxu0 0.0
        %1287 = vmatprep.subr.mxu0 0.0
        %1288 = vmatpush1.msra.mxu0 0.0
        %1289 = vmatprep.subr.mxu0 0.0
        %1290 = vmatpush1.msra.mxu0 0.0
        %1291 = vmatprep.mubr.f32.mxu0 0.0
        %1292 = vmatmul.mubr.f32.gmra.mrb[0].mxu0 %v1200
        %v1293 = vpop.f32.mrb[0].mxu0
        %v1294 = vadd.f32 %v1225, %v1293
        %v1295 = vpop.f32.mrb[0].mxu0
        %1296 = vmatprep.mubr.f32.mxu0 0.0
        %1297 = vmatmul.mubr.f32.gmra.mrb[0].mxu0 %v1201
        %v1298 = vpop.f32.mrb[0].mxu0
        %v1299 = vadd.f32 %v1225, %v1298
        %v1300 = vpop.f32.mrb[0].mxu0
        %1301 = vdwg.mxu0
        %v1302 = vadd.f32 %v965, %v1294
        %v1303 = vadd.f32 %v966, %v1299
        %v1304 = vmul.f32 %v1302, %v958
        %v1305 = vmul.f32 %v1303, %v963
        %v1306 = vrot.slane %v1304, 4
        %v1307 = vrot.slane %v1305, 4
        %vm1308 = vcmp.lt.s32.totalorder %v519, 4
        %v1309 = vsel %vm1308, %v1306, %v1307
        %v1310 = vsel %vm1308, %v1307, %v1306
        %vm1311 = vcmp.ge.s32.totalorder %v519, 4
        %vm1312 = vcmp.ge.s32.totalorder %v520, 4
        %v1313 = vsel %vm1311, 1, 0
        %v1314 = vsel %vm1312, 1, 0
        %vm1315 = vcmp.eq.s32.totalorder %v1313, 1
        %vm1316 = vcmp.eq.s32.totalorder %v1314, 1
        %v1317 = vsel %vm1315, %v1310, 0.0
        %v1318 = vsel %vm1316, %v1309, 0.0
        %vm1319 = vcmp.lt.s32.totalorder %v519, 12
        %vm1320 = vcmp.lt.s32.totalorder %v520, 12
        %v1321 = vsel %vm1319, 1, 0
        %v1322 = vsel %vm1320, 1, 0
        %vm1323 = vcmp.eq.s32.totalorder %v1321, 1
        %vm1324 = vcmp.eq.s32.totalorder %v1322, 1
        %v1325 = vsel %vm1323, %v1309, 0.0
        %v1326 = vsel %vm1324, %v1310, 0.0
        %s1327 = scalar_lea.vmem [#allocation8], 768
        %v1328 = vld [vmem:[%s1327] sm:$0xff]
        %v1329 = vld [vmem:[%s1327 + $0x8] sm:$0xff]
        %v1330 = vld [vmem:[%s1327 + $0x10] sm:$0xff]
        %v1331 = vld [vmem:[%s1327 + $0x18] sm:$0xff]
        %v1332 = vld [vmem:[%s1327 + $0x20] sm:$0xff]
        %v1333 = vld [vmem:[%s1327 + $0x28] sm:$0xff]
        %v1334 = vld [vmem:[%s1327 + $0x30] sm:$0xff]
        %v1335 = vld [vmem:[%s1327 + $0x38] sm:$0xff]
        %v1336 = vld [vmem:[%s1327 + $0x40] sm:$0xff]
        %v1337 = vld [vmem:[%s1327 + $0x48] sm:$0xff]
        %v1338 = vld [vmem:[%s1327 + $0x50] sm:$0xff]
        %v1339 = vld [vmem:[%s1327 + $0x58] sm:$0xff]
        %v1340 = vld [vmem:[%s1327 + $0x60] sm:$0xff]
        %v1341 = vld [vmem:[%s1327 + $0x68] sm:$0xff]
        %v1342 = vld [vmem:[%s1327 + $0x70] sm:$0xff]
        %v1343 = vld [vmem:[%s1327 + $0x78] sm:$0xff]
        %v1344 = vld [vmem:[%s1327 + $0x80] sm:$0xff]
        %v1345 = vld [vmem:[%s1327 + $0x88] sm:$0xff]
        %v1346 = vld [vmem:[%s1327 + $0x90] sm:$0xff]
        %v1347 = vld [vmem:[%s1327 + $0x98] sm:$0xff]
        %v1348 = vld [vmem:[%s1327 + $0xa0] sm:$0xff]
        %v1349 = vld [vmem:[%s1327 + $0xa8] sm:$0xff]
        %v1350 = vld [vmem:[%s1327 + $0xb0] sm:$0xff]
        %v1351 = vld [vmem:[%s1327 + $0xb8] sm:$0xff]
        %v1352 = vld [vmem:[%s1327 + $0xc0] sm:$0xff]
        %v1353 = vld [vmem:[%s1327 + $0xc8] sm:$0xff]
        %v1354 = vld [vmem:[%s1327 + $0xd0] sm:$0xff]
        %v1355 = vld [vmem:[%s1327 + $0xd8] sm:$0xff]
        %v1356 = vld [vmem:[%s1327 + $0xe0] sm:$0xff]
        %v1357 = vld [vmem:[%s1327 + $0xe8] sm:$0xff]
        %v1358 = vld [vmem:[%s1327 + $0xf0] sm:$0xff]
        %v1359 = vld [vmem:[%s1327 + $0xf8] sm:$0xff]
        %v1360 = vld [vmem:[%s1327 + $0x100] sm:$0xff]
        %v1361 = vld [vmem:[%s1327 + $0x108] sm:$0xff]
        %v1362 = vld [vmem:[%s1327 + $0x110] sm:$0xff]
        %v1363 = vld [vmem:[%s1327 + $0x118] sm:$0xff]
        %v1364 = vld [vmem:[%s1327 + $0x120] sm:$0xff]
        %v1365 = vld [vmem:[%s1327 + $0x128] sm:$0xff]
        %v1366 = vld [vmem:[%s1327 + $0x130] sm:$0xff]
        %v1367 = vld [vmem:[%s1327 + $0x138] sm:$0xff]
        %v1368 = vld [vmem:[%s1327 + $0x140] sm:$0xff]
        %v1369 = vld [vmem:[%s1327 + $0x148] sm:$0xff]
        %v1370 = vld [vmem:[%s1327 + $0x150] sm:$0xff]
        %v1371 = vld [vmem:[%s1327 + $0x158] sm:$0xff]
        %v1372 = vld [vmem:[%s1327 + $0x160] sm:$0xff]
        %v1373 = vld [vmem:[%s1327 + $0x168] sm:$0xff]
        %v1374 = vld [vmem:[%s1327 + $0x170] sm:$0xff]
        %v1375 = vld [vmem:[%s1327 + $0x178] sm:$0xff]
        %s1376 = scalar_lea.vmem [#allocation10], 2
        %v1377 = vld [vmem:[%s1376] sm:$0x1]
        %v1379 = vlaneseq
        %v1380 = vshrl.u32 %v1379, 7
        %v1381 = vsub.s32 0, %v1380
        %v1382 = vrot.slane %v1377, %v1381
        %1384 = vmatprep.subr.mxu0 0.0
        %1385 = vmatpush1.msra.mxu0 %v1328
        %1386 = vmatprep.subr.mxu0 0.0
        %1387 = vmatpush1.msra.mxu0 %v1329
        %1388 = vmatprep.subr.mxu0 0.0
        %1389 = vmatpush1.msra.mxu0 %v1330
        %1390 = vmatprep.subr.mxu0 0.0
        %1391 = vmatpush1.msra.mxu0 %v1331
        %1392 = vmatprep.subr.mxu0 0.0
        %1393 = vmatpush1.msra.mxu0 %v1332
        %1394 = vmatprep.subr.mxu0 0.0
        %1395 = vmatpush1.msra.mxu0 %v1333
        %1396 = vmatprep.subr.mxu0 0.0
        %1397 = vmatpush1.msra.mxu0 %v1334
        %1398 = vmatprep.subr.mxu0 0.0
        %1399 = vmatpush1.msra.mxu0 %v1335
        %1400 = vmatprep.subr.mxu0 0.0
        %1401 = vmatpush1.msra.mxu0 %v1336
        %1402 = vmatprep.subr.mxu0 0.0
        %1403 = vmatpush1.msra.mxu0 %v1337
        %1404 = vmatprep.subr.mxu0 0.0
        %1405 = vmatpush1.msra.mxu0 %v1338
        %1406 = vmatprep.subr.mxu0 0.0
        %1407 = vmatpush1.msra.mxu0 %v1339
        %1408 = vmatprep.subr.mxu0 0.0
        %1409 = vmatpush1.msra.mxu0 %v1340
        %1410 = vmatprep.subr.mxu0 0.0
        %1411 = vmatpush1.msra.mxu0 %v1341
        %1412 = vmatprep.subr.mxu0 0.0
        %1413 = vmatpush1.msra.mxu0 %v1342
        %1414 = vmatprep.subr.mxu0 0.0
        %1415 = vmatpush1.msra.mxu0 %v1343
        %1416 = vmatprep.subr.mxu0 0.0
        %1417 = vmatpush1.msra.mxu0 %v1344
        %1418 = vmatprep.subr.mxu0 0.0
        %1419 = vmatpush1.msra.mxu0 %v1345
        %1420 = vmatprep.subr.mxu0 0.0
        %1421 = vmatpush1.msra.mxu0 %v1346
        %1422 = vmatprep.subr.mxu0 0.0
        %1423 = vmatpush1.msra.mxu0 %v1347
        %1424 = vmatprep.subr.mxu0 0.0
        %1425 = vmatpush1.msra.mxu0 %v1348
        %1426 = vmatprep.subr.mxu0 0.0
        %1427 = vmatpush1.msra.mxu0 %v1349
        %1428 = vmatprep.subr.mxu0 0.0
        %1429 = vmatpush1.msra.mxu0 %v1350
        %1430 = vmatprep.subr.mxu0 0.0
        %1431 = vmatpush1.msra.mxu0 %v1351
        %1432 = vmatprep.subr.mxu0 0.0
        %1433 = vmatpush1.msra.mxu0 %v1352
        %1434 = vmatprep.subr.mxu0 0.0
        %1435 = vmatpush1.msra.mxu0 %v1353
        %1436 = vmatprep.subr.mxu0 0.0
        %1437 = vmatpush1.msra.mxu0 %v1354
        %1438 = vmatprep.subr.mxu0 0.0
        %1439 = vmatpush1.msra.mxu0 %v1355
        %1440 = vmatprep.subr.mxu0 0.0
        %1441 = vmatpush1.msra.mxu0 %v1356
        %1442 = vmatprep.subr.mxu0 0.0
        %1443 = vmatpush1.msra.mxu0 %v1357
        %1444 = vmatprep.subr.mxu0 0.0
        %1445 = vmatpush1.msra.mxu0 %v1358
        %1446 = vmatprep.subr.mxu0 0.0
        %1447 = vmatpush1.msra.mxu0 %v1359
        %1448 = vmatprep.mubr.f32.mxu0 %v1304
        %1449 = vmatmul.mubr.f32.gmra.mrb[0].mxu0 %v1317
        %v1450 = vpop.f32.mrb[0].mxu0
        %v1451 = vadd.f32 %v1382, %v1450
        %v1452 = vpop.f32.mrb[0].mxu0
        %1453 = vmatprep.mubr.f32.mxu0 %v1305
        %1454 = vmatmul.mubr.f32.gmra.mrb[0].mxu0 %v1318
        %v1455 = vpop.f32.mrb[0].mxu0
        %v1456 = vadd.f32 %v1382, %v1455
        %v1457 = vpop.f32.mrb[0].mxu0
        %1458 = vdwg.mxu0
        %1459 = vmatprep.subr.mxu0 0.0
        %1460 = vmatpush1.msra.mxu0 %v1360
        %1461 = vmatprep.subr.mxu0 0.0
        %1462 = vmatpush1.msra.mxu0 %v1361
        %1463 = vmatprep.subr.mxu0 0.0
        %1464 = vmatpush1.msra.mxu0 %v1362
        %1465 = vmatprep.subr.mxu0 0.0
        %1466 = vmatpush1.msra.mxu0 %v1363
        %1467 = vmatprep.subr.mxu0 0.0
        %1468 = vmatpush1.msra.mxu0 %v1364
        %1469 = vmatprep.subr.mxu0 0.0
        %1470 = vmatpush1.msra.mxu0 %v1365
        %1471 = vmatprep.subr.mxu0 0.0
        %1472 = vmatpush1.msra.mxu0 %v1366
        %1473 = vmatprep.subr.mxu0 0.0
        %1474 = vmatpush1.msra.mxu0 %v1367
        %1475 = vmatprep.subr.mxu0 0.0
        %1476 = vmatpush1.msra.mxu0 %v1368
        %1477 = vmatprep.subr.mxu0 0.0
        %1478 = vmatpush1.msra.mxu0 %v1369
        %1479 = vmatprep.subr.mxu0 0.0
        %1480 = vmatpush1.msra.mxu0 %v1370
        %1481 = vmatprep.subr.mxu0 0.0
        %1482 = vmatpush1.msra.mxu0 %v1371
        %1483 = vmatprep.subr.mxu0 0.0
        %1484 = vmatpush1.msra.mxu0 %v1372
        %1485 = vmatprep.subr.mxu0 0.0
        %1486 = vmatpush1.msra.mxu0 %v1373
        %1487 = vmatprep.subr.mxu0 0.0
        %1488 = vmatpush1.msra.mxu0 %v1374
        %1489 = vmatprep.subr.mxu0 0.0
        %1490 = vmatpush1.msra.mxu0 %v1375
        %1491 = vmatprep.subr.mxu0 0.0
        %1492 = vmatpush1.msra.mxu0 0.0
        %1493 = vmatprep.subr.mxu0 0.0
        %1494 = vmatpush1.msra.mxu0 0.0
        %1495 = vmatprep.subr.mxu0 0.0
        %1496 = vmatpush1.msra.mxu0 0.0
        %1497 = vmatprep.subr.mxu0 0.0
        %1498 = vmatpush1.msra.mxu0 0.0
        %1499 = vmatprep.subr.mxu0 0.0
        %1500 = vmatpush1.msra.mxu0 0.0
        %1501 = vmatprep.subr.mxu0 0.0
        %1502 = vmatpush1.msra.mxu0 0.0
        %1503 = vmatprep.subr.mxu0 0.0
        %1504 = vmatpush1.msra.mxu0 0.0
        %1505 = vmatprep.subr.mxu0 0.0
        %1506 = vmatpush1.msra.mxu0 0.0
        %1507 = vmatprep.subr.mxu0 0.0
        %1508 = vmatpush1.msra.mxu0 0.0
        %1509 = vmatprep.subr.mxu0 0.0
        %1510 = vmatpush1.msra.mxu0 0.0
        %1511 = vmatprep.subr.mxu0 0.0
        %1512 = vmatpush1.msra.mxu0 0.0
        %1513 = vmatprep.subr.mxu0 0.0
        %1514 = vmatpush1.msra.mxu0 0.0
        %1515 = vmatprep.subr.mxu0 0.0
        %1516 = vmatpush1.msra.mxu0 0.0
        %1517 = vmatprep.subr.mxu0 0.0
        %1518 = vmatpush1.msra.mxu0 0.0
        %1519 = vmatprep.subr.mxu0 0.0
        %1520 = vmatpush1.msra.mxu0 0.0
        %1521 = vmatprep.subr.mxu0 0.0
        %1522 = vmatpush1.msra.mxu0 0.0
        %1523 = vmatprep.mubr.f32.mxu0 0.0
        %1524 = vmatmul.mubr.f32.gmra.mrb[0].mxu0 %v1325
        %v1525 = vpop.f32.mrb[0].mxu0
        %v1526 = vadd.f32 %v1451, %v1525
        %v1527 = vpop.f32.mrb[0].mxu0
        %1528 = vmatprep.mubr.f32.mxu0 0.0
        %1529 = vmatmul.mubr.f32.gmra.mrb[0].mxu0 %v1326
        %v1530 = vpop.f32.mrb[0].mxu0
        %v1531 = vadd.f32 %v1456, %v1530
        %v1532 = vpop.f32.mrb[0].mxu0
        %1533 = vdwg.mxu0
        %v1534 = vmax.f32 %v1526, 0.0
        %v1535 = vmax.f32 %v1531, 0.0
        %s1536 = scalar_lea.vmem [#allocation11], 256
        %v1537 = vld [vmem:[%s1536] sm:$0xff]
        %v1538 = vld [vmem:[%s1536 + $0x8] sm:$0xff]
        %v1539 = vld [vmem:[%s1536 + $0x10] sm:$0xff]
        %v1540 = vld [vmem:[%s1536 + $0x18] sm:$0xff]
        %v1541 = vld [vmem:[%s1536 + $0x20] sm:$0xff]
        %v1542 = vld [vmem:[%s1536 + $0x28] sm:$0xff]
        %v1543 = vld [vmem:[%s1536 + $0x30] sm:$0xff]
        %v1544 = vld [vmem:[%s1536 + $0x38] sm:$0xff]
        %v1545 = vld [vmem:[%s1536 + $0x40] sm:$0xff]
        %v1546 = vld [vmem:[%s1536 + $0x48] sm:$0xff]
        %v1547 = vld [vmem:[%s1536 + $0x50] sm:$0xff]
        %v1548 = vld [vmem:[%s1536 + $0x58] sm:$0xff]
        %v1549 = vld [vmem:[%s1536 + $0x60] sm:$0xff]
        %v1550 = vld [vmem:[%s1536 + $0x68] sm:$0xff]
        %v1551 = vld [vmem:[%s1536 + $0x70] sm:$0xff]
        %v1552 = vld [vmem:[%s1536 + $0x78] sm:$0xff]
        %s1553 = scalar_lea.vmem [#allocation13], 2
        %v1554 = vld [vmem:[%s1553] sm:$0x1]
        %v1556 = vlaneseq
        %v1557 = vshrl.u32 %v1556, 7
        %v1558 = vsub.s32 0, %v1557
        %v1559 = vrot.slane %v1554, %v1558
        %1561 = vmatprep.subr.mxu0 0.0
        %1562 = vmatpush1.msra.mxu0 %v1537
        %1563 = vmatprep.subr.mxu0 0.0
        %1564 = vmatpush1.msra.mxu0 %v1538
        %1565 = vmatprep.subr.mxu0 0.0
        %1566 = vmatpush1.msra.mxu0 %v1539
        %1567 = vmatprep.subr.mxu0 0.0
        %1568 = vmatpush1.msra.mxu0 %v1540
        %1569 = vmatprep.subr.mxu0 0.0
        %1570 = vmatpush1.msra.mxu0 %v1541
        %1571 = vmatprep.subr.mxu0 0.0
        %1572 = vmatpush1.msra.mxu0 %v1542
        %1573 = vmatprep.subr.mxu0 0.0
        %1574 = vmatpush1.msra.mxu0 %v1543
        %1575 = vmatprep.subr.mxu0 0.0
        %1576 = vmatpush1.msra.mxu0 %v1544
        %1577 = vmatprep.subr.mxu0 0.0
        %1578 = vmatpush1.msra.mxu0 %v1545
        %1579 = vmatprep.subr.mxu0 0.0
        %1580 = vmatpush1.msra.mxu0 %v1546
        %1581 = vmatprep.subr.mxu0 0.0
        %1582 = vmatpush1.msra.mxu0 %v1547
        %1583 = vmatprep.subr.mxu0 0.0
        %1584 = vmatpush1.msra.mxu0 %v1548
        %1585 = vmatprep.subr.mxu0 0.0
        %1586 = vmatpush1.msra.mxu0 %v1549
        %1587 = vmatprep.subr.mxu0 0.0
        %1588 = vmatpush1.msra.mxu0 %v1550
        %1589 = vmatprep.subr.mxu0 0.0
        %1590 = vmatpush1.msra.mxu0 %v1551
        %1591 = vmatprep.subr.mxu0 0.0
        %1592 = vmatpush1.msra.mxu0 %v1552
        %1593 = vmatprep.subr.mxu0 0.0
        %1594 = vmatpush1.msra.mxu0 0.0
        %1595 = vmatprep.subr.mxu0 0.0
        %1596 = vmatpush1.msra.mxu0 0.0
        %1597 = vmatprep.subr.mxu0 0.0
        %1598 = vmatpush1.msra.mxu0 0.0
        %1599 = vmatprep.subr.mxu0 0.0
        %1600 = vmatpush1.msra.mxu0 0.0
        %1601 = vmatprep.subr.mxu0 0.0
        %1602 = vmatpush1.msra.mxu0 0.0
        %1603 = vmatprep.subr.mxu0 0.0
        %1604 = vmatpush1.msra.mxu0 0.0
        %1605 = vmatprep.subr.mxu0 0.0
        %1606 = vmatpush1.msra.mxu0 0.0
        %1607 = vmatprep.subr.mxu0 0.0
        %1608 = vmatpush1.msra.mxu0 0.0
        %1609 = vmatprep.subr.mxu0 0.0
        %1610 = vmatpush1.msra.mxu0 0.0
        %1611 = vmatprep.subr.mxu0 0.0
        %1612 = vmatpush1.msra.mxu0 0.0
        %1613 = vmatprep.subr.mxu0 0.0
        %1614 = vmatpush1.msra.mxu0 0.0
        %1615 = vmatprep.subr.mxu0 0.0
        %1616 = vmatpush1.msra.mxu0 0.0
        %1617 = vmatprep.subr.mxu0 0.0
        %1618 = vmatpush1.msra.mxu0 0.0
        %1619 = vmatprep.subr.mxu0 0.0
        %1620 = vmatpush1.msra.mxu0 0.0
        %1621 = vmatprep.subr.mxu0 0.0
        %1622 = vmatpush1.msra.mxu0 0.0
        %1623 = vmatprep.subr.mxu0 0.0
        %1624 = vmatpush1.msra.mxu0 0.0
        %1625 = vmatprep.mubr.f32.mxu0 0.0
        %1626 = vmatmul.mubr.f32.gmra.mrb[0].mxu0 %v1534
        %v1627 = vpop.f32.mrb[0].mxu0
        %v1628 = vadd.f32 %v1559, %v1627
        %v1629 = vpop.f32.mrb[0].mxu0
        %1630 = vmatprep.mubr.f32.mxu0 0.0
        %1631 = vmatmul.mubr.f32.gmra.mrb[0].mxu0 %v1535
        %v1632 = vpop.f32.mrb[0].mxu0
        %v1633 = vadd.f32 %v1559, %v1632
        %v1634 = vpop.f32.mrb[0].mxu0
        %1635 = vdwg.mxu0
        %v1636 = vadd.f32 %v1304, %v1628
        %v1637 = vadd.f32 %v1305, %v1633
        %v1638 = vmul.f32 %v1636, %v958
        %v1639 = vmul.f32 %v1637, %v963
        %v1640 = vld [vmem:[#allocation14] sm:$0xff]
        %v1641 = vld [vmem:[#allocation14 + $0x8] sm:$0xff]
        %v1642 = vld [vmem:[#allocation14 + $0x10] sm:$0xff]
        %v1643 = vld [vmem:[#allocation14 + $0x18] sm:$0xff]
        %v1644 = vld [vmem:[#allocation14 + $0x20] sm:$0xff]
        %v1645 = vld [vmem:[#allocation14 + $0x28] sm:$0xff]
        %v1646 = vld [vmem:[#allocation14 + $0x30] sm:$0xff]
        %v1647 = vld [vmem:[#allocation14 + $0x38] sm:$0xff]
        %v1648 = vld [vmem:[#allocation14 + $0x40] sm:$0xff]
        %v1649 = vld [vmem:[#allocation14 + $0x48] sm:$0xff]
        %v1650 = vld [vmem:[#allocation14 + $0x50] sm:$0xff]
        %v1651 = vld [vmem:[#allocation14 + $0x58] sm:$0xff]
        %v1652 = vld [vmem:[#allocation14 + $0x60] sm:$0xff]
        %v1653 = vld [vmem:[#allocation14 + $0x68] sm:$0xff]
        %v1654 = vld [vmem:[#allocation14 + $0x70] sm:$0xff]
        %v1655 = vld [vmem:[#allocation14 + $0x78] sm:$0xff]
        %v1656 = vld [vmem:[#allocation16] sm:$0x1]
        %v1658 = vlaneseq
        %v1659 = vshrl.u32 %v1658, 7
        %v1660 = vsub.s32 0, %v1659
        %v1661 = vrot.slane %v1656, %v1660
        %1663 = vmatprep.subr.mxu0 0.0
        %1664 = vmatpush1.msra.mxu0 %v1640
        %1665 = vmatprep.subr.mxu0 0.0
        %1666 = vmatpush1.msra.mxu0 %v1641
        %1667 = vmatprep.subr.mxu0 0.0
        %1668 = vmatpush1.msra.mxu0 %v1642
        %1669 = vmatprep.subr.mxu0 0.0
        %1670 = vmatpush1.msra.mxu0 %v1643
        %1671 = vmatprep.subr.mxu0 0.0
        %1672 = vmatpush1.msra.mxu0 %v1644
        %1673 = vmatprep.subr.mxu0 0.0
        %1674 = vmatpush1.msra.mxu0 %v1645
        %1675 = vmatprep.subr.mxu0 0.0
        %1676 = vmatpush1.msra.mxu0 %v1646
        %1677 = vmatprep.subr.mxu0 0.0
        %1678 = vmatpush1.msra.mxu0 %v1647
        %1679 = vmatprep.subr.mxu0 0.0
        %1680 = vmatpush1.msra.mxu0 %v1648
        %1681 = vmatprep.subr.mxu0 0.0
        %1682 = vmatpush1.msra.mxu0 %v1649
        %1683 = vmatprep.subr.mxu0 0.0
        %1684 = vmatpush1.msra.mxu0 %v1650
        %1685 = vmatprep.subr.mxu0 0.0
        %1686 = vmatpush1.msra.mxu0 %v1651
        %1687 = vmatprep.subr.mxu0 0.0
        %1688 = vmatpush1.msra.mxu0 %v1652
        %1689 = vmatprep.subr.mxu0 0.0
        %1690 = vmatpush1.msra.mxu0 %v1653
        %1691 = vmatprep.subr.mxu0 0.0
        %1692 = vmatpush1.msra.mxu0 %v1654
        %1693 = vmatprep.subr.mxu0 0.0
        %1694 = vmatpush1.msra.mxu0 %v1655
        %1695 = vmatprep.subr.mxu0 0.0
        %1696 = vmatpush1.msra.mxu0 0.0
        %1697 = vmatprep.subr.mxu0 0.0
        %1698 = vmatpush1.msra.mxu0 0.0
        %1699 = vmatprep.subr.mxu0 0.0
        %1700 = vmatpush1.msra.mxu0 0.0
        %1701 = vmatprep.subr.mxu0 0.0
        %1702 = vmatpush1.msra.mxu0 0.0
        %1703 = vmatprep.subr.mxu0 0.0
        %1704 = vmatpush1.msra.mxu0 0.0
        %1705 = vmatprep.subr.mxu0 0.0
        %1706 = vmatpush1.msra.mxu0 0.0
        %1707 = vmatprep.subr.mxu0 0.0
        %1708 = vmatpush1.msra.mxu0 0.0
        %1709 = vmatprep.subr.mxu0 0.0
        %1710 = vmatpush1.msra.mxu0 0.0
        %1711 = vmatprep.subr.mxu0 0.0
        %1712 = vmatpush1.msra.mxu0 0.0
        %1713 = vmatprep.subr.mxu0 0.0
        %1714 = vmatpush1.msra.mxu0 0.0
        %1715 = vmatprep.subr.mxu0 0.0
        %1716 = vmatpush1.msra.mxu0 0.0
        %1717 = vmatprep.subr.mxu0 0.0
        %1718 = vmatpush1.msra.mxu0 0.0
        %1719 = vmatprep.subr.mxu0 0.0
        %1720 = vmatpush1.msra.mxu0 0.0
        %1721 = vmatprep.subr.mxu0 0.0
        %1722 = vmatpush1.msra.mxu0 0.0
        %1723 = vmatprep.subr.mxu0 0.0
        %1724 = vmatpush1.msra.mxu0 0.0
        %1725 = vmatprep.subr.mxu0 0.0
        %1726 = vmatpush1.msra.mxu0 0.0
        %1727 = vmatprep.mubr.f32.mxu0 0.0
        %1728 = vmatmul.mubr.f32.gmra.mrb[0].mxu0 %v1638
        %v1729 = vpop.f32.mrb[0].mxu0
        %v1730 = vadd.f32 %v1661, %v1729
        %v1731 = vpop.f32.mrb[0].mxu0
        %1732 = vmatprep.mubr.f32.mxu0 0.0
        %1733 = vmatmul.mubr.f32.gmra.mrb[0].mxu0 %v1639
        %v1734 = vpop.f32.mrb[0].mxu0
        %v1735 = vadd.f32 %v1661, %v1734
        %v1736 = vpop.f32.mrb[0].mxu0
        %1737 = vdwg.mxu0
        %v1738 = vmul.f32 %v1730, %v958
        %v1739 = vmul.f32 %v1735, %v963
        %1740 = vst [vmem:[%s508] sm:$0xff] %v1738
        %1741 = vst [vmem:[%s508 + $0x8] sm:$0xff] %v1739
        %1742 = vmax.xlane.f32.xlu0 %v1738
        %v1743 = vpop.xlane.xlu0 %1742
        %1744 = vmax.xlane.f32.xlu0 %v1739
        %v1745 = vpop.xlane.xlu0 %1744
        %v1746 = vsub.f32 %v1738, %v1743
        %v1747 = vsub.f32 %v1739, %v1745
        %v1748 = vmul.f32 %v1746, 1.442695
        %v1749 = vpow.pop %v1748
        %v1750 = vmul.f32 %v1747, 1.442695
        %v1751 = vpow.pop %v1750
        %v1752 = vsel %vm523, 1, 0
        %vm1753 = vcmp.eq.s32.totalorder %v1752, 1
        %v1754 = vsel %vm1753, %v1749, 0.0
        %v1755 = vsel %vm1753, %v1751, 0.0
        %1756 = vadd.xlane.f32.xlu0 %v1754
        %v1757 = vpop.xlane.xlu0 %1756
        %1758 = vadd.xlane.f32.xlu0 %v1755
        %v1759 = vpop.xlane.xlu0 %1758
        %v1760 = vrcp.pop %v1757
        %v1761 = vrcp.pop %v1759
        %v1762 = vmul.f32 %v1754, %v1760
        %v1763 = vmul.f32 %v1755, %v1761
        %v1764 = vmul.f32 %v1762, %v958
        %v1765 = vmul.f32 %v1763, %v963
        %s1766 = scalar_lea.vmem [#allocation5], 128
        %v1767 = vld [vmem:[%s1766] sm:$0xff]
        %v1768 = vld [vmem:[%s1766 + $0x8] sm:$0xff]
        %v1769 = vld [vmem:[%s1766 + $0x10] sm:$0xff]
        %v1770 = vld [vmem:[%s1766 + $0x18] sm:$0xff]
        %v1771 = vld [vmem:[%s1766 + $0x20] sm:$0xff]
        %v1772 = vld [vmem:[%s1766 + $0x28] sm:$0xff]
        %v1773 = vld [vmem:[%s1766 + $0x30] sm:$0xff]
        %v1774 = vld [vmem:[%s1766 + $0x38] sm:$0xff]
        %v1775 = vld [vmem:[%s1766 + $0x40] sm:$0xff]
        %v1776 = vld [vmem:[%s1766 + $0x48] sm:$0xff]
        %v1777 = vld [vmem:[%s1766 + $0x50] sm:$0xff]
        %v1778 = vld [vmem:[%s1766 + $0x58] sm:$0xff]
        %v1779 = vld [vmem:[%s1766 + $0x60] sm:$0xff]
        %v1780 = vld [vmem:[%s1766 + $0x68] sm:$0xff]
        %v1781 = vld [vmem:[%s1766 + $0x70] sm:$0xff]
        %v1782 = vld [vmem:[%s1766 + $0x78] sm:$0xff]
        %s1783 = scalar_lea.vmem [#allocation7], 1
        %v1784 = vld [vmem:[%s1783] sm:$0x1]
        %v1786 = vlaneseq
        %v1787 = vshrl.u32 %v1786, 7
        %v1788 = vsub.s32 0, %v1787
        %v1789 = vrot.slane %v1784, %v1788
        %1791 = vmatprep.subr.mxu0 0.0
        %1792 = vmatpush1.msra.mxu0 %v1767
        %1793 = vmatprep.subr.mxu0 0.0
        %1794 = vmatpush1.msra.mxu0 %v1768
        %1795 = vmatprep.subr.mxu0 0.0
        %1796 = vmatpush1.msra.mxu0 %v1769
        %1797 = vmatprep.subr.mxu0 0.0
        %1798 = vmatpush1.msra.mxu0 %v1770
        %1799 = vmatprep.subr.mxu0 0.0
        %1800 = vmatpush1.msra.mxu0 %v1771
        %1801 = vmatprep.subr.mxu0 0.0
        %1802 = vmatpush1.msra.mxu0 %v1772
        %1803 = vmatprep.subr.mxu0 0.0
        %1804 = vmatpush1.msra.mxu0 %v1773
        %1805 = vmatprep.subr.mxu0 0.0
        %1806 = vmatpush1.msra.mxu0 %v1774
        %1807 = vmatprep.subr.mxu0 0.0
        %1808 = vmatpush1.msra.mxu0 %v1775
        %1809 = vmatprep.subr.mxu0 0.0
        %1810 = vmatpush1.msra.mxu0 %v1776
        %1811 = vmatprep.subr.mxu0 0.0
        %1812 = vmatpush1.msra.mxu0 %v1777
        %1813 = vmatprep.subr.mxu0 0.0
        %1814 = vmatpush1.msra.mxu0 %v1778
        %1815 = vmatprep.subr.mxu0 0.0
        %1816 = vmatpush1.msra.mxu0 %v1779
        %1817 = vmatprep.subr.mxu0 0.0
        %1818 = vmatpush1.msra.mxu0 %v1780
        %1819 = vmatprep.subr.mxu0 0.0
        %1820 = vmatpush1.msra.mxu0 %v1781
        %1821 = vmatprep.subr.mxu0 0.0
        %1822 = vmatpush1.msra.mxu0 %v1782
        %1823 = vmatprep.subr.mxu0 0.0
        %1824 = vmatpush1.msra.mxu0 0.0
        %1825 = vmatprep.subr.mxu0 0.0
        %1826 = vmatpush1.msra.mxu0 0.0
        %1827 = vmatprep.subr.mxu0 0.0
        %1828 = vmatpush1.msra.mxu0 0.0
        %1829 = vmatprep.subr.mxu0 0.0
        %1830 = vmatpush1.msra.mxu0 0.0
        %1831 = vmatprep.subr.mxu0 0.0
        %1832 = vmatpush1.msra.mxu0 0.0
        %1833 = vmatprep.subr.mxu0 0.0
        %1834 = vmatpush1.msra.mxu0 0.0
        %1835 = vmatprep.subr.mxu0 0.0
        %1836 = vmatpush1.msra.mxu0 0.0
        %1837 = vmatprep.subr.mxu0 0.0
        %1838 = vmatpush1.msra.mxu0 0.0
        %1839 = vmatprep.subr.mxu0 0.0
        %1840 = vmatpush1.msra.mxu0 0.0
        %1841 = vmatprep.subr.mxu0 0.0
        %1842 = vmatpush1.msra.mxu0 0.0
        %1843 = vmatprep.subr.mxu0 0.0
        %1844 = vmatpush1.msra.mxu0 0.0
        %1845 = vmatprep.subr.mxu0 0.0
        %1846 = vmatpush1.msra.mxu0 0.0
        %1847 = vmatprep.subr.mxu0 0.0
        %1848 = vmatpush1.msra.mxu0 0.0
        %1849 = vmatprep.subr.mxu0 0.0
        %1850 = vmatpush1.msra.mxu0 0.0
        %1851 = vmatprep.subr.mxu0 0.0
        %1852 = vmatpush1.msra.mxu0 0.0
        %1853 = vmatprep.subr.mxu0 0.0
        %1854 = vmatpush1.msra.mxu0 0.0
        %1855 = vmatprep.mubr.f32.mxu0 0.0
        %1856 = vmatmul.mubr.f32.gmra.mrb[0].mxu0 %v1764
        %v1857 = vpop.f32.mrb[0].mxu0
        %v1858 = vadd.f32 %v1789, %v1857
        %v1859 = vpop.f32.mrb[0].mxu0
        %1860 = vmatprep.mubr.f32.mxu0 0.0
        %1861 = vmatmul.mubr.f32.gmra.mrb[0].mxu0 %v1765
        %v1862 = vpop.f32.mrb[0].mxu0
        %v1863 = vadd.f32 %v1789, %v1862
        %v1864 = vpop.f32.mrb[0].mxu0
        %1865 = vdwg.mxu0
        %v1866 = vrot.slane %v1858, 7
        %v1867 = vrot.slane %v1863, 7
        %v1868 = vsel %vm624, %v1866, %v1867
        %v1869 = vsel %vm624, %v1867, %v1866
        %v1870 = vsel %vm631, %v1869, 0.0
        %v1871 = vsel %vm632, %v1868, 0.0
        %v1872 = vrot.slane %v1858, 1
        %v1873 = vrot.slane %v1863, 1
        %v1874 = vsel %vm637, %v1872, %v1873
        %v1875 = vsel %vm637, %v1873, %v1872
        %v1876 = vsel %vm644, %v1874, 0.0
        %v1877 = vsel %vm645, %v1875, 0.0
        %s1878 = scalar_lea.vmem [#allocation8], 1152
        %v1879 = vld [vmem:[%s1878] sm:$0xff]
        %v1880 = vld [vmem:[%s1878 + $0x8] sm:$0xff]
        %v1881 = vld [vmem:[%s1878 + $0x10] sm:$0xff]
        %v1882 = vld [vmem:[%s1878 + $0x18] sm:$0xff]
        %v1883 = vld [vmem:[%s1878 + $0x20] sm:$0xff]
        %v1884 = vld [vmem:[%s1878 + $0x28] sm:$0xff]
        %v1885 = vld [vmem:[%s1878 + $0x30] sm:$0xff]
        %v1886 = vld [vmem:[%s1878 + $0x38] sm:$0xff]
        %v1887 = vld [vmem:[%s1878 + $0x40] sm:$0xff]
        %v1888 = vld [vmem:[%s1878 + $0x48] sm:$0xff]
        %v1889 = vld [vmem:[%s1878 + $0x50] sm:$0xff]
        %v1890 = vld [vmem:[%s1878 + $0x58] sm:$0xff]
        %v1891 = vld [vmem:[%s1878 + $0x60] sm:$0xff]
        %v1892 = vld [vmem:[%s1878 + $0x68] sm:$0xff]
        %v1893 = vld [vmem:[%s1878 + $0x70] sm:$0xff]
        %v1894 = vld [vmem:[%s1878 + $0x78] sm:$0xff]
        %v1895 = vld [vmem:[%s1878 + $0x80] sm:$0xff]
        %v1896 = vld [vmem:[%s1878 + $0x88] sm:$0xff]
        %v1897 = vld [vmem:[%s1878 + $0x90] sm:$0xff]
        %v1898 = vld [vmem:[%s1878 + $0x98] sm:$0xff]
        %v1899 = vld [vmem:[%s1878 + $0xa0] sm:$0xff]
        %v1900 = vld [vmem:[%s1878 + $0xa8] sm:$0xff]
        %v1901 = vld [vmem:[%s1878 + $0xb0] sm:$0xff]
        %v1902 = vld [vmem:[%s1878 + $0xb8] sm:$0xff]
        %v1903 = vld [vmem:[%s1878 + $0xc0] sm:$0xff]
        %v1904 = vld [vmem:[%s1878 + $0xc8] sm:$0xff]
        %v1905 = vld [vmem:[%s1878 + $0xd0] sm:$0xff]
        %v1906 = vld [vmem:[%s1878 + $0xd8] sm:$0xff]
        %v1907 = vld [vmem:[%s1878 + $0xe0] sm:$0xff]
        %v1908 = vld [vmem:[%s1878 + $0xe8] sm:$0xff]
        %v1909 = vld [vmem:[%s1878 + $0xf0] sm:$0xff]
        %v1910 = vld [vmem:[%s1878 + $0xf8] sm:$0xff]
        %v1911 = vld [vmem:[%s1878 + $0x100] sm:$0xff]
        %v1912 = vld [vmem:[%s1878 + $0x108] sm:$0xff]
        %v1913 = vld [vmem:[%s1878 + $0x110] sm:$0xff]
        %v1914 = vld [vmem:[%s1878 + $0x118] sm:$0xff]
        %v1915 = vld [vmem:[%s1878 + $0x120] sm:$0xff]
        %v1916 = vld [vmem:[%s1878 + $0x128] sm:$0xff]
        %v1917 = vld [vmem:[%s1878 + $0x130] sm:$0xff]
        %v1918 = vld [vmem:[%s1878 + $0x138] sm:$0xff]
        %v1919 = vld [vmem:[%s1878 + $0x140] sm:$0xff]
        %v1920 = vld [vmem:[%s1878 + $0x148] sm:$0xff]
        %v1921 = vld [vmem:[%s1878 + $0x150] sm:$0xff]
        %v1922 = vld [vmem:[%s1878 + $0x158] sm:$0xff]
        %v1923 = vld [vmem:[%s1878 + $0x160] sm:$0xff]
        %v1924 = vld [vmem:[%s1878 + $0x168] sm:$0xff]
        %v1925 = vld [vmem:[%s1878 + $0x170] sm:$0xff]
        %v1926 = vld [vmem:[%s1878 + $0x178] sm:$0xff]
        %s1927 = scalar_lea.vmem [#allocation10], 3
        %v1928 = vld [vmem:[%s1927] sm:$0x1]
        %v1930 = vlaneseq
        %v1931 = vshrl.u32 %v1930, 7
        %v1932 = vsub.s32 0, %v1931
        %v1933 = vrot.slane %v1928, %v1932
        %1935 = vmatprep.subr.mxu0 0.0
        %1936 = vmatpush1.msra.mxu0 %v1879
        %1937 = vmatprep.subr.mxu0 0.0
        %1938 = vmatpush1.msra.mxu0 %v1880
        %1939 = vmatprep.subr.mxu0 0.0
        %1940 = vmatpush1.msra.mxu0 %v1881
        %1941 = vmatprep.subr.mxu0 0.0
        %1942 = vmatpush1.msra.mxu0 %v1882
        %1943 = vmatprep.subr.mxu0 0.0
        %1944 = vmatpush1.msra.mxu0 %v1883
        %1945 = vmatprep.subr.mxu0 0.0
        %1946 = vmatpush1.msra.mxu0 %v1884
        %1947 = vmatprep.subr.mxu0 0.0
        %1948 = vmatpush1.msra.mxu0 %v1885
        %1949 = vmatprep.subr.mxu0 0.0
        %1950 = vmatpush1.msra.mxu0 %v1886
        %1951 = vmatprep.subr.mxu0 0.0
        %1952 = vmatpush1.msra.mxu0 %v1887
        %1953 = vmatprep.subr.mxu0 0.0
        %1954 = vmatpush1.msra.mxu0 %v1888
        %1955 = vmatprep.subr.mxu0 0.0
        %1956 = vmatpush1.msra.mxu0 %v1889
        %1957 = vmatprep.subr.mxu0 0.0
        %1958 = vmatpush1.msra.mxu0 %v1890
        %1959 = vmatprep.subr.mxu0 0.0
        %1960 = vmatpush1.msra.mxu0 %v1891
        %1961 = vmatprep.subr.mxu0 0.0
        %1962 = vmatpush1.msra.mxu0 %v1892
        %1963 = vmatprep.subr.mxu0 0.0
        %1964 = vmatpush1.msra.mxu0 %v1893
        %1965 = vmatprep.subr.mxu0 0.0
        %1966 = vmatpush1.msra.mxu0 %v1894
        %1967 = vmatprep.subr.mxu0 0.0
        %1968 = vmatpush1.msra.mxu0 %v1895
        %1969 = vmatprep.subr.mxu0 0.0
        %1970 = vmatpush1.msra.mxu0 %v1896
        %1971 = vmatprep.subr.mxu0 0.0
        %1972 = vmatpush1.msra.mxu0 %v1897
        %1973 = vmatprep.subr.mxu0 0.0
        %1974 = vmatpush1.msra.mxu0 %v1898
        %1975 = vmatprep.subr.mxu0 0.0
        %1976 = vmatpush1.msra.mxu0 %v1899
        %1977 = vmatprep.subr.mxu0 0.0
        %1978 = vmatpush1.msra.mxu0 %v1900
        %1979 = vmatprep.subr.mxu0 0.0
        %1980 = vmatpush1.msra.mxu0 %v1901
        %1981 = vmatprep.subr.mxu0 0.0
        %1982 = vmatpush1.msra.mxu0 %v1902
        %1983 = vmatprep.subr.mxu0 0.0
        %1984 = vmatpush1.msra.mxu0 %v1903
        %1985 = vmatprep.subr.mxu0 0.0
        %1986 = vmatpush1.msra.mxu0 %v1904
        %1987 = vmatprep.subr.mxu0 0.0
        %1988 = vmatpush1.msra.mxu0 %v1905
        %1989 = vmatprep.subr.mxu0 0.0
        %1990 = vmatpush1.msra.mxu0 %v1906
        %1991 = vmatprep.subr.mxu0 0.0
        %1992 = vmatpush1.msra.mxu0 %v1907
        %1993 = vmatprep.subr.mxu0 0.0
        %1994 = vmatpush1.msra.mxu0 %v1908
        %1995 = vmatprep.subr.mxu0 0.0
        %1996 = vmatpush1.msra.mxu0 %v1909
        %1997 = vmatprep.subr.mxu0 0.0
        %1998 = vmatpush1.msra.mxu0 %v1910
        %1999 = vmatprep.mubr.f32.mxu0 %v1858
        %2000 = vmatmul.mubr.f32.gmra.mrb[0].mxu0 %v1870
        %v2001 = vpop.f32.mrb[0].mxu0
        %v2002 = vadd.f32 %v1933, %v2001
        %v2003 = vpop.f32.mrb[0].mxu0
        %2004 = vmatprep.mubr.f32.mxu0 %v1863
        %2005 = vmatmul.mubr.f32.gmra.mrb[0].mxu0 %v1871
        %v2006 = vpop.f32.mrb[0].mxu0
        %v2007 = vadd.f32 %v1933, %v2006
        %v2008 = vpop.f32.mrb[0].mxu0
        %2009 = vdwg.mxu0
        %2010 = vmatprep.subr.mxu0 0.0
        %2011 = vmatpush1.msra.mxu0 %v1911
        %2012 = vmatprep.subr.mxu0 0.0
        %2013 = vmatpush1.msra.mxu0 %v1912
        %2014 = vmatprep.subr.mxu0 0.0
        %2015 = vmatpush1.msra.mxu0 %v1913
        %2016 = vmatprep.subr.mxu0 0.0
        %2017 = vmatpush1.msra.mxu0 %v1914
        %2018 = vmatprep.subr.mxu0 0.0
        %2019 = vmatpush1.msra.mxu0 %v1915
        %2020 = vmatprep.subr.mxu0 0.0
        %2021 = vmatpush1.msra.mxu0 %v1916
        %2022 = vmatprep.subr.mxu0 0.0
        %2023 = vmatpush1.msra.mxu0 %v1917
        %2024 = vmatprep.subr.mxu0 0.0
        %2025 = vmatpush1.msra.mxu0 %v1918
        %2026 = vmatprep.subr.mxu0 0.0
        %2027 = vmatpush1.msra.mxu0 %v1919
        %2028 = vmatprep.subr.mxu0 0.0
        %2029 = vmatpush1.msra.mxu0 %v1920
        %2030 = vmatprep.subr.mxu0 0.0
        %2031 = vmatpush1.msra.mxu0 %v1921
        %2032 = vmatprep.subr.mxu0 0.0
        %2033 = vmatpush1.msra.mxu0 %v1922
        %2034 = vmatprep.subr.mxu0 0.0
        %2035 = vmatpush1.msra.mxu0 %v1923
        %2036 = vmatprep.subr.mxu0 0.0
        %2037 = vmatpush1.msra.mxu0 %v1924
        %2038 = vmatprep.subr.mxu0 0.0
        %2039 = vmatpush1.msra.mxu0 %v1925
        %2040 = vmatprep.subr.mxu0 0.0
        %2041 = vmatpush1.msra.mxu0 %v1926
        %2042 = vmatprep.subr.mxu0 0.0
        %2043 = vmatpush1.msra.mxu0 0.0
        %2044 = vmatprep.subr.mxu0 0.0
        %2045 = vmatpush1.msra.mxu0 0.0
        %2046 = vmatprep.subr.mxu0 0.0
        %2047 = vmatpush1.msra.mxu0 0.0
        %2048 = vmatprep.subr.mxu0 0.0
        %2049 = vmatpush1.msra.mxu0 0.0
        %2050 = vmatprep.subr.mxu0 0.0
        %2051 = vmatpush1.msra.mxu0 0.0
        %2052 = vmatprep.subr.mxu0 0.0
        %2053 = vmatpush1.msra.mxu0 0.0
        %2054 = vmatprep.subr.mxu0 0.0
        %2055 = vmatpush1.msra.mxu0 0.0
        %2056 = vmatprep.subr.mxu0 0.0
        %2057 = vmatpush1.msra.mxu0 0.0
        %2058 = vmatprep.subr.mxu0 0.0
        %2059 = vmatpush1.msra.mxu0 0.0
        %2060 = vmatprep.subr.mxu0 0.0
        %2061 = vmatpush1.msra.mxu0 0.0
        %2062 = vmatprep.subr.mxu0 0.0
        %2063 = vmatpush1.msra.mxu0 0.0
        %2064 = vmatprep.subr.mxu0 0.0
        %2065 = vmatpush1.msra.mxu0 0.0
        %2066 = vmatprep.subr.mxu0 0.0
        %2067 = vmatpush1.msra.mxu0 0.0
        %2068 = vmatprep.subr.mxu0 0.0
        %2069 = vmatpush1.msra.mxu0 0.0
        %2070 = vmatprep.subr.mxu0 0.0
        %2071 = vmatpush1.msra.mxu0 0.0
        %2072 = vmatprep.subr.mxu0 0.0
        %2073 = vmatpush1.msra.mxu0 0.0
        %2074 = vmatprep.mubr.f32.mxu0 0.0
        %2075 = vmatmul.mubr.f32.gmra.mrb[0].mxu0 %v1876
        %v2076 = vpop.f32.mrb[0].mxu0
        %v2077 = vadd.f32 %v2002, %v2076
        %v2078 = vpop.f32.mrb[0].mxu0
        %2079 = vmatprep.mubr.f32.mxu0 0.0
        %2080 = vmatmul.mubr.f32.gmra.mrb[0].mxu0 %v1877
        %v2081 = vpop.f32.mrb[0].mxu0
        %v2082 = vadd.f32 %v2007, %v2081
        %v2083 = vpop.f32.mrb[0].mxu0
        %2084 = vdwg.mxu0
        %v2085 = vmax.f32 %v2077, 0.0
        %v2086 = vmax.f32 %v2082, 0.0
        %s2087 = scalar_lea.vmem [#allocation11], 384
        %v2088 = vld [vmem:[%s2087] sm:$0xff]
        %v2089 = vld [vmem:[%s2087 + $0x8] sm:$0xff]
        %v2090 = vld [vmem:[%s2087 + $0x10] sm:$0xff]
        %v2091 = vld [vmem:[%s2087 + $0x18] sm:$0xff]
        %v2092 = vld [vmem:[%s2087 + $0x20] sm:$0xff]
        %v2093 = vld [vmem:[%s2087 + $0x28] sm:$0xff]
        %v2094 = vld [vmem:[%s2087 + $0x30] sm:$0xff]
        %v2095 = vld [vmem:[%s2087 + $0x38] sm:$0xff]
        %v2096 = vld [vmem:[%s2087 + $0x40] sm:$0xff]
        %v2097 = vld [vmem:[%s2087 + $0x48] sm:$0xff]
        %v2098 = vld [vmem:[%s2087 + $0x50] sm:$0xff]
        %v2099 = vld [vmem:[%s2087 + $0x58] sm:$0xff]
        %v2100 = vld [vmem:[%s2087 + $0x60] sm:$0xff]
        %v2101 = vld [vmem:[%s2087 + $0x68] sm:$0xff]
        %v2102 = vld [vmem:[%s2087 + $0x70] sm:$0xff]
        %v2103 = vld [vmem:[%s2087 + $0x78] sm:$0xff]
        %s2104 = scalar_lea.vmem [#allocation13], 3
        %v2105 = vld [vmem:[%s2104] sm:$0x1]
        %v2107 = vlaneseq
        %v2108 = vshrl.u32 %v2107, 7
        %v2109 = vsub.s32 0, %v2108
        %v2110 = vrot.slane %v2105, %v2109
        %2112 = vmatprep.subr.mxu0 0.0
        %2113 = vmatpush1.msra.mxu0 %v2088
        %2114 = vmatprep.subr.mxu0 0.0
        %2115 = vmatpush1.msra.mxu0 %v2089
        %2116 = vmatprep.subr.mxu0 0.0
        %2117 = vmatpush1.msra.mxu0 %v2090
        %2118 = vmatprep.subr.mxu0 0.0
        %2119 = vmatpush1.msra.mxu0 %v2091
        %2120 = vmatprep.subr.mxu0 0.0
        %2121 = vmatpush1.msra.mxu0 %v2092
        %2122 = vmatprep.subr.mxu0 0.0
        %2123 = vmatpush1.msra.mxu0 %v2093
        %2124 = vmatprep.subr.mxu0 0.0
        %2125 = vmatpush1.msra.mxu0 %v2094
        %2126 = vmatprep.subr.mxu0 0.0
        %2127 = vmatpush1.msra.mxu0 %v2095
        %2128 = vmatprep.subr.mxu0 0.0
        %2129 = vmatpush1.msra.mxu0 %v2096
        %2130 = vmatprep.subr.mxu0 0.0
        %2131 = vmatpush1.msra.mxu0 %v2097
        %2132 = vmatprep.subr.mxu0 0.0
        %2133 = vmatpush1.msra.mxu0 %v2098
        %2134 = vmatprep.subr.mxu0 0.0
        %2135 = vmatpush1.msra.mxu0 %v2099
        %2136 = vmatprep.subr.mxu0 0.0
        %2137 = vmatpush1.msra.mxu0 %v2100
        %2138 = vmatprep.subr.mxu0 0.0
        %2139 = vmatpush1.msra.mxu0 %v2101
        %2140 = vmatprep.subr.mxu0 0.0
        %2141 = vmatpush1.msra.mxu0 %v2102
        %2142 = vmatprep.subr.mxu0 0.0
        %2143 = vmatpush1.msra.mxu0 %v2103
        %2144 = vmatprep.subr.mxu0 0.0
        %2145 = vmatpush1.msra.mxu0 0.0
        %2146 = vmatprep.subr.mxu0 0.0
        %2147 = vmatpush1.msra.mxu0 0.0
        %2148 = vmatprep.subr.mxu0 0.0
        %2149 = vmatpush1.msra.mxu0 0.0
        %2150 = vmatprep.subr.mxu0 0.0
        %2151 = vmatpush1.msra.mxu0 0.0
        %2152 = vmatprep.subr.mxu0 0.0
        %2153 = vmatpush1.msra.mxu0 0.0
        %2154 = vmatprep.subr.mxu0 0.0
        %2155 = vmatpush1.msra.mxu0 0.0
        %2156 = vmatprep.subr.mxu0 0.0
        %2157 = vmatpush1.msra.mxu0 0.0
        %2158 = vmatprep.subr.mxu0 0.0
        %2159 = vmatpush1.msra.mxu0 0.0
        %2160 = vmatprep.subr.mxu0 0.0
        %2161 = vmatpush1.msra.mxu0 0.0
        %2162 = vmatprep.subr.mxu0 0.0
        %2163 = vmatpush1.msra.mxu0 0.0
        %2164 = vmatprep.subr.mxu0 0.0
        %2165 = vmatpush1.msra.mxu0 0.0
        %2166 = vmatprep.subr.mxu0 0.0
        %2167 = vmatpush1.msra.mxu0 0.0
        %2168 = vmatprep.subr.mxu0 0.0
        %2169 = vmatpush1.msra.mxu0 0.0
        %2170 = vmatprep.subr.mxu0 0.0
        %2171 = vmatpush1.msra.mxu0 0.0
        %2172 = vmatprep.subr.mxu0 0.0
        %2173 = vmatpush1.msra.mxu0 0.0
        %2174 = vmatprep.subr.mxu0 0.0
        %2175 = vmatpush1.msra.mxu0 0.0
        %2176 = vmatprep.mubr.f32.mxu0 0.0
        %2177 = vmatmul.mubr.f32.gmra.mrb[0].mxu0 %v2085
        %v2178 = vpop.f32.mrb[0].mxu0
        %v2179 = vadd.f32 %v2110, %v2178
        %v2180 = vpop.f32.mrb[0].mxu0
        %2181 = vmatprep.mubr.f32.mxu0 0.0
        %2182 = vmatmul.mubr.f32.gmra.mrb[0].mxu0 %v2086
        %v2183 = vpop.f32.mrb[0].mxu0
        %v2184 = vadd.f32 %v2110, %v2183
        %v2185 = vpop.f32.mrb[0].mxu0
        %2186 = vdwg.mxu0
        %v2187 = vadd.f32 %v1858, %v2179
        %v2188 = vadd.f32 %v1863, %v2184
        %v2189 = vmul.f32 %v2187, %v958
        %v2190 = vmul.f32 %v2188, %v963
        %v2191 = vrot.slane %v2189, 6
        %v2192 = vrot.slane %v2190, 6
        %v2193 = vsel %vm969, %v2191, %v2192
        %v2194 = vsel %vm969, %v2192, %v2191
        %v2195 = vsel %vm976, %v2194, 0.0
        %v2196 = vsel %vm977, %v2193, 0.0
        %v2197 = vrot.slane %v2189, 2
        %v2198 = vrot.slane %v2190, 2
        %v2199 = vsel %vm982, %v2197, %v2198
        %v2200 = vsel %vm982, %v2198, %v2197
        %v2201 = vsel %vm989, %v2199, 0.0
        %v2202 = vsel %vm990, %v2200, 0.0
        %s2203 = scalar_lea.vmem [#allocation8], 1536
        %v2204 = vld [vmem:[%s2203] sm:$0xff]
        %v2205 = vld [vmem:[%s2203 + $0x8] sm:$0xff]
        %v2206 = vld [vmem:[%s2203 + $0x10] sm:$0xff]
        %v2207 = vld [vmem:[%s2203 + $0x18] sm:$0xff]
        %v2208 = vld [vmem:[%s2203 + $0x20] sm:$0xff]
        %v2209 = vld [vmem:[%s2203 + $0x28] sm:$0xff]
        %v2210 = vld [vmem:[%s2203 + $0x30] sm:$0xff]
        %v2211 = vld [vmem:[%s2203 + $0x38] sm:$0xff]
        %v2212 = vld [vmem:[%s2203 + $0x40] sm:$0xff]
        %v2213 = vld [vmem:[%s2203 + $0x48] sm:$0xff]
        %v2214 = vld [vmem:[%s2203 + $0x50] sm:$0xff]
        %v2215 = vld [vmem:[%s2203 + $0x58] sm:$0xff]
        %v2216 = vld [vmem:[%s2203 + $0x60] sm:$0xff]
        %v2217 = vld [vmem:[%s2203 + $0x68] sm:$0xff]
        %v2218 = vld [vmem:[%s2203 + $0x70] sm:$0xff]
        %v2219 = vld [vmem:[%s2203 + $0x78] sm:$0xff]
        %v2220 = vld [vmem:[%s2203 + $0x80] sm:$0xff]
        %v2221 = vld [vmem:[%s2203 + $0x88] sm:$0xff]
        %v2222 = vld [vmem:[%s2203 + $0x90] sm:$0xff]
        %v2223 = vld [vmem:[%s2203 + $0x98] sm:$0xff]
        %v2224 = vld [vmem:[%s2203 + $0xa0] sm:$0xff]
        %v2225 = vld [vmem:[%s2203 + $0xa8] sm:$0xff]
        %v2226 = vld [vmem:[%s2203 + $0xb0] sm:$0xff]
        %v2227 = vld [vmem:[%s2203 + $0xb8] sm:$0xff]
        %v2228 = vld [vmem:[%s2203 + $0xc0] sm:$0xff]
        %v2229 = vld [vmem:[%s2203 + $0xc8] sm:$0xff]
        %v2230 = vld [vmem:[%s2203 + $0xd0] sm:$0xff]
        %v2231 = vld [vmem:[%s2203 + $0xd8] sm:$0xff]
        %v2232 = vld [vmem:[%s2203 + $0xe0] sm:$0xff]
        %v2233 = vld [vmem:[%s2203 + $0xe8] sm:$0xff]
        %v2234 = vld [vmem:[%s2203 + $0xf0] sm:$0xff]
        %v2235 = vld [vmem:[%s2203 + $0xf8] sm:$0xff]
        %v2236 = vld [vmem:[%s2203 + $0x100] sm:$0xff]
        %v2237 = vld [vmem:[%s2203 + $0x108] sm:$0xff]
        %v2238 = vld [vmem:[%s2203 + $0x110] sm:$0xff]
        %v2239 = vld [vmem:[%s2203 + $0x118] sm:$0xff]
        %v2240 = vld [vmem:[%s2203 + $0x120] sm:$0xff]
        %v2241 = vld [vmem:[%s2203 + $0x128] sm:$0xff]
        %v2242 = vld [vmem:[%s2203 + $0x130] sm:$0xff]
        %v2243 = vld [vmem:[%s2203 + $0x138] sm:$0xff]
        %v2244 = vld [vmem:[%s2203 + $0x140] sm:$0xff]
        %v2245 = vld [vmem:[%s2203 + $0x148] sm:$0xff]
        %v2246 = vld [vmem:[%s2203 + $0x150] sm:$0xff]
        %v2247 = vld [vmem:[%s2203 + $0x158] sm:$0xff]
        %v2248 = vld [vmem:[%s2203 + $0x160] sm:$0xff]
        %v2249 = vld [vmem:[%s2203 + $0x168] sm:$0xff]
        %v2250 = vld [vmem:[%s2203 + $0x170] sm:$0xff]
        %v2251 = vld [vmem:[%s2203 + $0x178] sm:$0xff]
        %s2252 = scalar_lea.vmem [#allocation10], 4
        %v2253 = vld [vmem:[%s2252] sm:$0x1]
        %v2255 = vlaneseq
        %v2256 = vshrl.u32 %v2255, 7
        %v2257 = vsub.s32 0, %v2256
        %v2258 = vrot.slane %v2253, %v2257
        %2260 = vmatprep.subr.mxu0 0.0
        %2261 = vmatpush1.msra.mxu0 %v2204
        %2262 = vmatprep.subr.mxu0 0.0
        %2263 = vmatpush1.msra.mxu0 %v2205
        %2264 = vmatprep.subr.mxu0 0.0
        %2265 = vmatpush1.msra.mxu0 %v2206
        %2266 = vmatprep.subr.mxu0 0.0
        %2267 = vmatpush1.msra.mxu0 %v2207
        %2268 = vmatprep.subr.mxu0 0.0
        %2269 = vmatpush1.msra.mxu0 %v2208
        %2270 = vmatprep.subr.mxu0 0.0
        %2271 = vmatpush1.msra.mxu0 %v2209
        %2272 = vmatprep.subr.mxu0 0.0
        %2273 = vmatpush1.msra.mxu0 %v2210
        %2274 = vmatprep.subr.mxu0 0.0
        %2275 = vmatpush1.msra.mxu0 %v2211
        %2276 = vmatprep.subr.mxu0 0.0
        %2277 = vmatpush1.msra.mxu0 %v2212
        %2278 = vmatprep.subr.mxu0 0.0
        %2279 = vmatpush1.msra.mxu0 %v2213
        %2280 = vmatprep.subr.mxu0 0.0
        %2281 = vmatpush1.msra.mxu0 %v2214
        %2282 = vmatprep.subr.mxu0 0.0
        %2283 = vmatpush1.msra.mxu0 %v2215
        %2284 = vmatprep.subr.mxu0 0.0
        %2285 = vmatpush1.msra.mxu0 %v2216
        %2286 = vmatprep.subr.mxu0 0.0
        %2287 = vmatpush1.msra.mxu0 %v2217
        %2288 = vmatprep.subr.mxu0 0.0
        %2289 = vmatpush1.msra.mxu0 %v2218
        %2290 = vmatprep.subr.mxu0 0.0
        %2291 = vmatpush1.msra.mxu0 %v2219
        %2292 = vmatprep.subr.mxu0 0.0
        %2293 = vmatpush1.msra.mxu0 %v2220
        %2294 = vmatprep.subr.mxu0 0.0
        %2295 = vmatpush1.msra.mxu0 %v2221
        %2296 = vmatprep.subr.mxu0 0.0
        %2297 = vmatpush1.msra.mxu0 %v2222
        %2298 = vmatprep.subr.mxu0 0.0
        %2299 = vmatpush1.msra.mxu0 %v2223
        %2300 = vmatprep.subr.mxu0 0.0
        %2301 = vmatpush1.msra.mxu0 %v2224
        %2302 = vmatprep.subr.mxu0 0.0
        %2303 = vmatpush1.msra.mxu0 %v2225
        %2304 = vmatprep.subr.mxu0 0.0
        %2305 = vmatpush1.msra.mxu0 %v2226
        %2306 = vmatprep.subr.mxu0 0.0
        %2307 = vmatpush1.msra.mxu0 %v2227
        %2308 = vmatprep.subr.mxu0 0.0
        %2309 = vmatpush1.msra.mxu0 %v2228
        %2310 = vmatprep.subr.mxu0 0.0
        %2311 = vmatpush1.msra.mxu0 %v2229
        %2312 = vmatprep.subr.mxu0 0.0
        %2313 = vmatpush1.msra.mxu0 %v2230
        %2314 = vmatprep.subr.mxu0 0.0
        %2315 = vmatpush1.msra.mxu0 %v2231
        %2316 = vmatprep.subr.mxu0 0.0
        %2317 = vmatpush1.msra.mxu0 %v2232
        %2318 = vmatprep.subr.mxu0 0.0
        %2319 = vmatpush1.msra.mxu0 %v2233
        %2320 = vmatprep.subr.mxu0 0.0
        %2321 = vmatpush1.msra.mxu0 %v2234
        %2322 = vmatprep.subr.mxu0 0.0
        %2323 = vmatpush1.msra.mxu0 %v2235
        %2324 = vmatprep.mubr.f32.mxu0 %v2189
        %2325 = vmatmul.mubr.f32.gmra.mrb[0].mxu0 %v2195
        %v2326 = vpop.f32.mrb[0].mxu0
        %v2327 = vadd.f32 %v2258, %v2326
        %v2328 = vpop.f32.mrb[0].mxu0
        %2329 = vmatprep.mubr.f32.mxu0 %v2190
        %2330 = vmatmul.mubr.f32.gmra.mrb[0].mxu0 %v2196
        %v2331 = vpop.f32.mrb[0].mxu0
        %v2332 = vadd.f32 %v2258, %v2331
        %v2333 = vpop.f32.mrb[0].mxu0
        %2334 = vdwg.mxu0
        %2335 = vmatprep.subr.mxu0 0.0
        %2336 = vmatpush1.msra.mxu0 %v2236
        %2337 = vmatprep.subr.mxu0 0.0
        %2338 = vmatpush1.msra.mxu0 %v2237
        %2339 = vmatprep.subr.mxu0 0.0
        %2340 = vmatpush1.msra.mxu0 %v2238
        %2341 = vmatprep.subr.mxu0 0.0
        %2342 = vmatpush1.msra.mxu0 %v2239
        %2343 = vmatprep.subr.mxu0 0.0
        %2344 = vmatpush1.msra.mxu0 %v2240
        %2345 = vmatprep.subr.mxu0 0.0
        %2346 = vmatpush1.msra.mxu0 %v2241
        %2347 = vmatprep.subr.mxu0 0.0
        %2348 = vmatpush1.msra.mxu0 %v2242
        %2349 = vmatprep.subr.mxu0 0.0
        %2350 = vmatpush1.msra.mxu0 %v2243
        %2351 = vmatprep.subr.mxu0 0.0
        %2352 = vmatpush1.msra.mxu0 %v2244
        %2353 = vmatprep.subr.mxu0 0.0
        %2354 = vmatpush1.msra.mxu0 %v2245
        %2355 = vmatprep.subr.mxu0 0.0
        %2356 = vmatpush1.msra.mxu0 %v2246
        %2357 = vmatprep.subr.mxu0 0.0
        %2358 = vmatpush1.msra.mxu0 %v2247
        %2359 = vmatprep.subr.mxu0 0.0
        %2360 = vmatpush1.msra.mxu0 %v2248
        %2361 = vmatprep.subr.mxu0 0.0
        %2362 = vmatpush1.msra.mxu0 %v2249
        %2363 = vmatprep.subr.mxu0 0.0
        %2364 = vmatpush1.msra.mxu0 %v2250
        %2365 = vmatprep.subr.mxu0 0.0
        %2366 = vmatpush1.msra.mxu0 %v2251
        %2367 = vmatprep.subr.mxu0 0.0
        %2368 = vmatpush1.msra.mxu0 0.0
        %2369 = vmatprep.subr.mxu0 0.0
        %2370 = vmatpush1.msra.mxu0 0.0
        %2371 = vmatprep.subr.mxu0 0.0
        %2372 = vmatpush1.msra.mxu0 0.0
        %2373 = vmatprep.subr.mxu0 0.0
        %2374 = vmatpush1.msra.mxu0 0.0
        %2375 = vmatprep.subr.mxu0 0.0
        %2376 = vmatpush1.msra.mxu0 0.0
        %2377 = vmatprep.subr.mxu0 0.0
        %2378 = vmatpush1.msra.mxu0 0.0
        %2379 = vmatprep.subr.mxu0 0.0
        %2380 = vmatpush1.msra.mxu0 0.0
        %2381 = vmatprep.subr.mxu0 0.0
        %2382 = vmatpush1.msra.mxu0 0.0
        %2383 = vmatprep.subr.mxu0 0.0
        %2384 = vmatpush1.msra.mxu0 0.0
        %2385 = vmatprep.subr.mxu0 0.0
        %2386 = vmatpush1.msra.mxu0 0.0
        %2387 = vmatprep.subr.mxu0 0.0
        %2388 = vmatpush1.msra.mxu0 0.0
        %2389 = vmatprep.subr.mxu0 0.0
        %2390 = vmatpush1.msra.mxu0 0.0
        %2391 = vmatprep.subr.mxu0 0.0
        %2392 = vmatpush1.msra.mxu0 0.0
        %2393 = vmatprep.subr.mxu0 0.0
        %2394 = vmatpush1.msra.mxu0 0.0
        %2395 = vmatprep.subr.mxu0 0.0
        %2396 = vmatpush1.msra.mxu0 0.0
        %2397 = vmatprep.subr.mxu0 0.0
        %2398 = vmatpush1.msra.mxu0 0.0
        %2399 = vmatprep.mubr.f32.mxu0 0.0
        %2400 = vmatmul.mubr.f32.gmra.mrb[0].mxu0 %v2201
        %v2401 = vpop.f32.mrb[0].mxu0
        %v2402 = vadd.f32 %v2327, %v2401
        %v2403 = vpop.f32.mrb[0].mxu0
        %2404 = vmatprep.mubr.f32.mxu0 0.0
        %2405 = vmatmul.mubr.f32.gmra.mrb[0].mxu0 %v2202
        %v2406 = vpop.f32.mrb[0].mxu0
        %v2407 = vadd.f32 %v2332, %v2406
        %v2408 = vpop.f32.mrb[0].mxu0
        %2409 = vdwg.mxu0
        %v2410 = vmax.f32 %v2402, 0.0
        %v2411 = vmax.f32 %v2407, 0.0
        %s2412 = scalar_lea.vmem [#allocation11], 512
        %v2413 = vld [vmem:[%s2412] sm:$0xff]
        %v2414 = vld [vmem:[%s2412 + $0x8] sm:$0xff]
        %v2415 = vld [vmem:[%s2412 + $0x10] sm:$0xff]
        %v2416 = vld [vmem:[%s2412 + $0x18] sm:$0xff]
        %v2417 = vld [vmem:[%s2412 + $0x20] sm:$0xff]
        %v2418 = vld [vmem:[%s2412 + $0x28] sm:$0xff]
        %v2419 = vld [vmem:[%s2412 + $0x30] sm:$0xff]
        %v2420 = vld [vmem:[%s2412 + $0x38] sm:$0xff]
        %v2421 = vld [vmem:[%s2412 + $0x40] sm:$0xff]
        %v2422 = vld [vmem:[%s2412 + $0x48] sm:$0xff]
        %v2423 = vld [vmem:[%s2412 + $0x50] sm:$0xff]
        %v2424 = vld [vmem:[%s2412 + $0x58] sm:$0xff]
        %v2425 = vld [vmem:[%s2412 + $0x60] sm:$0xff]
        %v2426 = vld [vmem:[%s2412 + $0x68] sm:$0xff]
        %v2427 = vld [vmem:[%s2412 + $0x70] sm:$0xff]
        %v2428 = vld [vmem:[%s2412 + $0x78] sm:$0xff]
        %s2429 = scalar_lea.vmem [#allocation13], 4
        %v2430 = vld [vmem:[%s2429] sm:$0x1]
        %v2432 = vlaneseq
        %v2433 = vshrl.u32 %v2432, 7
        %v2434 = vsub.s32 0, %v2433
        %v2435 = vrot.slane %v2430, %v2434
        %2437 = vmatprep.subr.mxu0 0.0
        %2438 = vmatpush1.msra.mxu0 %v2413
        %2439 = vmatprep.subr.mxu0 0.0
        %2440 = vmatpush1.msra.mxu0 %v2414
        %2441 = vmatprep.subr.mxu0 0.0
        %2442 = vmatpush1.msra.mxu0 %v2415
        %2443 = vmatprep.subr.mxu0 0.0
        %2444 = vmatpush1.msra.mxu0 %v2416
        %2445 = vmatprep.subr.mxu0 0.0
        %2446 = vmatpush1.msra.mxu0 %v2417
        %2447 = vmatprep.subr.mxu0 0.0
        %2448 = vmatpush1.msra.mxu0 %v2418
        %2449 = vmatprep.subr.mxu0 0.0
        %2450 = vmatpush1.msra.mxu0 %v2419
        %2451 = vmatprep.subr.mxu0 0.0
        %2452 = vmatpush1.msra.mxu0 %v2420
        %2453 = vmatprep.subr.mxu0 0.0
        %2454 = vmatpush1.msra.mxu0 %v2421
        %2455 = vmatprep.subr.mxu0 0.0
        %2456 = vmatpush1.msra.mxu0 %v2422
        %2457 = vmatprep.subr.mxu0 0.0
        %2458 = vmatpush1.msra.mxu0 %v2423
        %2459 = vmatprep.subr.mxu0 0.0
        %2460 = vmatpush1.msra.mxu0 %v2424
        %2461 = vmatprep.subr.mxu0 0.0
        %2462 = vmatpush1.msra.mxu0 %v2425
        %2463 = vmatprep.subr.mxu0 0.0
        %2464 = vmatpush1.msra.mxu0 %v2426
        %2465 = vmatprep.subr.mxu0 0.0
        %2466 = vmatpush1.msra.mxu0 %v2427
        %2467 = vmatprep.subr.mxu0 0.0
        %2468 = vmatpush1.msra.mxu0 %v2428
        %2469 = vmatprep.subr.mxu0 0.0
        %2470 = vmatpush1.msra.mxu0 0.0
        %2471 = vmatprep.subr.mxu0 0.0
        %2472 = vmatpush1.msra.mxu0 0.0
        %2473 = vmatprep.subr.mxu0 0.0
        %2474 = vmatpush1.msra.mxu0 0.0
        %2475 = vmatprep.subr.mxu0 0.0
        %2476 = vmatpush1.msra.mxu0 0.0
        %2477 = vmatprep.subr.mxu0 0.0
        %2478 = vmatpush1.msra.mxu0 0.0
        %2479 = vmatprep.subr.mxu0 0.0
        %2480 = vmatpush1.msra.mxu0 0.0
        %2481 = vmatprep.subr.mxu0 0.0
        %2482 = vmatpush1.msra.mxu0 0.0
        %2483 = vmatprep.subr.mxu0 0.0
        %2484 = vmatpush1.msra.mxu0 0.0
        %2485 = vmatprep.subr.mxu0 0.0
        %2486 = vmatpush1.msra.mxu0 0.0
        %2487 = vmatprep.subr.mxu0 0.0
        %2488 = vmatpush1.msra.mxu0 0.0
        %2489 = vmatprep.subr.mxu0 0.0
        %2490 = vmatpush1.msra.mxu0 0.0
        %2491 = vmatprep.subr.mxu0 0.0
        %2492 = vmatpush1.msra.mxu0 0.0
        %2493 = vmatprep.subr.mxu0 0.0
        %2494 = vmatpush1.msra.mxu0 0.0
        %2495 = vmatprep.subr.mxu0 0.0
        %2496 = vmatpush1.msra.mxu0 0.0
        %2497 = vmatprep.subr.mxu0 0.0
        %2498 = vmatpush1.msra.mxu0 0.0
        %2499 = vmatprep.subr.mxu0 0.0
        %2500 = vmatpush1.msra.mxu0 0.0
        %2501 = vmatprep.mubr.f32.mxu0 0.0
        %2502 = vmatmul.mubr.f32.gmra.mrb[0].mxu0 %v2410
        %v2503 = vpop.f32.mrb[0].mxu0
        %v2504 = vadd.f32 %v2435, %v2503
        %v2505 = vpop.f32.mrb[0].mxu0
        %2506 = vmatprep.mubr.f32.mxu0 0.0
        %2507 = vmatmul.mubr.f32.gmra.mrb[0].mxu0 %v2411
        %v2508 = vpop.f32.mrb[0].mxu0
        %v2509 = vadd.f32 %v2435, %v2508
        %v2510 = vpop.f32.mrb[0].mxu0
        %2511 = vdwg.mxu0
        %v2512 = vadd.f32 %v2189, %v2504
        %v2513 = vadd.f32 %v2190, %v2509
        %v2514 = vmul.f32 %v2512, %v958
        %v2515 = vmul.f32 %v2513, %v963
        %v2516 = vrot.slane %v2514, 4
        %v2517 = vrot.slane %v2515, 4
        %v2518 = vsel %vm1308, %v2516, %v2517
        %v2519 = vsel %vm1308, %v2517, %v2516
        %v2520 = vsel %vm1315, %v2519, 0.0
        %v2521 = vsel %vm1316, %v2518, 0.0
        %v2522 = vsel %vm1323, %v2518, 0.0
        %v2523 = vsel %vm1324, %v2519, 0.0
        %s2524 = scalar_lea.vmem [#allocation8], 1920
        %v2525 = vld [vmem:[%s2524] sm:$0xff]
        %v2526 = vld [vmem:[%s2524 + $0x8] sm:$0xff]
        %v2527 = vld [vmem:[%s2524 + $0x10] sm:$0xff]
        %v2528 = vld [vmem:[%s2524 + $0x18] sm:$0xff]
        %v2529 = vld [vmem:[%s2524 + $0x20] sm:$0xff]
        %v2530 = vld [vmem:[%s2524 + $0x28] sm:$0xff]
        %v2531 = vld [vmem:[%s2524 + $0x30] sm:$0xff]
        %v2532 = vld [vmem:[%s2524 + $0x38] sm:$0xff]
        %v2533 = vld [vmem:[%s2524 + $0x40] sm:$0xff]
        %v2534 = vld [vmem:[%s2524 + $0x48] sm:$0xff]
        %v2535 = vld [vmem:[%s2524 + $0x50] sm:$0xff]
        %v2536 = vld [vmem:[%s2524 + $0x58] sm:$0xff]
        %v2537 = vld [vmem:[%s2524 + $0x60] sm:$0xff]
        %v2538 = vld [vmem:[%s2524 + $0x68] sm:$0xff]
        %v2539 = vld [vmem:[%s2524 + $0x70] sm:$0xff]
        %v2540 = vld [vmem:[%s2524 + $0x78] sm:$0xff]
        %v2541 = vld [vmem:[%s2524 + $0x80] sm:$0xff]
        %v2542 = vld [vmem:[%s2524 + $0x88] sm:$0xff]
        %v2543 = vld [vmem:[%s2524 + $0x90] sm:$0xff]
        %v2544 = vld [vmem:[%s2524 + $0x98] sm:$0xff]
        %v2545 = vld [vmem:[%s2524 + $0xa0] sm:$0xff]
        %v2546 = vld [vmem:[%s2524 + $0xa8] sm:$0xff]
        %v2547 = vld [vmem:[%s2524 + $0xb0] sm:$0xff]
        %v2548 = vld [vmem:[%s2524 + $0xb8] sm:$0xff]
        %v2549 = vld [vmem:[%s2524 + $0xc0] sm:$0xff]
        %v2550 = vld [vmem:[%s2524 + $0xc8] sm:$0xff]
        %v2551 = vld [vmem:[%s2524 + $0xd0] sm:$0xff]
        %v2552 = vld [vmem:[%s2524 + $0xd8] sm:$0xff]
        %v2553 = vld [vmem:[%s2524 + $0xe0] sm:$0xff]
        %v2554 = vld [vmem:[%s2524 + $0xe8] sm:$0xff]
        %v2555 = vld [vmem:[%s2524 + $0xf0] sm:$0xff]
        %v2556 = vld [vmem:[%s2524 + $0xf8] sm:$0xff]
        %v2557 = vld [vmem:[%s2524 + $0x100] sm:$0xff]
        %v2558 = vld [vmem:[%s2524 + $0x108] sm:$0xff]
        %v2559 = vld [vmem:[%s2524 + $0x110] sm:$0xff]
        %v2560 = vld [vmem:[%s2524 + $0x118] sm:$0xff]
        %v2561 = vld [vmem:[%s2524 + $0x120] sm:$0xff]
        %v2562 = vld [vmem:[%s2524 + $0x128] sm:$0xff]
        %v2563 = vld [vmem:[%s2524 + $0x130] sm:$0xff]
        %v2564 = vld [vmem:[%s2524 + $0x138] sm:$0xff]
        %v2565 = vld [vmem:[%s2524 + $0x140] sm:$0xff]
        %v2566 = vld [vmem:[%s2524 + $0x148] sm:$0xff]
        %v2567 = vld [vmem:[%s2524 + $0x150] sm:$0xff]
        %v2568 = vld [vmem:[%s2524 + $0x158] sm:$0xff]
        %v2569 = vld [vmem:[%s2524 + $0x160] sm:$0xff]
        %v2570 = vld [vmem:[%s2524 + $0x168] sm:$0xff]
        %v2571 = vld [vmem:[%s2524 + $0x170] sm:$0xff]
        %v2572 = vld [vmem:[%s2524 + $0x178] sm:$0xff]
        %s2573 = scalar_lea.vmem [#allocation10], 5
        %v2574 = vld [vmem:[%s2573] sm:$0x1]
        %v2576 = vlaneseq
        %v2577 = vshrl.u32 %v2576, 7
        %v2578 = vsub.s32 0, %v2577
        %v2579 = vrot.slane %v2574, %v2578
        %2581 = vmatprep.subr.mxu0 0.0
        %2582 = vmatpush1.msra.mxu0 %v2525
        %2583 = vmatprep.subr.mxu0 0.0
        %2584 = vmatpush1.msra.mxu0 %v2526
        %2585 = vmatprep.subr.mxu0 0.0
        %2586 = vmatpush1.msra.mxu0 %v2527
        %2587 = vmatprep.subr.mxu0 0.0
        %2588 = vmatpush1.msra.mxu0 %v2528
        %2589 = vmatprep.subr.mxu0 0.0
        %2590 = vmatpush1.msra.mxu0 %v2529
        %2591 = vmatprep.subr.mxu0 0.0
        %2592 = vmatpush1.msra.mxu0 %v2530
        %2593 = vmatprep.subr.mxu0 0.0
        %2594 = vmatpush1.msra.mxu0 %v2531
        %2595 = vmatprep.subr.mxu0 0.0
        %2596 = vmatpush1.msra.mxu0 %v2532
        %2597 = vmatprep.subr.mxu0 0.0
        %2598 = vmatpush1.msra.mxu0 %v2533
        %2599 = vmatprep.subr.mxu0 0.0
        %2600 = vmatpush1.msra.mxu0 %v2534
        %2601 = vmatprep.subr.mxu0 0.0
        %2602 = vmatpush1.msra.mxu0 %v2535
        %2603 = vmatprep.subr.mxu0 0.0
        %2604 = vmatpush1.msra.mxu0 %v2536
        %2605 = vmatprep.subr.mxu0 0.0
        %2606 = vmatpush1.msra.mxu0 %v2537
        %2607 = vmatprep.subr.mxu0 0.0
        %2608 = vmatpush1.msra.mxu0 %v2538
        %2609 = vmatprep.subr.mxu0 0.0
        %2610 = vmatpush1.msra.mxu0 %v2539
        %2611 = vmatprep.subr.mxu0 0.0
        %2612 = vmatpush1.msra.mxu0 %v2540
        %2613 = vmatprep.subr.mxu0 0.0
        %2614 = vmatpush1.msra.mxu0 %v2541
        %2615 = vmatprep.subr.mxu0 0.0
        %2616 = vmatpush1.msra.mxu0 %v2542
        %2617 = vmatprep.subr.mxu0 0.0
        %2618 = vmatpush1.msra.mxu0 %v2543
        %2619 = vmatprep.subr.mxu0 0.0
        %2620 = vmatpush1.msra.mxu0 %v2544
        %2621 = vmatprep.subr.mxu0 0.0
        %2622 = vmatpush1.msra.mxu0 %v2545
        %2623 = vmatprep.subr.mxu0 0.0
        %2624 = vmatpush1.msra.mxu0 %v2546
        %2625 = vmatprep.subr.mxu0 0.0
        %2626 = vmatpush1.msra.mxu0 %v2547
        %2627 = vmatprep.subr.mxu0 0.0
        %2628 = vmatpush1.msra.mxu0 %v2548
        %2629 = vmatprep.subr.mxu0 0.0
        %2630 = vmatpush1.msra.mxu0 %v2549
        %2631 = vmatprep.subr.mxu0 0.0
        %2632 = vmatpush1.msra.mxu0 %v2550
        %2633 = vmatprep.subr.mxu0 0.0
        %2634 = vmatpush1.msra.mxu0 %v2551
        %2635 = vmatprep.subr.mxu0 0.0
        %2636 = vmatpush1.msra.mxu0 %v2552
        %2637 = vmatprep.subr.mxu0 0.0
        %2638 = vmatpush1.msra.mxu0 %v2553
        %2639 = vmatprep.subr.mxu0 0.0
        %2640 = vmatpush1.msra.mxu0 %v2554
        %2641 = vmatprep.subr.mxu0 0.0
        %2642 = vmatpush1.msra.mxu0 %v2555
        %2643 = vmatprep.subr.mxu0 0.0
        %2644 = vmatpush1.msra.mxu0 %v2556
        %2645 = vmatprep.mubr.f32.mxu0 %v2514
        %2646 = vmatmul.mubr.f32.gmra.mrb[0].mxu0 %v2520
        %v2647 = vpop.f32.mrb[0].mxu0
        %v2648 = vadd.f32 %v2579, %v2647
        %v2649 = vpop.f32.mrb[0].mxu0
        %2650 = vmatprep.mubr.f32.mxu0 %v2515
        %2651 = vmatmul.mubr.f32.gmra.mrb[0].mxu0 %v2521
        %v2652 = vpop.f32.mrb[0].mxu0
        %v2653 = vadd.f32 %v2579, %v2652
        %v2654 = vpop.f32.mrb[0].mxu0
        %2655 = vdwg.mxu0
        %2656 = vmatprep.subr.mxu0 0.0
        %2657 = vmatpush1.msra.mxu0 %v2557
        %2658 = vmatprep.subr.mxu0 0.0
        %2659 = vmatpush1.msra.mxu0 %v2558
        %2660 = vmatprep.subr.mxu0 0.0
        %2661 = vmatpush1.msra.mxu0 %v2559
        %2662 = vmatprep.subr.mxu0 0.0
        %2663 = vmatpush1.msra.mxu0 %v2560
        %2664 = vmatprep.subr.mxu0 0.0
        %2665 = vmatpush1.msra.mxu0 %v2561
        %2666 = vmatprep.subr.mxu0 0.0
        %2667 = vmatpush1.msra.mxu0 %v2562
        %2668 = vmatprep.subr.mxu0 0.0
        %2669 = vmatpush1.msra.mxu0 %v2563
        %2670 = vmatprep.subr.mxu0 0.0
        %2671 = vmatpush1.msra.mxu0 %v2564
        %2672 = vmatprep.subr.mxu0 0.0
        %2673 = vmatpush1.msra.mxu0 %v2565
        %2674 = vmatprep.subr.mxu0 0.0
        %2675 = vmatpush1.msra.mxu0 %v2566
        %2676 = vmatprep.subr.mxu0 0.0
        %2677 = vmatpush1.msra.mxu0 %v2567
        %2678 = vmatprep.subr.mxu0 0.0
        %2679 = vmatpush1.msra.mxu0 %v2568
        %2680 = vmatprep.subr.mxu0 0.0
        %2681 = vmatpush1.msra.mxu0 %v2569
        %2682 = vmatprep.subr.mxu0 0.0
        %2683 = vmatpush1.msra.mxu0 %v2570
        %2684 = vmatprep.subr.mxu0 0.0
        %2685 = vmatpush1.msra.mxu0 %v2571
        %2686 = vmatprep.subr.mxu0 0.0
        %2687 = vmatpush1.msra.mxu0 %v2572
        %2688 = vmatprep.subr.mxu0 0.0
        %2689 = vmatpush1.msra.mxu0 0.0
        %2690 = vmatprep.subr.mxu0 0.0
        %2691 = vmatpush1.msra.mxu0 0.0
        %2692 = vmatprep.subr.mxu0 0.0
        %2693 = vmatpush1.msra.mxu0 0.0
        %2694 = vmatprep.subr.mxu0 0.0
        %2695 = vmatpush1.msra.mxu0 0.0
        %2696 = vmatprep.subr.mxu0 0.0
        %2697 = vmatpush1.msra.mxu0 0.0
        %2698 = vmatprep.subr.mxu0 0.0
        %2699 = vmatpush1.msra.mxu0 0.0
        %2700 = vmatprep.subr.mxu0 0.0
        %2701 = vmatpush1.msra.mxu0 0.0
        %2702 = vmatprep.subr.mxu0 0.0
        %2703 = vmatpush1.msra.mxu0 0.0
        %2704 = vmatprep.subr.mxu0 0.0
        %2705 = vmatpush1.msra.mxu0 0.0
        %2706 = vmatprep.subr.mxu0 0.0
        %2707 = vmatpush1.msra.mxu0 0.0
        %2708 = vmatprep.subr.mxu0 0.0
        %2709 = vmatpush1.msra.mxu0 0.0
        %2710 = vmatprep.subr.mxu0 0.0
        %2711 = vmatpush1.msra.mxu0 0.0
        %2712 = vmatprep.subr.mxu0 0.0
        %2713 = vmatpush1.msra.mxu0 0.0
        %2714 = vmatprep.subr.mxu0 0.0
        %2715 = vmatpush1.msra.mxu0 0.0
        %2716 = vmatprep.subr.mxu0 0.0
        %2717 = vmatpush1.msra.mxu0 0.0
        %2718 = vmatprep.subr.mxu0 0.0
        %2719 = vmatpush1.msra.mxu0 0.0
        %2720 = vmatprep.mubr.f32.mxu0 0.0
        %2721 = vmatmul.mubr.f32.gmra.mrb[0].mxu0 %v2522
        %v2722 = vpop.f32.mrb[0].mxu0
        %v2723 = vadd.f32 %v2648, %v2722
        %v2724 = vpop.f32.mrb[0].mxu0
        %2725 = vmatprep.mubr.f32.mxu0 0.0
        %2726 = vmatmul.mubr.f32.gmra.mrb[0].mxu0 %v2523
        %v2727 = vpop.f32.mrb[0].mxu0
        %v2728 = vadd.f32 %v2653, %v2727
        %v2729 = vpop.f32.mrb[0].mxu0
        %2730 = vdwg.mxu0
        %v2731 = vmax.f32 %v2723, 0.0
        %v2732 = vmax.f32 %v2728, 0.0
        %s2733 = scalar_lea.vmem [#allocation11], 640
        %v2734 = vld [vmem:[%s2733] sm:$0xff]
        %v2735 = vld [vmem:[%s2733 + $0x8] sm:$0xff]
        %v2736 = vld [vmem:[%s2733 + $0x10] sm:$0xff]
        %v2737 = vld [vmem:[%s2733 + $0x18] sm:$0xff]
        %v2738 = vld [vmem:[%s2733 + $0x20] sm:$0xff]
        %v2739 = vld [vmem:[%s2733 + $0x28] sm:$0xff]
        %v2740 = vld [vmem:[%s2733 + $0x30] sm:$0xff]
        %v2741 = vld [vmem:[%s2733 + $0x38] sm:$0xff]
        %v2742 = vld [vmem:[%s2733 + $0x40] sm:$0xff]
        %v2743 = vld [vmem:[%s2733 + $0x48] sm:$0xff]
        %v2744 = vld [vmem:[%s2733 + $0x50] sm:$0xff]
        %v2745 = vld [vmem:[%s2733 + $0x58] sm:$0xff]
        %v2746 = vld [vmem:[%s2733 + $0x60] sm:$0xff]
        %v2747 = vld [vmem:[%s2733 + $0x68] sm:$0xff]
        %v2748 = vld [vmem:[%s2733 + $0x70] sm:$0xff]
        %v2749 = vld [vmem:[%s2733 + $0x78] sm:$0xff]
        %s2750 = scalar_lea.vmem [#allocation13], 5
        %v2751 = vld [vmem:[%s2750] sm:$0x1]
        %v2753 = vlaneseq
        %v2754 = vshrl.u32 %v2753, 7
        %v2755 = vsub.s32 0, %v2754
        %v2756 = vrot.slane %v2751, %v2755
        %2758 = vmatprep.subr.mxu0 0.0
        %2759 = vmatpush1.msra.mxu0 %v2734
        %2760 = vmatprep.subr.mxu0 0.0
        %2761 = vmatpush1.msra.mxu0 %v2735
        %2762 = vmatprep.subr.mxu0 0.0
        %2763 = vmatpush1.msra.mxu0 %v2736
        %2764 = vmatprep.subr.mxu0 0.0
        %2765 = vmatpush1.msra.mxu0 %v2737
        %2766 = vmatprep.subr.mxu0 0.0
        %2767 = vmatpush1.msra.mxu0 %v2738
        %2768 = vmatprep.subr.mxu0 0.0
        %2769 = vmatpush1.msra.mxu0 %v2739
        %2770 = vmatprep.subr.mxu0 0.0
        %2771 = vmatpush1.msra.mxu0 %v2740
        %2772 = vmatprep.subr.mxu0 0.0
        %2773 = vmatpush1.msra.mxu0 %v2741
        %2774 = vmatprep.subr.mxu0 0.0
        %2775 = vmatpush1.msra.mxu0 %v2742
        %2776 = vmatprep.subr.mxu0 0.0
        %2777 = vmatpush1.msra.mxu0 %v2743
        %2778 = vmatprep.subr.mxu0 0.0
        %2779 = vmatpush1.msra.mxu0 %v2744
        %2780 = vmatprep.subr.mxu0 0.0
        %2781 = vmatpush1.msra.mxu0 %v2745
        %2782 = vmatprep.subr.mxu0 0.0
        %2783 = vmatpush1.msra.mxu0 %v2746
        %2784 = vmatprep.subr.mxu0 0.0
        %2785 = vmatpush1.msra.mxu0 %v2747
        %2786 = vmatprep.subr.mxu0 0.0
        %2787 = vmatpush1.msra.mxu0 %v2748
        %2788 = vmatprep.subr.mxu0 0.0
        %2789 = vmatpush1.msra.mxu0 %v2749
        %2790 = vmatprep.subr.mxu0 0.0
        %2791 = vmatpush1.msra.mxu0 0.0
        %2792 = vmatprep.subr.mxu0 0.0
        %2793 = vmatpush1.msra.mxu0 0.0
        %2794 = vmatprep.subr.mxu0 0.0
        %2795 = vmatpush1.msra.mxu0 0.0
        %2796 = vmatprep.subr.mxu0 0.0
        %2797 = vmatpush1.msra.mxu0 0.0
        %2798 = vmatprep.subr.mxu0 0.0
        %2799 = vmatpush1.msra.mxu0 0.0
        %2800 = vmatprep.subr.mxu0 0.0
        %2801 = vmatpush1.msra.mxu0 0.0
        %2802 = vmatprep.subr.mxu0 0.0
        %2803 = vmatpush1.msra.mxu0 0.0
        %2804 = vmatprep.subr.mxu0 0.0
        %2805 = vmatpush1.msra.mxu0 0.0
        %2806 = vmatprep.subr.mxu0 0.0
        %2807 = vmatpush1.msra.mxu0 0.0
        %2808 = vmatprep.subr.mxu0 0.0
        %2809 = vmatpush1.msra.mxu0 0.0
        %2810 = vmatprep.subr.mxu0 0.0
        %2811 = vmatpush1.msra.mxu0 0.0
        %2812 = vmatprep.subr.mxu0 0.0
        %2813 = vmatpush1.msra.mxu0 0.0
        %2814 = vmatprep.subr.mxu0 0.0
        %2815 = vmatpush1.msra.mxu0 0.0
        %2816 = vmatprep.subr.mxu0 0.0
        %2817 = vmatpush1.msra.mxu0 0.0
        %2818 = vmatprep.subr.mxu0 0.0
        %2819 = vmatpush1.msra.mxu0 0.0
        %2820 = vmatprep.subr.mxu0 0.0
        %2821 = vmatpush1.msra.mxu0 0.0
        %2822 = vmatprep.mubr.f32.mxu0 0.0
        %2823 = vmatmul.mubr.f32.gmra.mrb[0].mxu0 %v2731
        %v2824 = vpop.f32.mrb[0].mxu0
        %v2825 = vadd.f32 %v2756, %v2824
        %v2826 = vpop.f32.mrb[0].mxu0
        %2827 = vmatprep.mubr.f32.mxu0 0.0
        %2828 = vmatmul.mubr.f32.gmra.mrb[0].mxu0 %v2732
        %v2829 = vpop.f32.mrb[0].mxu0
        %v2830 = vadd.f32 %v2756, %v2829
        %v2831 = vpop.f32.mrb[0].mxu0
        %2832 = vdwg.mxu0
        %v2833 = vadd.f32 %v2514, %v2825
        %v2834 = vadd.f32 %v2515, %v2830
        %v2835 = vmul.f32 %v2833, %v958
        %v2836 = vmul.f32 %v2834, %v963
        %s2837 = scalar_lea.vmem [#allocation14], 128
        %v2838 = vld [vmem:[%s2837] sm:$0xff]
        %v2839 = vld [vmem:[%s2837 + $0x8] sm:$0xff]
        %v2840 = vld [vmem:[%s2837 + $0x10] sm:$0xff]
        %v2841 = vld [vmem:[%s2837 + $0x18] sm:$0xff]
        %v2842 = vld [vmem:[%s2837 + $0x20] sm:$0xff]
        %v2843 = vld [vmem:[%s2837 + $0x28] sm:$0xff]
        %v2844 = vld [vmem:[%s2837 + $0x30] sm:$0xff]
        %v2845 = vld [vmem:[%s2837 + $0x38] sm:$0xff]
        %v2846 = vld [vmem:[%s2837 + $0x40] sm:$0xff]
        %v2847 = vld [vmem:[%s2837 + $0x48] sm:$0xff]
        %v2848 = vld [vmem:[%s2837 + $0x50] sm:$0xff]
        %v2849 = vld [vmem:[%s2837 + $0x58] sm:$0xff]
        %v2850 = vld [vmem:[%s2837 + $0x60] sm:$0xff]
        %v2851 = vld [vmem:[%s2837 + $0x68] sm:$0xff]
        %v2852 = vld [vmem:[%s2837 + $0x70] sm:$0xff]
        %v2853 = vld [vmem:[%s2837 + $0x78] sm:$0xff]
        %s2854 = scalar_lea.vmem [#allocation16], 1
        %v2855 = vld [vmem:[%s2854] sm:$0x1]
        %v2857 = vlaneseq
        %v2858 = vshrl.u32 %v2857, 7
        %v2859 = vsub.s32 0, %v2858
        %v2860 = vrot.slane %v2855, %v2859
        %2862 = vmatprep.subr.mxu0 0.0
        %2863 = vmatpush1.msra.mxu0 %v2838
        %2864 = vmatprep.subr.mxu0 0.0
        %2865 = vmatpush1.msra.mxu0 %v2839
        %2866 = vmatprep.subr.mxu0 0.0
        %2867 = vmatpush1.msra.mxu0 %v2840
        %2868 = vmatprep.subr.mxu0 0.0
        %2869 = vmatpush1.msra.mxu0 %v2841
        %2870 = vmatprep.subr.mxu0 0.0
        %2871 = vmatpush1.msra.mxu0 %v2842
        %2872 = vmatprep.subr.mxu0 0.0
        %2873 = vmatpush1.msra.mxu0 %v2843
        %2874 = vmatprep.subr.mxu0 0.0
        %2875 = vmatpush1.msra.mxu0 %v2844
        %2876 = vmatprep.subr.mxu0 0.0
        %2877 = vmatpush1.msra.mxu0 %v2845
        %2878 = vmatprep.subr.mxu0 0.0
        %2879 = vmatpush1.msra.mxu0 %v2846
        %2880 = vmatprep.subr.mxu0 0.0
        %2881 = vmatpush1.msra.mxu0 %v2847
        %2882 = vmatprep.subr.mxu0 0.0
        %2883 = vmatpush1.msra.mxu0 %v2848
        %2884 = vmatprep.subr.mxu0 0.0
        %2885 = vmatpush1.msra.mxu0 %v2849
        %2886 = vmatprep.subr.mxu0 0.0
        %2887 = vmatpush1.msra.mxu0 %v2850
        %2888 = vmatprep.subr.mxu0 0.0
        %2889 = vmatpush1.msra.mxu0 %v2851
        %2890 = vmatprep.subr.mxu0 0.0
        %2891 = vmatpush1.msra.mxu0 %v2852
        %2892 = vmatprep.subr.mxu0 0.0
        %2893 = vmatpush1.msra.mxu0 %v2853
        %2894 = vmatprep.subr.mxu0 0.0
        %2895 = vmatpush1.msra.mxu0 0.0
        %2896 = vmatprep.subr.mxu0 0.0
        %2897 = vmatpush1.msra.mxu0 0.0
        %2898 = vmatprep.subr.mxu0 0.0
        %2899 = vmatpush1.msra.mxu0 0.0
        %2900 = vmatprep.subr.mxu0 0.0
        %2901 = vmatpush1.msra.mxu0 0.0
        %2902 = vmatprep.subr.mxu0 0.0
        %2903 = vmatpush1.msra.mxu0 0.0
        %2904 = vmatprep.subr.mxu0 0.0
        %2905 = vmatpush1.msra.mxu0 0.0
        %2906 = vmatprep.subr.mxu0 0.0
        %2907 = vmatpush1.msra.mxu0 0.0
        %2908 = vmatprep.subr.mxu0 0.0
        %2909 = vmatpush1.msra.mxu0 0.0
        %2910 = vmatprep.subr.mxu0 0.0
        %2911 = vmatpush1.msra.mxu0 0.0
        %2912 = vmatprep.subr.mxu0 0.0
        %2913 = vmatpush1.msra.mxu0 0.0
        %2914 = vmatprep.subr.mxu0 0.0
        %2915 = vmatpush1.msra.mxu0 0.0
        %2916 = vmatprep.subr.mxu0 0.0
        %2917 = vmatpush1.msra.mxu0 0.0
        %2918 = vmatprep.subr.mxu0 0.0
        %2919 = vmatpush1.msra.mxu0 0.0
        %2920 = vmatprep.subr.mxu0 0.0
        %2921 = vmatpush1.msra.mxu0 0.0
        %2922 = vmatprep.subr.mxu0 0.0
        %2923 = vmatpush1.msra.mxu0 0.0
        %2924 = vmatprep.subr.mxu0 0.0
        %2925 = vmatpush1.msra.mxu0 0.0
        %2926 = vmatprep.mubr.f32.mxu0 0.0
        %2927 = vmatmul.mubr.f32.gmra.mrb[0].mxu0 %v2835
        %v2928 = vpop.f32.mrb[0].mxu0
        %v2929 = vadd.f32 %v2860, %v2928
        %v2930 = vpop.f32.mrb[0].mxu0
        %2931 = vmatprep.mubr.f32.mxu0 0.0
        %2932 = vmatmul.mubr.f32.gmra.mrb[0].mxu0 %v2836
        %v2933 = vpop.f32.mrb[0].mxu0
        %v2934 = vadd.f32 %v2860, %v2933
        %v2935 = vpop.f32.mrb[0].mxu0
        %2936 = vdwg.mxu0
        %v2937 = vmul.f32 %v2929, %v958
        %v2938 = vmul.f32 %v2934, %v963
        %s2939 = scalar_lea.vmem %s508, 16 [#allocation17]
        %2940 = vst [vmem:[%s2939] sm:$0xff] %v2937
        %2941 = vst [vmem:[%s2939 + $0x8] sm:$0xff] %v2938
        %s2942 = sand.u32 %s259, 1
        %s2943 = scalar_lea.sflag [#allocation4], %s2942
        %s2944 = sand.u32 %s259, 1
        %s2945 = smul.addr %s2944, 32
        %s2946 = scalar_lea.vmem [#allocation17], %s2945
        // Predicated region
        $region97: #{tpu_custom_call.1} parent=59 // pred_check
          %p2947 = pneg %p269
        $region98: #{tpu_custom_call.1} parent=59 // pred_check_branch
          %2949 = sbr.rel (%p2947) target = $region100
        $region99: #{tpu_custom_call.1} parent=59 // pred_region
          %s2951 = ssub.s32 512, 512
          %2952 = vsyncadd %s2943, %s2951
          %s2953 = smul.addr %s31, 4
          %s2954 = smul.addr %s2953, 128
          %s2955 = scalar_lea.hbm %s10, %s2954
          %s2956 = sshll.u32 %s2946, 4
          %s2957 = int_to_ptr.vmem [resolvable:$true] %s2956
          %2962 = dma.vmem_to_hbm [thread:$0]  %s2957, 512, %s2955, %s2943, 128, 128, 8
        $region100: #{tpu_custom_call.1} parent=59 // pred_fallthru
          _
      $region60: #{tpu_custom_call.1} parent=5 // pred_fallthru
        _
      %p2963 = scmp.le.s32.totalorder 2, %s26
      // Predicated region
      $region101: #{tpu_custom_call.1} parent=5 // pred_check
        %p2964 = pneg %p2963
      $region102: #{tpu_custom_call.1} parent=5 // pred_check_branch
        %2966 = sbr.rel (%p2964) target = $region104
      $region103: #{tpu_custom_call.1} parent=5 // pred_region
        %s2967 = ssub.s32 %s26, 2
        // Predicated region
        $region105: #{tpu_custom_call.1} parent=103 // pred_check
          %p2968 = pneg %p275
        $region106: #{tpu_custom_call.1} parent=103 // pred_check_branch
          %2970 = sbr.rel (%p2968) target = $region108
        $region107: #{tpu_custom_call.1} parent=103 // pred_region
          %s2971 = sand.u32 %s260, 1
          %s2972 = scalar_lea.sflag [#allocation4], %s2971
          %s2973 = sand.u32 %s260, 1
          %s2974 = smul.addr %s2973, 32
          %s2975 = scalar_lea.vmem [#allocation17], %s2974
          %2976 = dma.done %s2972, 512
        $region108: #{tpu_custom_call.1} parent=103 // pred_fallthru
          _
      $region104: #{tpu_custom_call.1} parent=5 // pred_fallthru
        _
    $region6: #{tpu_custom_call.1} parent=1 // loop_footer
      %s30 = sadd.s32 1, %s26
    $region7: #{tpu_custom_call.1} parent=1 // loop_footer_branch
      %25 = sbr.rel target = $region3
    $region8: #{tpu_custom_call.1} parent=1 // loop_exit
      _
    %2977 = vsyncpa [#allocation3], 1
    %s2978 = scalar_lea.sflag [#allocation3], 1
    %2979 = vsyncpa %s2978, 1
    %2980 = vsyncpa [#allocation6], 1
    %2981 = vsyncpa [#allocation9], 1
    %2982 = vsyncpa [#allocation12], 1
    %2983 = vsyncpa [#allocation15], 1
    %2984 = vsyncpa [#allocation4], 1
    %s2985 = scalar_lea.sflag [#allocation4], 1
    %2986 = vsyncpa %s2985, 1

</llo_original>
